<compile_context>
chip_gen: v7x
topology: tpu7x:2x2x1
jax: 0.10.0
libtpu: 0.0.40
codegen_flags: <defaults>
</compile_context>

<pallas_src>
import jax
import jax.numpy as jnp
from jax.experimental import pallas as pl
from jax.experimental.pallas import tpu as pltpu

SLOPE = 0.1          # LeakyReLU negative slope
IN_FEATURES = 20
HIDDEN = 200         # logical hidden width (matches the PyTorch module)
HIDDEN_PAD = 256     # padded to two full 128-lane vregs / clean MXU tiles


def _leaky_relu(v):
    return jnp.where(v >= 0, v, SLOPE * v)


def mlp_kernel(x_ref,
               w0_ref, b0_ref,
               w1_ref, b1_ref,
               w2_ref, b2_ref,
               w3_ref, b3_ref,
               o_ref):
    # x tile: (TM, 20) f32. MXU operands cast to bf16, accumulate in f32.
    x = x_ref[...]

    h = jnp.dot(x.astype(jnp.bfloat16), w0_ref[...],
                preferred_element_type=jnp.float32) + b0_ref[...]
    h = _leaky_relu(h)

    h = jnp.dot(h.astype(jnp.bfloat16), w1_ref[...],
                preferred_element_type=jnp.float32) + b1_ref[...]
    h = _leaky_relu(h)

    h = jnp.dot(h.astype(jnp.bfloat16), w2_ref[...],
                preferred_element_type=jnp.float32) + b2_ref[...]
    h = _leaky_relu(h)

    # Final Linear(256 -> 1): VPU multiply + lane reduction instead of an
    # N=1 MXU pass. Padded lanes of w3 are zero, so they drop out exactly.
    z = jnp.sum(h * w3_ref[...], axis=-1, keepdims=True) + b3_ref[...]

    # Sigmoid: exp + approximate reciprocal both live on the otherwise-idle EUP.
    o_ref[...] = pl.reciprocal(1.0 + jnp.exp(-z), approx=True)


def net_forward(x, prepared_params, *, tm=512):
    """x: [B, 20] float32 -> [B, 1] float32."""
    (w0, b0), (w1, b1), (w2, b2), (w3, b3) = prepared_params
    B, F = x.shape

    # Pad the batch up to a multiple of the tile; padded rows are sliced off.
    n_tiles = pl.cdiv(B, tm)
    b_pad = n_tiles * tm
    if b_pad != B:
        x = jnp.pad(x, ((0, b_pad - B), (0, 0)))

    const = lambda i: (0, 0)  # weights/biases: VMEM-resident across grid steps

    out = pl.pallas_call(
        mlp_kernel,
        out_shape=jax.ShapeDtypeStruct((b_pad, 1), jnp.float32),
        grid_spec=pltpu.PrefetchScalarGridSpec(
            num_scalar_prefetch=0,
            grid=(n_tiles,),
            in_specs=[
                pl.BlockSpec((tm, F), lambda i: (i, 0)),  # x streamed per tile
                pl.BlockSpec(w0.shape, const),
                pl.BlockSpec(b0.shape, const),
                pl.BlockSpec(w1.shape, const),
                pl.BlockSpec(b1.shape, const),
                pl.BlockSpec(w2.shape, const),
                pl.BlockSpec(b2.shape, const),
                pl.BlockSpec(w3.shape, const),
                pl.BlockSpec(b3.shape, const),
            ],
            out_specs=pl.BlockSpec((tm, 1), lambda i: (i, 0)),
        ),
        compiler_params=pltpu.CompilerParams(
            dimension_semantics=("parallel",),       # v7x: shard batch over 2 TCs
            vmem_limit_bytes=32 * 1024 * 1024,       # explicit budget, v7x-safe
        ),
    )(x, w0, b0, w1, b1, w2, b2, w3, b3)
    return out[:B]


def init_params(key, layers=(200, 200, 200), in_features=IN_FEATURES):
    """PyTorch-style nn.Linear init; weights stored [in, out], biases [1, out]."""
    dims = [in_features, *layers, 1]
    params = []
    for i in range(len(dims) - 1):
        fan_in, fan_out = dims[i], dims[i + 1]
        key, kw, kb = jax.random.split(key, 3)
        bound = 1.0 / jnp.sqrt(jnp.float32(fan_in))
        w = jax.random.uniform(kw, (fan_in, fan_out), jnp.float32, -bound, bound)
        b = jax.random.uniform(kb, (1, fan_out), jnp.float32, -bound, bound)
        params.append((w, b))
    return params


def prepare_params(params, hidden_pad=HIDDEN_PAD):
    """Zero-pad hidden width 200 -> 256 and cast MXU weights to bf16."""
    (w0, b0), (w1, b1), (w2, b2), (w3, b3) = params

    def pad2(a, rows, cols):
        return jnp.pad(a, ((0, rows - a.shape[0]), (0, cols - a.shape[1])))

    w0p = pad2(w0, w0.shape[0], hidden_pad).astype(jnp.bfloat16)   # (20, 256) bf16
    b0p = pad2(b0, 1, hidden_pad)                                  # (1, 256) f32
    w1p = pad2(w1, hidden_pad, hidden_pad).astype(jnp.bfloat16)    # (256, 256) bf16
    b1p = pad2(b1, 1, hidden_pad)
    w2p = pad2(w2, hidden_pad, hidden_pad).astype(jnp.bfloat16)
    b2p = pad2(b2, 1, hidden_pad)
    # Final layer stays f32: applied as a VPU row-vector multiply + reduce.
    w3p = pad2(w3.T, 1, hidden_pad)                                # (1, 256) f32
    b3p = b3                                                       # (1, 1) f32
    return ((w0p, b0p), (w1p, b1p), (w2p, b2p), (w3p, b3p))


def reference_forward_f32(x, params):
    """Pure-f32 reference matching the original PyTorch module semantics."""
    h = x
    for i, (w, b) in enumerate(params):
        h = h @ w + b
        if i < len(params) - 1:
            h = jnp.where(h >= 0, h, SLOPE * h)
    return jax.nn.sigmoid(h)


def reference_forward_bf16(x, prepared_params):
    """Mirrors the kernel's bf16-MXU / f32-accumulate numerics."""
    (w0, b0), (w1, b1), (w2, b2), (w3, b3) = prepared_params
    h = x
    for (w, b) in ((w0, b0), (w1, b1), (w2, b2)):
        h = jnp.dot(h.astype(jnp.bfloat16), w,
                    preferred_element_type=jnp.float32) + b
        h = jnp.where(h >= 0, h, SLOPE * h)
    z = jnp.sum(h * w3, axis=-1, keepdims=True) + b3
    return 1.0 / (1.0 + jnp.exp(-z))


if __name__ == "__main__":
    key = jax.random.PRNGKey(0)
    key, kx = jax.random.split(key)

    params = init_params(key)
    prepared = prepare_params(params)

    # Small demo batch consistent with the module's 20-feature input.
    B = 8
    x = jax.random.normal(kx, (B, IN_FEATURES), jnp.float32)

    out = jax.block_until_ready(net_forward(x, prepared))
    assert out.shape == (B, 1)

    ref_bf16 = reference_forward_bf16(x, prepared)
    ref_f32 = reference_forward_f32(x, params)
    assert jnp.allclose(out, ref_bf16, atol=5e-3, rtol=5e-3), \
        float(jnp.max(jnp.abs(out - ref_bf16)))
    assert jnp.allclose(out, ref_f32, atol=3e-2, rtol=3e-2), \
        float(jnp.max(jnp.abs(out - ref_f32)))

    # Second check: batch not divisible by the tile -> multi-step grid + edge pad.
    key, kx2 = jax.random.split(key)
    B2 = 1100
    x2 = jax.random.normal(kx2, (B2, IN_FEATURES), jnp.float32)
    out2 = jax.block_until_ready(net_forward(x2, prepared))
    assert out2.shape == (B2, 1)
    ref2 = reference_forward_bf16(x2, prepared)
    assert jnp.allclose(out2, ref2, atol=5e-3, rtol=5e-3), \
        float(jnp.max(jnp.abs(out2 - ref2)))

    print("KERNEL_OK")
</pallas_src>

<mosaic_0001>
module attributes {stable_mosaic.version = 11 : i64} {
  func.func @mlp_kernel(%arg0: i32, %arg1: memref<512x20xf32, #tpu.memory_space<vmem>>, %arg2: memref<20x256xbf16, #tpu.memory_space<vmem>>, %arg3: memref<1x256xf32, #tpu.memory_space<vmem>>, %arg4: memref<256x256xbf16, #tpu.memory_space<vmem>>, %arg5: memref<1x256xf32, #tpu.memory_space<vmem>>, %arg6: memref<256x256xbf16, #tpu.memory_space<vmem>>, %arg7: memref<1x256xf32, #tpu.memory_space<vmem>>, %arg8: memref<1x256xf32, #tpu.memory_space<vmem>>, %arg9: memref<1x1xf32, #tpu.memory_space<vmem>>, %arg10: memref<512x1xf32, #tpu.memory_space<vmem>>) attributes {dimension_semantics = [#tpu.dimension_semantics<parallel>], iteration_bounds = array<i64: 1>, scalar_prefetch = 0 : i64, scratch_operands = 0 : i64, tpu.core_type = #tpu.core_type<tc>, window_params = [{transform_indices = @transform_0, window_bounds = array<i64: 512, 20>}, {pipeline_mode = #tpu.pipeline_mode<synchronous>, transform_indices = @transform_1, window_bounds = array<i64: 20, 256>}, {pipeline_mode = #tpu.pipeline_mode<synchronous>, transform_indices = @transform_2, window_bounds = array<i64: 1, 256>}, {pipeline_mode = #tpu.pipeline_mode<synchronous>, transform_indices = @transform_3, window_bounds = array<i64: 256, 256>}, {pipeline_mode = #tpu.pipeline_mode<synchronous>, transform_indices = @transform_4, window_bounds = array<i64: 1, 256>}, {pipeline_mode = #tpu.pipeline_mode<synchronous>, transform_indices = @transform_5, window_bounds = array<i64: 256, 256>}, {pipeline_mode = #tpu.pipeline_mode<synchronous>, transform_indices = @transform_6, window_bounds = array<i64: 1, 256>}, {pipeline_mode = #tpu.pipeline_mode<synchronous>, transform_indices = @transform_7, window_bounds = array<i64: 1, 256>}, {pipeline_mode = #tpu.pipeline_mode<synchronous>, transform_indices = @transform_8, window_bounds = array<i64: 1, 1>}, {transform_indices = @transform_9, window_bounds = array<i64: 512, 1>}]} {
    %c0 = arith.constant 0 : index
    %c0_0 = arith.constant 0 : index
    %0 = vector.load %arg1[%c0, %c0_0] : memref<512x20xf32, #tpu.memory_space<vmem>>, vector<512x20xf32>
    %1 = arith.truncf %0 : vector<512x20xf32> to vector<512x20xbf16>
    %c0_1 = arith.constant 0 : index
    %c0_2 = arith.constant 0 : index
    %2 = vector.load %arg2[%c0_1, %c0_2] : memref<20x256xbf16, #tpu.memory_space<vmem>>, vector<20x256xbf16>
    %cst = arith.constant dense<0.000000e+00> : vector<512x256xf32>
    %3 = tpu.matmul %1, %2, %cst {dimension_numbers = #tpu.dot_dimension_numbers<[1], [0], [0], [1], [0, 0, 1, 1], [], []>} : vector<512x20xbf16>, vector<20x256xbf16>, vector<512x256xf32> -> vector<512x256xf32>
    %c0_3 = arith.constant 0 : index
    %c0_4 = arith.constant 0 : index
    %4 = vector.load %arg3[%c0_3, %c0_4] : memref<1x256xf32, #tpu.memory_space<vmem>>, vector<1x256xf32>
    %5 = vector.broadcast %4 : vector<1x256xf32> to vector<512x256xf32>
    %6 = arith.addf %3, %5 : vector<512x256xf32>
    %cst_5 = arith.constant 0.000000e+00 : f32
    %7 = vector.broadcast %cst_5 : f32 to vector<512x256xf32>
    %8 = arith.cmpf oge, %6, %7 : vector<512x256xf32>
    %cst_6 = arith.constant 1.000000e-01 : f32
    %9 = vector.broadcast %cst_6 : f32 to vector<512x256xf32>
    %10 = arith.mulf %9, %6 : vector<512x256xf32>
    %11 = arith.select %8, %6, %10 : vector<512x256xi1>, vector<512x256xf32>
    %12 = arith.truncf %11 : vector<512x256xf32> to vector<512x256xbf16>
    %c0_7 = arith.constant 0 : index
    %c0_8 = arith.constant 0 : index
    %13 = vector.load %arg4[%c0_7, %c0_8] : memref<256x256xbf16, #tpu.memory_space<vmem>>, vector<256x256xbf16>
    %cst_9 = arith.constant dense<0.000000e+00> : vector<512x256xf32>
    %14 = tpu.matmul %12, %13, %cst_9 {dimension_numbers = #tpu.dot_dimension_numbers<[1], [0], [0], [1], [0, 0, 1, 1], [], []>} : vector<512x256xbf16>, vector<256x256xbf16>, vector<512x256xf32> -> vector<512x256xf32>
    %c0_10 = arith.constant 0 : index
    %c0_11 = arith.constant 0 : index
    %15 = vector.load %arg5[%c0_10, %c0_11] : memref<1x256xf32, #tpu.memory_space<vmem>>, vector<1x256xf32>
    %16 = vector.broadcast %15 : vector<1x256xf32> to vector<512x256xf32>
    %17 = arith.addf %14, %16 : vector<512x256xf32>
    %cst_12 = arith.constant 0.000000e+00 : f32
    %18 = vector.broadcast %cst_12 : f32 to vector<512x256xf32>
    %19 = arith.cmpf oge, %17, %18 : vector<512x256xf32>
    %cst_13 = arith.constant 1.000000e-01 : f32
    %20 = vector.broadcast %cst_13 : f32 to vector<512x256xf32>
    %21 = arith.mulf %20, %17 : vector<512x256xf32>
    %22 = arith.select %19, %17, %21 : vector<512x256xi1>, vector<512x256xf32>
    %23 = arith.truncf %22 : vector<512x256xf32> to vector<512x256xbf16>
    %c0_14 = arith.constant 0 : index
    %c0_15 = arith.constant 0 : index
    %24 = vector.load %arg6[%c0_14, %c0_15] : memref<256x256xbf16, #tpu.memory_space<vmem>>, vector<256x256xbf16>
    %cst_16 = arith.constant dense<0.000000e+00> : vector<512x256xf32>
    %25 = tpu.matmul %23, %24, %cst_16 {dimension_numbers = #tpu.dot_dimension_numbers<[1], [0], [0], [1], [0, 0, 1, 1], [], []>} : vector<512x256xbf16>, vector<256x256xbf16>, vector<512x256xf32> -> vector<512x256xf32>
    %c0_17 = arith.constant 0 : index
    %c0_18 = arith.constant 0 : index
    %26 = vector.load %arg7[%c0_17, %c0_18] : memref<1x256xf32, #tpu.memory_space<vmem>>, vector<1x256xf32>
    %27 = vector.broadcast %26 : vector<1x256xf32> to vector<512x256xf32>
    %28 = arith.addf %25, %27 : vector<512x256xf32>
    %cst_19 = arith.constant 0.000000e+00 : f32
    %29 = vector.broadcast %cst_19 : f32 to vector<512x256xf32>
    %30 = arith.cmpf oge, %28, %29 : vector<512x256xf32>
    %cst_20 = arith.constant 1.000000e-01 : f32
    %31 = vector.broadcast %cst_20 : f32 to vector<512x256xf32>
    %32 = arith.mulf %31, %28 : vector<512x256xf32>
    %33 = arith.select %30, %28, %32 : vector<512x256xi1>, vector<512x256xf32>
    %c0_21 = arith.constant 0 : index
    %c0_22 = arith.constant 0 : index
    %34 = vector.load %arg8[%c0_21, %c0_22] : memref<1x256xf32, #tpu.memory_space<vmem>>, vector<1x256xf32>
    %35 = vector.broadcast %34 : vector<1x256xf32> to vector<512x256xf32>
    %36 = arith.mulf %33, %35 : vector<512x256xf32>
    %cst_23 = arith.constant dense<0.000000e+00> : vector<512xf32>
    %37 = vector.multi_reduction <add>, %36, %cst_23 [1] : vector<512x256xf32> to vector<512xf32>
    %38 = vector.shape_cast %37 : vector<512xf32> to vector<512x1xf32>
    %c0_24 = arith.constant 0 : index
    %c0_25 = arith.constant 0 : index
    %39 = vector.load %arg9[%c0_24, %c0_25] : memref<1x1xf32, #tpu.memory_space<vmem>>, vector<1x1xf32>
    %40 = vector.broadcast %39 : vector<1x1xf32> to vector<512x1xf32>
    %41 = arith.addf %38, %40 : vector<512x1xf32>
    %cst_26 = arith.constant 0.000000e+00 : f32
    %42 = vector.broadcast %cst_26 : f32 to vector<512x1xf32>
    %43 = arith.subf %42, %41 : vector<512x1xf32>
    %44 = math.exp %43 : vector<512x1xf32>
    %cst_27 = arith.constant 1.000000e+00 : f32
    %45 = vector.broadcast %cst_27 : f32 to vector<512x1xf32>
    %46 = arith.addf %45, %44 : vector<512x1xf32>
    %47 = tpu.reciprocal %46 {approx = true} : vector<512x1xf32> -> vector<512x1xf32>
    %c0_28 = arith.constant 0 : index
    %c0_29 = arith.constant 0 : index
    %48 = vector.load %arg10[%c0_28, %c0_29] : memref<512x1xf32, #tpu.memory_space<vmem>>, vector<512x1xf32>
    tpu.vector_store %arg10[%c0_28, %c0_29], %47 {strides = array<i32>} : memref<512x1xf32, #tpu.memory_space<vmem>>, vector<512x1xf32>,
    return
  }
  func.func @transform_0(%arg0: i32) -> (i32, i32) {
    %c0_i32 = arith.constant 0 : i32
    %c0_i32_0 = arith.constant 0 : i32
    return %arg0, %c0_i32 : i32, i32
  }
  func.func @transform_1(%arg0: i32) -> (i32, i32) {
    %c0_i32 = arith.constant 0 : i32
    %c0_i32_0 = arith.constant 0 : i32
    %c0_i32_1 = arith.constant 0 : i32
    return %c0_i32, %c0_i32_0 : i32, i32
  }
  func.func @transform_2(%arg0: i32) -> (i32, i32) {
    %c0_i32 = arith.constant 0 : i32
    %c0_i32_0 = arith.constant 0 : i32
    %c0_i32_1 = arith.constant 0 : i32
    return %c0_i32, %c0_i32_0 : i32, i32
  }
  func.func @transform_3(%arg0: i32) -> (i32, i32) {
    %c0_i32 = arith.constant 0 : i32
    %c0_i32_0 = arith.constant 0 : i32
    %c0_i32_1 = arith.constant 0 : i32
    return %c0_i32, %c0_i32_0 : i32, i32
  }
  func.func @transform_4(%arg0: i32) -> (i32, i32) {
    %c0_i32 = arith.constant 0 : i32
    %c0_i32_0 = arith.constant 0 : i32
    %c0_i32_1 = arith.constant 0 : i32
    return %c0_i32, %c0_i32_0 : i32, i32
  }
  func.func @transform_5(%arg0: i32) -> (i32, i32) {
    %c0_i32 = arith.constant 0 : i32
    %c0_i32_0 = arith.constant 0 : i32
    %c0_i32_1 = arith.constant 0 : i32
    return %c0_i32, %c0_i32_0 : i32, i32
  }
  func.func @transform_6(%arg0: i32) -> (i32, i32) {
    %c0_i32 = arith.constant 0 : i32
    %c0_i32_0 = arith.constant 0 : i32
    %c0_i32_1 = arith.constant 0 : i32
    return %c0_i32, %c0_i32_0 : i32, i32
  }
  func.func @transform_7(%arg0: i32) -> (i32, i32) {
    %c0_i32 = arith.constant 0 : i32
    %c0_i32_0 = arith.constant 0 : i32
    %c0_i32_1 = arith.constant 0 : i32
    return %c0_i32, %c0_i32_0 : i32, i32
  }
  func.func @transform_8(%arg0: i32) -> (i32, i32) {
    %c0_i32 = arith.constant 0 : i32
    %c0_i32_0 = arith.constant 0 : i32
    %c0_i32_1 = arith.constant 0 : i32
    return %c0_i32, %c0_i32_0 : i32, i32
  }
  func.func @transform_9(%arg0: i32) -> (i32, i32) {
    %c0_i32 = arith.constant 0 : i32
    %c0_i32_0 = arith.constant 0 : i32
    return %arg0, %c0_i32 : i32, i32
  }
}

</mosaic_0001>

<llo_original>
// kernel: tpu_custom_call.1
$region0: #{tpu_custom_call.1}
  #allocation0 [shape = 'u32[]', space=smem, size = 0x4, offset = 0x4, fixed_abs, tag = 'smem constant byte address 0x4 - core index']
  #allocation1 [shape = 'u32[144,128]{1,0:T(1,128)}', space=vmem, size = 0x12000, scoped, tag = 'internal scratch']
  #allocation2 [shape = 'f32[1,1]{1,0:T(1,128)S(1)}', space=vmem, size = 0x200, scoped, tag = 'scoped memory for tpu_custom_call.1']
  %s0 = inlined_call_operand.vmem [shape: f32[512,20], index: 0, kind: input, shape index: {}]
  %s1 = inlined_call_operand.vmem [shape: bf16[20,256], index: 1, kind: input, shape index: {}]
  %s2 = inlined_call_operand.vmem [shape: f32[1,256], index: 2, kind: input, shape index: {}]
  %s3 = inlined_call_operand.vmem [shape: bf16[256,256], index: 3, kind: input, shape index: {}]
  %s4 = inlined_call_operand.vmem [shape: f32[1,256], index: 4, kind: input, shape index: {}]
  %s5 = inlined_call_operand.vmem [shape: bf16[256,256], index: 5, kind: input, shape index: {}]
  %s6 = inlined_call_operand.vmem [shape: f32[1,256], index: 6, kind: input, shape index: {}]
  %s7 = inlined_call_operand.vmem [shape: f32[1,256], index: 7, kind: input, shape index: {}]
  %s8 = inlined_call_operand.<no memory space> [shape: f32[1,1], index: 8, kind: input, shape index: {}]
  %s9 = inlined_call_operand.vmem [shape: f32[512,1], index: 9, kind: output, shape index: {}]
  %s10 = sld [smem:[#allocation0]]
  $region46: #{tpu_custom_call.1} parent=0
    _
  %s12 = ssub.s32 1, %s10
  %s13 = scalar_select 0, %s12, %s10
  %v14 = vstv %s8
  %15 = vst [vmem:[#allocation2] sm:$0x1] %v14
  // Predicated region
  $region2: #{tpu_custom_call.1} parent=0 // pred_check
    _
  $region3: #{tpu_custom_call.1} parent=0 // pred_check_branch
    %17 = sbr.rel (0) target = $region5
  $region4: #{tpu_custom_call.1} parent=0 // pred_region
    _
  $region5: #{tpu_custom_call.1} parent=0 // pred_fallthru
    _
  // Predicated region
  $region6: #{tpu_custom_call.1} parent=0 // pred_check
    _
  $region7: #{tpu_custom_call.1} parent=0 // pred_check_branch
    %19 = sbr.rel (0) target = $region9
  $region8: #{tpu_custom_call.1} parent=0 // pred_region
    _
  $region9: #{tpu_custom_call.1} parent=0 // pred_fallthru
    _
  // Predicated region
  $region10: #{tpu_custom_call.1} parent=0 // pred_check
    _
  $region11: #{tpu_custom_call.1} parent=0 // pred_check_branch
    %21 = sbr.rel (0) target = $region13
  $region12: #{tpu_custom_call.1} parent=0 // pred_region
    _
  $region13: #{tpu_custom_call.1} parent=0 // pred_fallthru
    _
  // Predicated region
  $region14: #{tpu_custom_call.1} parent=0 // pred_check
    _
  $region15: #{tpu_custom_call.1} parent=0 // pred_check_branch
    %23 = sbr.rel (0) target = $region17
  $region16: #{tpu_custom_call.1} parent=0 // pred_region
    _
  $region17: #{tpu_custom_call.1} parent=0 // pred_fallthru
    _
  // Predicated region
  $region18: #{tpu_custom_call.1} parent=0 // pred_check
    _
  $region19: #{tpu_custom_call.1} parent=0 // pred_check_branch
    %25 = sbr.rel (0) target = $region21
  $region20: #{tpu_custom_call.1} parent=0 // pred_region
    _
  $region21: #{tpu_custom_call.1} parent=0 // pred_fallthru
    _
  // Predicated region
  $region22: #{tpu_custom_call.1} parent=0 // pred_check
    _
  $region23: #{tpu_custom_call.1} parent=0 // pred_check_branch
    %27 = sbr.rel (0) target = $region25
  $region24: #{tpu_custom_call.1} parent=0 // pred_region
    _
  $region25: #{tpu_custom_call.1} parent=0 // pred_fallthru
    _
  // Predicated region
  $region26: #{tpu_custom_call.1} parent=0 // pred_check
    _
  $region27: #{tpu_custom_call.1} parent=0 // pred_check_branch
    %29 = sbr.rel (0) target = $region29
  $region28: #{tpu_custom_call.1} parent=0 // pred_region
    _
  $region29: #{tpu_custom_call.1} parent=0 // pred_fallthru
    _
  // Predicated region
  $region30: #{tpu_custom_call.1} parent=0 // pred_check
    _
  $region31: #{tpu_custom_call.1} parent=0 // pred_check_branch
    %31 = sbr.rel (0) target = $region33
  $region32: #{tpu_custom_call.1} parent=0 // pred_region
    _
  $region33: #{tpu_custom_call.1} parent=0 // pred_fallthru
    _
  // Predicated region
  $region34: #{tpu_custom_call.1} parent=0 // pred_check
    _
  $region35: #{tpu_custom_call.1} parent=0 // pred_check_branch
    %33 = sbr.rel (0) target = $region37
  $region36: #{tpu_custom_call.1} parent=0 // pred_region
    _
  $region37: #{tpu_custom_call.1} parent=0 // pred_fallthru
    _
  %v35 = vld [vmem:[%s0] sm:$0xff]
  %v36 = vld [vmem:[%s0 + $0x8] sm:$0xff]
  %v37 = vld [vmem:[%s0 + $0x10] sm:$0xff]
  %v38 = vld [vmem:[%s0 + $0x18] sm:$0xff]
  %v39 = vld [vmem:[%s0 + $0x20] sm:$0xff]
  %v40 = vld [vmem:[%s0 + $0x28] sm:$0xff]
  %v41 = vld [vmem:[%s0 + $0x30] sm:$0xff]
  %v42 = vld [vmem:[%s0 + $0x38] sm:$0xff]
  %v43 = vld [vmem:[%s0 + $0x40] sm:$0xff]
  %v44 = vld [vmem:[%s0 + $0x48] sm:$0xff]
  %v45 = vld [vmem:[%s0 + $0x50] sm:$0xff]
  %v46 = vld [vmem:[%s0 + $0x58] sm:$0xff]
  %v47 = vld [vmem:[%s0 + $0x60] sm:$0xff]
  %v48 = vld [vmem:[%s0 + $0x68] sm:$0xff]
  %v49 = vld [vmem:[%s0 + $0x70] sm:$0xff]
  %v50 = vld [vmem:[%s0 + $0x78] sm:$0xff]
  %v51 = vld [vmem:[%s0 + $0x80] sm:$0xff]
  %v52 = vld [vmem:[%s0 + $0x88] sm:$0xff]
  %v53 = vld [vmem:[%s0 + $0x90] sm:$0xff]
  %v54 = vld [vmem:[%s0 + $0x98] sm:$0xff]
  %v55 = vld [vmem:[%s0 + $0xa0] sm:$0xff]
  %v56 = vld [vmem:[%s0 + $0xa8] sm:$0xff]
  %v57 = vld [vmem:[%s0 + $0xb0] sm:$0xff]
  %v58 = vld [vmem:[%s0 + $0xb8] sm:$0xff]
  %v59 = vld [vmem:[%s0 + $0xc0] sm:$0xff]
  %v60 = vld [vmem:[%s0 + $0xc8] sm:$0xff]
  %v61 = vld [vmem:[%s0 + $0xd0] sm:$0xff]
  %v62 = vld [vmem:[%s0 + $0xd8] sm:$0xff]
  %v63 = vld [vmem:[%s0 + $0xe0] sm:$0xff]
  %v64 = vld [vmem:[%s0 + $0xe8] sm:$0xff]
  %v65 = vld [vmem:[%s0 + $0xf0] sm:$0xff]
  %v66 = vld [vmem:[%s0 + $0xf8] sm:$0xff]
  %v67 = vld [vmem:[%s0 + $0x100] sm:$0xff]
  %v68 = vld [vmem:[%s0 + $0x108] sm:$0xff]
  %v69 = vld [vmem:[%s0 + $0x110] sm:$0xff]
  %v70 = vld [vmem:[%s0 + $0x118] sm:$0xff]
  %v71 = vld [vmem:[%s0 + $0x120] sm:$0xff]
  %v72 = vld [vmem:[%s0 + $0x128] sm:$0xff]
  %v73 = vld [vmem:[%s0 + $0x130] sm:$0xff]
  %v74 = vld [vmem:[%s0 + $0x138] sm:$0xff]
  %v75 = vld [vmem:[%s0 + $0x140] sm:$0xff]
  %v76 = vld [vmem:[%s0 + $0x148] sm:$0xff]
  %v77 = vld [vmem:[%s0 + $0x150] sm:$0xff]
  %v78 = vld [vmem:[%s0 + $0x158] sm:$0xff]
  %v79 = vld [vmem:[%s0 + $0x160] sm:$0xff]
  %v80 = vld [vmem:[%s0 + $0x168] sm:$0xff]
  %v81 = vld [vmem:[%s0 + $0x170] sm:$0xff]
  %v82 = vld [vmem:[%s0 + $0x178] sm:$0xff]
  %v83 = vld [vmem:[%s0 + $0x180] sm:$0xff]
  %v84 = vld [vmem:[%s0 + $0x188] sm:$0xff]
  %v85 = vld [vmem:[%s0 + $0x190] sm:$0xff]
  %v86 = vld [vmem:[%s0 + $0x198] sm:$0xff]
  %v87 = vld [vmem:[%s0 + $0x1a0] sm:$0xff]
  %v88 = vld [vmem:[%s0 + $0x1a8] sm:$0xff]
  %v89 = vld [vmem:[%s0 + $0x1b0] sm:$0xff]
  %v90 = vld [vmem:[%s0 + $0x1b8] sm:$0xff]
  %v91 = vld [vmem:[%s0 + $0x1c0] sm:$0xff]
  %v92 = vld [vmem:[%s0 + $0x1c8] sm:$0xff]
  %v93 = vld [vmem:[%s0 + $0x1d0] sm:$0xff]
  %v94 = vld [vmem:[%s0 + $0x1d8] sm:$0xff]
  %v95 = vld [vmem:[%s0 + $0x1e0] sm:$0xff]
  %v96 = vld [vmem:[%s0 + $0x1e8] sm:$0xff]
  %v97 = vld [vmem:[%s0 + $0x1f0] sm:$0xff]
  %v98 = vld [vmem:[%s0 + $0x1f8] sm:$0xff]
  %v99 = vpack.c.bf16 %v36, %v35
  %v100 = vpack.c.bf16 %v38, %v37
  %v101 = vpack.c.bf16 %v40, %v39
  %v102 = vpack.c.bf16 %v42, %v41
  %v103 = vpack.c.bf16 %v44, %v43
  %v104 = vpack.c.bf16 %v46, %v45
  %v105 = vpack.c.bf16 %v48, %v47
  %v106 = vpack.c.bf16 %v50, %v49
  %v107 = vpack.c.bf16 %v52, %v51
  %v108 = vpack.c.bf16 %v54, %v53
  %v109 = vpack.c.bf16 %v56, %v55
  %v110 = vpack.c.bf16 %v58, %v57
  %v111 = vpack.c.bf16 %v60, %v59
  %v112 = vpack.c.bf16 %v62, %v61
  %v113 = vpack.c.bf16 %v64, %v63
  %v114 = vpack.c.bf16 %v66, %v65
  %v115 = vpack.c.bf16 %v68, %v67
  %v116 = vpack.c.bf16 %v70, %v69
  %v117 = vpack.c.bf16 %v72, %v71
  %v118 = vpack.c.bf16 %v74, %v73
  %v119 = vpack.c.bf16 %v76, %v75
  %v120 = vpack.c.bf16 %v78, %v77
  %v121 = vpack.c.bf16 %v80, %v79
  %v122 = vpack.c.bf16 %v82, %v81
  %v123 = vpack.c.bf16 %v84, %v83
  %v124 = vpack.c.bf16 %v86, %v85
  %v125 = vpack.c.bf16 %v88, %v87
  %v126 = vpack.c.bf16 %v90, %v89
  %v127 = vpack.c.bf16 %v92, %v91
  %v128 = vpack.c.bf16 %v94, %v93
  %v129 = vpack.c.bf16 %v96, %v95
  %v130 = vpack.c.bf16 %v98, %v97
  %v131 = vld [vmem:[%s1] sm:$0xff]
  %v132 = vld [vmem:[%s1 + $0x8] sm:$0xff]
  %v133 = vld [vmem:[%s1 + $0x10] sm:$0x33]
  %v134 = vld [vmem:[%s2] sm:$0x3]
  %v136 = vlaneseq
  %v137 = vshrl.u32 %v136, 7
  %v138 = vsub.s32 0, %v137
  %v139 = vrot.slane %v134, %v138
  %v140 = vlaneseq
  %v141 = vshrl.u32 %v140, 7
  %v142 = vsub.s32 1, %v141
  %v143 = vrot.slane %v134, %v142
  %v149 = vunpack.c.l.b16 %v131
  %v150 = vunpack.c.h.b16 %v131
  %v151 = vunpack.c.l.b16 %v132
  %v152 = vunpack.c.h.b16 %v132
  %v153 = vunpack.c.l.b16 %v133
  %v154 = vunpack.c.h.b16 %v133
  %v155 = vpack.c.b16 %v151, %v149
  %v156 = vpack.c.b16 %v152, %v150
  %v157 = vpack.c.b16 %v153, %v153
  %v158 = vpack.c.b16 %v154, %v154
  %vm161 = vcmask 162816
  %v163 = vsel %vm161, %v99, 0
  %v166 = vsel %vm161, %v100, 0
  %v169 = vsel %vm161, %v101, 0
  %v172 = vsel %vm161, %v102, 0
  %v175 = vsel %vm161, %v103, 0
  %v178 = vsel %vm161, %v104, 0
  %v181 = vsel %vm161, %v105, 0
  %v184 = vsel %vm161, %v106, 0
  %v187 = vsel %vm161, %v107, 0
  %v190 = vsel %vm161, %v108, 0
  %v193 = vsel %vm161, %v109, 0
  %v196 = vsel %vm161, %v110, 0
  %v199 = vsel %vm161, %v111, 0
  %v202 = vsel %vm161, %v112, 0
  %v205 = vsel %vm161, %v113, 0
  %v208 = vsel %vm161, %v114, 0
  %v211 = vsel %vm161, %v115, 0
  %v214 = vsel %vm161, %v116, 0
  %v217 = vsel %vm161, %v117, 0
  %v220 = vsel %vm161, %v118, 0
  %v223 = vsel %vm161, %v119, 0
  %v226 = vsel %vm161, %v120, 0
  %v229 = vsel %vm161, %v121, 0
  %v232 = vsel %vm161, %v122, 0
  %v235 = vsel %vm161, %v123, 0
  %v238 = vsel %vm161, %v124, 0
  %v241 = vsel %vm161, %v125, 0
  %v244 = vsel %vm161, %v126, 0
  %v247 = vsel %vm161, %v127, 0
  %v250 = vsel %vm161, %v128, 0
  %v253 = vsel %vm161, %v129, 0
  %v256 = vsel %vm161, %v130, 0
  %vm258 = vcmask 1041408
  %v260 = vsel %vm258, %v157, 0
  %v263 = vsel %vm258, %v158, 0
  %265 = vmatprep.subr.bf16.mxu0 %v156
  %266 = vmatpush1.bf16.msra.mxu0 %v155
  %267 = vmatprep.subr.bf16.mxu0 %v263
  %268 = vmatpush1.bf16.msra.mxu0 %v260
  %269 = vmatprep.subr.bf16.mxu0 0
  %270 = vmatpush1.bf16.msra.mxu0 0
  %271 = vmatprep.subr.bf16.mxu0 0
  %272 = vmatpush1.bf16.msra.mxu0 0
  %273 = vmatprep.subr.bf16.mxu0 0
  %274 = vmatpush1.bf16.msra.mxu0 0
  %275 = vmatprep.subr.bf16.mxu0 0
  %276 = vmatpush1.bf16.msra.mxu0 0
  %277 = vmatprep.subr.bf16.mxu0 0
  %278 = vmatpush1.bf16.msra.mxu0 0
  %279 = vmatprep.subr.bf16.mxu0 0
  %280 = vmatpush1.bf16.msra.mxu0 0
  %281 = vmatprep.subr.bf16.mxu0 0
  %282 = vmatpush1.bf16.msra.mxu0 0
  %283 = vmatprep.subr.bf16.mxu0 0
  %284 = vmatpush1.bf16.msra.mxu0 0
  %285 = vmatprep.subr.bf16.mxu0 0
  %286 = vmatpush1.bf16.msra.mxu0 0
  %287 = vmatprep.subr.bf16.mxu0 0
  %288 = vmatpush1.bf16.msra.mxu0 0
  %289 = vmatprep.subr.bf16.mxu0 0
  %290 = vmatpush1.bf16.msra.mxu0 0
  %291 = vmatprep.subr.bf16.mxu0 0
  %292 = vmatpush1.bf16.msra.mxu0 0
  %293 = vmatprep.subr.bf16.mxu0 0
  %294 = vmatpush1.bf16.msra.mxu0 0
  %295 = vmatprep.subr.bf16.mxu0 0
  %296 = vmatpush1.bf16.msra.mxu0 0
  %297 = vmatprep.mubr.bf16.mxu0 0
  %298 = vmatmul.mubr.bf16.gmra.mrb[0].mxu0 %v163
  %v299 = vpop.f32.mrb[0].mxu0
  %v300 = vadd.f32 %v139, %v299
  %v301 = vpop.f32.mrb[0].mxu0
  %v302 = vadd.f32 %v143, %v301
  %v303 = vpop.f32.mrb[0].mxu0
  %v304 = vadd.f32 %v139, %v303
  %v305 = vpop.f32.mrb[0].mxu0
  %v306 = vadd.f32 %v143, %v305
  %307 = vmatprep.mubr.bf16.mxu0 0
  %308 = vmatmul.mubr.bf16.gmra.mrb[0].mxu0 %v166
  %v309 = vpop.f32.mrb[0].mxu0
  %v310 = vadd.f32 %v139, %v309
  %v311 = vpop.f32.mrb[0].mxu0
  %v312 = vadd.f32 %v143, %v311
  %v313 = vpop.f32.mrb[0].mxu0
  %v314 = vadd.f32 %v139, %v313
  %v315 = vpop.f32.mrb[0].mxu0
  %v316 = vadd.f32 %v143, %v315
  %317 = vmatprep.mubr.bf16.mxu0 0
  %318 = vmatmul.mubr.bf16.gmra.mrb[0].mxu0 %v169
  %v319 = vpop.f32.mrb[0].mxu0
  %v320 = vadd.f32 %v139, %v319
  %v321 = vpop.f32.mrb[0].mxu0
  %v322 = vadd.f32 %v143, %v321
  %v323 = vpop.f32.mrb[0].mxu0
  %v324 = vadd.f32 %v139, %v323
  %v325 = vpop.f32.mrb[0].mxu0
  %v326 = vadd.f32 %v143, %v325
  %327 = vmatprep.mubr.bf16.mxu0 0
  %328 = vmatmul.mubr.bf16.gmra.mrb[0].mxu0 %v172
  %v329 = vpop.f32.mrb[0].mxu0
  %v330 = vadd.f32 %v139, %v329
  %v331 = vpop.f32.mrb[0].mxu0
  %v332 = vadd.f32 %v143, %v331
  %v333 = vpop.f32.mrb[0].mxu0
  %v334 = vadd.f32 %v139, %v333
  %v335 = vpop.f32.mrb[0].mxu0
  %v336 = vadd.f32 %v143, %v335
  %337 = vmatprep.mubr.bf16.mxu0 0
  %338 = vmatmul.mubr.bf16.gmra.mrb[0].mxu0 %v175
  %v339 = vpop.f32.mrb[0].mxu0
  %v340 = vadd.f32 %v139, %v339
  %v341 = vpop.f32.mrb[0].mxu0
  %v342 = vadd.f32 %v143, %v341
  %v343 = vpop.f32.mrb[0].mxu0
  %v344 = vadd.f32 %v139, %v343
  %v345 = vpop.f32.mrb[0].mxu0
  %v346 = vadd.f32 %v143, %v345
  %347 = vmatprep.mubr.bf16.mxu0 0
  %348 = vmatmul.mubr.bf16.gmra.mrb[0].mxu0 %v178
  %v349 = vpop.f32.mrb[0].mxu0
  %v350 = vadd.f32 %v139, %v349
  %v351 = vpop.f32.mrb[0].mxu0
  %v352 = vadd.f32 %v143, %v351
  %v353 = vpop.f32.mrb[0].mxu0
  %v354 = vadd.f32 %v139, %v353
  %v355 = vpop.f32.mrb[0].mxu0
  %v356 = vadd.f32 %v143, %v355
  %357 = vmatprep.mubr.bf16.mxu0 0
  %358 = vmatmul.mubr.bf16.gmra.mrb[0].mxu0 %v181
  %v359 = vpop.f32.mrb[0].mxu0
  %v360 = vadd.f32 %v139, %v359
  %v361 = vpop.f32.mrb[0].mxu0
  %v362 = vadd.f32 %v143, %v361
  %v363 = vpop.f32.mrb[0].mxu0
  %v364 = vadd.f32 %v139, %v363
  %v365 = vpop.f32.mrb[0].mxu0
  %v366 = vadd.f32 %v143, %v365
  %367 = vmatprep.mubr.bf16.mxu0 0
  %368 = vmatmul.mubr.bf16.gmra.mrb[0].mxu0 %v184
  %v369 = vpop.f32.mrb[0].mxu0
  %v370 = vadd.f32 %v139, %v369
  %v371 = vpop.f32.mrb[0].mxu0
  %v372 = vadd.f32 %v143, %v371
  %v373 = vpop.f32.mrb[0].mxu0
  %v374 = vadd.f32 %v139, %v373
  %v375 = vpop.f32.mrb[0].mxu0
  %v376 = vadd.f32 %v143, %v375
  %377 = vmatprep.mubr.bf16.mxu0 0
  %378 = vmatmul.mubr.bf16.gmra.mrb[0].mxu0 %v187
  %v379 = vpop.f32.mrb[0].mxu0
  %v380 = vadd.f32 %v139, %v379
  %v381 = vpop.f32.mrb[0].mxu0
  %v382 = vadd.f32 %v143, %v381
  %v383 = vpop.f32.mrb[0].mxu0
  %v384 = vadd.f32 %v139, %v383
  %v385 = vpop.f32.mrb[0].mxu0
  %v386 = vadd.f32 %v143, %v385
  %387 = vmatprep.mubr.bf16.mxu0 0
  %388 = vmatmul.mubr.bf16.gmra.mrb[0].mxu0 %v190
  %v389 = vpop.f32.mrb[0].mxu0
  %v390 = vadd.f32 %v139, %v389
  %v391 = vpop.f32.mrb[0].mxu0
  %v392 = vadd.f32 %v143, %v391
  %v393 = vpop.f32.mrb[0].mxu0
  %v394 = vadd.f32 %v139, %v393
  %v395 = vpop.f32.mrb[0].mxu0
  %v396 = vadd.f32 %v143, %v395
  %397 = vmatprep.mubr.bf16.mxu0 0
  %398 = vmatmul.mubr.bf16.gmra.mrb[0].mxu0 %v193
  %v399 = vpop.f32.mrb[0].mxu0
  %v400 = vadd.f32 %v139, %v399
  %v401 = vpop.f32.mrb[0].mxu0
  %v402 = vadd.f32 %v143, %v401
  %v403 = vpop.f32.mrb[0].mxu0
  %v404 = vadd.f32 %v139, %v403
  %v405 = vpop.f32.mrb[0].mxu0
  %v406 = vadd.f32 %v143, %v405
  %407 = vmatprep.mubr.bf16.mxu0 0
  %408 = vmatmul.mubr.bf16.gmra.mrb[0].mxu0 %v196
  %v409 = vpop.f32.mrb[0].mxu0
  %v410 = vadd.f32 %v139, %v409
  %v411 = vpop.f32.mrb[0].mxu0
  %v412 = vadd.f32 %v143, %v411
  %v413 = vpop.f32.mrb[0].mxu0
  %v414 = vadd.f32 %v139, %v413
  %v415 = vpop.f32.mrb[0].mxu0
  %v416 = vadd.f32 %v143, %v415
  %417 = vmatprep.mubr.bf16.mxu0 0
  %418 = vmatmul.mubr.bf16.gmra.mrb[0].mxu0 %v199
  %v419 = vpop.f32.mrb[0].mxu0
  %v420 = vadd.f32 %v139, %v419
  %v421 = vpop.f32.mrb[0].mxu0
  %v422 = vadd.f32 %v143, %v421
  %v423 = vpop.f32.mrb[0].mxu0
  %v424 = vadd.f32 %v139, %v423
  %v425 = vpop.f32.mrb[0].mxu0
  %v426 = vadd.f32 %v143, %v425
  %427 = vmatprep.mubr.bf16.mxu0 0
  %428 = vmatmul.mubr.bf16.gmra.mrb[0].mxu0 %v202
  %v429 = vpop.f32.mrb[0].mxu0
  %v430 = vadd.f32 %v139, %v429
  %v431 = vpop.f32.mrb[0].mxu0
  %v432 = vadd.f32 %v143, %v431
  %v433 = vpop.f32.mrb[0].mxu0
  %v434 = vadd.f32 %v139, %v433
  %v435 = vpop.f32.mrb[0].mxu0
  %v436 = vadd.f32 %v143, %v435
  %437 = vmatprep.mubr.bf16.mxu0 0
  %438 = vmatmul.mubr.bf16.gmra.mrb[0].mxu0 %v205
  %v439 = vpop.f32.mrb[0].mxu0
  %v440 = vadd.f32 %v139, %v439
  %v441 = vpop.f32.mrb[0].mxu0
  %v442 = vadd.f32 %v143, %v441
  %v443 = vpop.f32.mrb[0].mxu0
  %v444 = vadd.f32 %v139, %v443
  %v445 = vpop.f32.mrb[0].mxu0
  %v446 = vadd.f32 %v143, %v445
  %447 = vmatprep.mubr.bf16.mxu0 0
  %448 = vmatmul.mubr.bf16.gmra.mrb[0].mxu0 %v208
  %v449 = vpop.f32.mrb[0].mxu0
  %v450 = vadd.f32 %v139, %v449
  %v451 = vpop.f32.mrb[0].mxu0
  %v452 = vadd.f32 %v143, %v451
  %v453 = vpop.f32.mrb[0].mxu0
  %v454 = vadd.f32 %v139, %v453
  %v455 = vpop.f32.mrb[0].mxu0
  %v456 = vadd.f32 %v143, %v455
  %457 = vmatprep.mubr.bf16.mxu0 0
  %458 = vmatmul.mubr.bf16.gmra.mrb[0].mxu0 %v211
  %v459 = vpop.f32.mrb[0].mxu0
  %v460 = vadd.f32 %v139, %v459
  %v461 = vpop.f32.mrb[0].mxu0
  %v462 = vadd.f32 %v143, %v461
  %v463 = vpop.f32.mrb[0].mxu0
  %v464 = vadd.f32 %v139, %v463
  %v465 = vpop.f32.mrb[0].mxu0
  %v466 = vadd.f32 %v143, %v465
  %467 = vmatprep.mubr.bf16.mxu0 0
  %468 = vmatmul.mubr.bf16.gmra.mrb[0].mxu0 %v214
  %v469 = vpop.f32.mrb[0].mxu0
  %v470 = vadd.f32 %v139, %v469
  %v471 = vpop.f32.mrb[0].mxu0
  %v472 = vadd.f32 %v143, %v471
  %v473 = vpop.f32.mrb[0].mxu0
  %v474 = vadd.f32 %v139, %v473
  %v475 = vpop.f32.mrb[0].mxu0
  %v476 = vadd.f32 %v143, %v475
  %477 = vmatprep.mubr.bf16.mxu0 0
  %478 = vmatmul.mubr.bf16.gmra.mrb[0].mxu0 %v217
  %v479 = vpop.f32.mrb[0].mxu0
  %v480 = vadd.f32 %v139, %v479
  %v481 = vpop.f32.mrb[0].mxu0
  %v482 = vadd.f32 %v143, %v481
  %v483 = vpop.f32.mrb[0].mxu0
  %v484 = vadd.f32 %v139, %v483
  %v485 = vpop.f32.mrb[0].mxu0
  %v486 = vadd.f32 %v143, %v485
  %487 = vmatprep.mubr.bf16.mxu0 0
  %488 = vmatmul.mubr.bf16.gmra.mrb[0].mxu0 %v220
  %v489 = vpop.f32.mrb[0].mxu0
  %v490 = vadd.f32 %v139, %v489
  %v491 = vpop.f32.mrb[0].mxu0
  %v492 = vadd.f32 %v143, %v491
  %v493 = vpop.f32.mrb[0].mxu0
  %v494 = vadd.f32 %v139, %v493
  %v495 = vpop.f32.mrb[0].mxu0
  %v496 = vadd.f32 %v143, %v495
  %497 = vmatprep.mubr.bf16.mxu0 0
  %498 = vmatmul.mubr.bf16.gmra.mrb[0].mxu0 %v223
  %v499 = vpop.f32.mrb[0].mxu0
  %v500 = vadd.f32 %v139, %v499
  %v501 = vpop.f32.mrb[0].mxu0
  %v502 = vadd.f32 %v143, %v501
  %v503 = vpop.f32.mrb[0].mxu0
  %v504 = vadd.f32 %v139, %v503
  %v505 = vpop.f32.mrb[0].mxu0
  %v506 = vadd.f32 %v143, %v505
  %507 = vmatprep.mubr.bf16.mxu0 0
  %508 = vmatmul.mubr.bf16.gmra.mrb[0].mxu0 %v226
  %v509 = vpop.f32.mrb[0].mxu0
  %v510 = vadd.f32 %v139, %v509
  %v511 = vpop.f32.mrb[0].mxu0
  %v512 = vadd.f32 %v143, %v511
  %v513 = vpop.f32.mrb[0].mxu0
  %v514 = vadd.f32 %v139, %v513
  %v515 = vpop.f32.mrb[0].mxu0
  %v516 = vadd.f32 %v143, %v515
  %517 = vmatprep.mubr.bf16.mxu0 0
  %518 = vmatmul.mubr.bf16.gmra.mrb[0].mxu0 %v229
  %v519 = vpop.f32.mrb[0].mxu0
  %v520 = vadd.f32 %v139, %v519
  %v521 = vpop.f32.mrb[0].mxu0
  %v522 = vadd.f32 %v143, %v521
  %v523 = vpop.f32.mrb[0].mxu0
  %v524 = vadd.f32 %v139, %v523
  %v525 = vpop.f32.mrb[0].mxu0
  %v526 = vadd.f32 %v143, %v525
  %527 = vmatprep.mubr.bf16.mxu0 0
  %528 = vmatmul.mubr.bf16.gmra.mrb[0].mxu0 %v232
  %v529 = vpop.f32.mrb[0].mxu0
  %v530 = vadd.f32 %v139, %v529
  %v531 = vpop.f32.mrb[0].mxu0
  %v532 = vadd.f32 %v143, %v531
  %v533 = vpop.f32.mrb[0].mxu0
  %v534 = vadd.f32 %v139, %v533
  %v535 = vpop.f32.mrb[0].mxu0
  %v536 = vadd.f32 %v143, %v535
  %537 = vmatprep.mubr.bf16.mxu0 0
  %538 = vmatmul.mubr.bf16.gmra.mrb[0].mxu0 %v235
  %v539 = vpop.f32.mrb[0].mxu0
  %v540 = vadd.f32 %v139, %v539
  %v541 = vpop.f32.mrb[0].mxu0
  %v542 = vadd.f32 %v143, %v541
  %v543 = vpop.f32.mrb[0].mxu0
  %v544 = vadd.f32 %v139, %v543
  %v545 = vpop.f32.mrb[0].mxu0
  %v546 = vadd.f32 %v143, %v545
  %547 = vmatprep.mubr.bf16.mxu0 0
  %548 = vmatmul.mubr.bf16.gmra.mrb[0].mxu0 %v238
  %v549 = vpop.f32.mrb[0].mxu0
  %v550 = vadd.f32 %v139, %v549
  %v551 = vpop.f32.mrb[0].mxu0
  %v552 = vadd.f32 %v143, %v551
  %v553 = vpop.f32.mrb[0].mxu0
  %v554 = vadd.f32 %v139, %v553
  %v555 = vpop.f32.mrb[0].mxu0
  %v556 = vadd.f32 %v143, %v555
  %557 = vmatprep.mubr.bf16.mxu0 0
  %558 = vmatmul.mubr.bf16.gmra.mrb[0].mxu0 %v241
  %v559 = vpop.f32.mrb[0].mxu0
  %v560 = vadd.f32 %v139, %v559
  %v561 = vpop.f32.mrb[0].mxu0
  %v562 = vadd.f32 %v143, %v561
  %v563 = vpop.f32.mrb[0].mxu0
  %v564 = vadd.f32 %v139, %v563
  %v565 = vpop.f32.mrb[0].mxu0
  %v566 = vadd.f32 %v143, %v565
  %567 = vmatprep.mubr.bf16.mxu0 0
  %568 = vmatmul.mubr.bf16.gmra.mrb[0].mxu0 %v244
  %v569 = vpop.f32.mrb[0].mxu0
  %v570 = vadd.f32 %v139, %v569
  %v571 = vpop.f32.mrb[0].mxu0
  %v572 = vadd.f32 %v143, %v571
  %v573 = vpop.f32.mrb[0].mxu0
  %v574 = vadd.f32 %v139, %v573
  %v575 = vpop.f32.mrb[0].mxu0
  %v576 = vadd.f32 %v143, %v575
  %577 = vmatprep.mubr.bf16.mxu0 0
  %578 = vmatmul.mubr.bf16.gmra.mrb[0].mxu0 %v247
  %v579 = vpop.f32.mrb[0].mxu0
  %v580 = vadd.f32 %v139, %v579
  %v581 = vpop.f32.mrb[0].mxu0
  %v582 = vadd.f32 %v143, %v581
  %v583 = vpop.f32.mrb[0].mxu0
  %v584 = vadd.f32 %v139, %v583
  %v585 = vpop.f32.mrb[0].mxu0
  %v586 = vadd.f32 %v143, %v585
  %587 = vmatprep.mubr.bf16.mxu0 0
  %588 = vmatmul.mubr.bf16.gmra.mrb[0].mxu0 %v250
  %v589 = vpop.f32.mrb[0].mxu0
  %v590 = vadd.f32 %v139, %v589
  %v591 = vpop.f32.mrb[0].mxu0
  %v592 = vadd.f32 %v143, %v591
  %v593 = vpop.f32.mrb[0].mxu0
  %v594 = vadd.f32 %v139, %v593
  %v595 = vpop.f32.mrb[0].mxu0
  %v596 = vadd.f32 %v143, %v595
  %597 = vmatprep.mubr.bf16.mxu0 0
  %598 = vmatmul.mubr.bf16.gmra.mrb[0].mxu0 %v253
  %v599 = vpop.f32.mrb[0].mxu0
  %v600 = vadd.f32 %v139, %v599
  %v601 = vpop.f32.mrb[0].mxu0
  %v602 = vadd.f32 %v143, %v601
  %v603 = vpop.f32.mrb[0].mxu0
  %v604 = vadd.f32 %v139, %v603
  %v605 = vpop.f32.mrb[0].mxu0
  %v606 = vadd.f32 %v143, %v605
  %607 = vmatprep.mubr.bf16.mxu0 0
  %608 = vmatmul.mubr.bf16.gmra.mrb[0].mxu0 %v256
  %v609 = vpop.f32.mrb[0].mxu0
  %v610 = vadd.f32 %v139, %v609
  %v611 = vpop.f32.mrb[0].mxu0
  %v612 = vadd.f32 %v143, %v611
  %v613 = vpop.f32.mrb[0].mxu0
  %v614 = vadd.f32 %v139, %v613
  %v615 = vpop.f32.mrb[0].mxu0
  %v616 = vadd.f32 %v143, %v615
  %617 = vdwg.mxu0
  %vm618 = vcmp.ge.f32.partialorder %v300, 0.0
  %vm619 = vcmp.ge.f32.partialorder %v302, 0.0
  %vm620 = vcmp.ge.f32.partialorder %v304, 0.0
  %vm621 = vcmp.ge.f32.partialorder %v306, 0.0
  %vm622 = vcmp.ge.f32.partialorder %v310, 0.0
  %vm623 = vcmp.ge.f32.partialorder %v312, 0.0
  %vm624 = vcmp.ge.f32.partialorder %v314, 0.0
  %vm625 = vcmp.ge.f32.partialorder %v316, 0.0
  %vm626 = vcmp.ge.f32.partialorder %v320, 0.0
  %vm627 = vcmp.ge.f32.partialorder %v322, 0.0
  %vm628 = vcmp.ge.f32.partialorder %v324, 0.0
  %vm629 = vcmp.ge.f32.partialorder %v326, 0.0
  %vm630 = vcmp.ge.f32.partialorder %v330, 0.0
  %vm631 = vcmp.ge.f32.partialorder %v332, 0.0
  %vm632 = vcmp.ge.f32.partialorder %v334, 0.0
  %vm633 = vcmp.ge.f32.partialorder %v336, 0.0
  %vm634 = vcmp.ge.f32.partialorder %v340, 0.0
  %vm635 = vcmp.ge.f32.partialorder %v342, 0.0
  %vm636 = vcmp.ge.f32.partialorder %v344, 0.0
  %vm637 = vcmp.ge.f32.partialorder %v346, 0.0
  %vm638 = vcmp.ge.f32.partialorder %v350, 0.0
  %vm639 = vcmp.ge.f32.partialorder %v352, 0.0
  %vm640 = vcmp.ge.f32.partialorder %v354, 0.0
  %vm641 = vcmp.ge.f32.partialorder %v356, 0.0
  %vm642 = vcmp.ge.f32.partialorder %v360, 0.0
  %vm643 = vcmp.ge.f32.partialorder %v362, 0.0
  %vm644 = vcmp.ge.f32.partialorder %v364, 0.0
  %vm645 = vcmp.ge.f32.partialorder %v366, 0.0
  %vm646 = vcmp.ge.f32.partialorder %v370, 0.0
  %vm647 = vcmp.ge.f32.partialorder %v372, 0.0
  %vm648 = vcmp.ge.f32.partialorder %v374, 0.0
  %vm649 = vcmp.ge.f32.partialorder %v376, 0.0
  %vm650 = vcmp.ge.f32.partialorder %v380, 0.0
  %vm651 = vcmp.ge.f32.partialorder %v382, 0.0
  %vm652 = vcmp.ge.f32.partialorder %v384, 0.0
  %vm653 = vcmp.ge.f32.partialorder %v386, 0.0
  %vm654 = vcmp.ge.f32.partialorder %v390, 0.0
  %vm655 = vcmp.ge.f32.partialorder %v392, 0.0
  %vm656 = vcmp.ge.f32.partialorder %v394, 0.0
  %vm657 = vcmp.ge.f32.partialorder %v396, 0.0
  %vm658 = vcmp.ge.f32.partialorder %v400, 0.0
  %vm659 = vcmp.ge.f32.partialorder %v402, 0.0
  %vm660 = vcmp.ge.f32.partialorder %v404, 0.0
  %vm661 = vcmp.ge.f32.partialorder %v406, 0.0
  %vm662 = vcmp.ge.f32.partialorder %v410, 0.0
  %vm663 = vcmp.ge.f32.partialorder %v412, 0.0
  %vm664 = vcmp.ge.f32.partialorder %v414, 0.0
  %vm665 = vcmp.ge.f32.partialorder %v416, 0.0
  %vm666 = vcmp.ge.f32.partialorder %v420, 0.0
  %vm667 = vcmp.ge.f32.partialorder %v422, 0.0
  %vm668 = vcmp.ge.f32.partialorder %v424, 0.0
  %vm669 = vcmp.ge.f32.partialorder %v426, 0.0
  %vm670 = vcmp.ge.f32.partialorder %v430, 0.0
  %vm671 = vcmp.ge.f32.partialorder %v432, 0.0
  %vm672 = vcmp.ge.f32.partialorder %v434, 0.0
  %vm673 = vcmp.ge.f32.partialorder %v436, 0.0
  %vm674 = vcmp.ge.f32.partialorder %v440, 0.0
  %vm675 = vcmp.ge.f32.partialorder %v442, 0.0
  %vm676 = vcmp.ge.f32.partialorder %v444, 0.0
  %vm677 = vcmp.ge.f32.partialorder %v446, 0.0
  %vm678 = vcmp.ge.f32.partialorder %v450, 0.0
  %vm679 = vcmp.ge.f32.partialorder %v452, 0.0
  %vm680 = vcmp.ge.f32.partialorder %v454, 0.0
  %vm681 = vcmp.ge.f32.partialorder %v456, 0.0
  %vm682 = vcmp.ge.f32.partialorder %v460, 0.0
  %vm683 = vcmp.ge.f32.partialorder %v462, 0.0
  %vm684 = vcmp.ge.f32.partialorder %v464, 0.0
  %vm685 = vcmp.ge.f32.partialorder %v466, 0.0
  %vm686 = vcmp.ge.f32.partialorder %v470, 0.0
  %vm687 = vcmp.ge.f32.partialorder %v472, 0.0
  %vm688 = vcmp.ge.f32.partialorder %v474, 0.0
  %vm689 = vcmp.ge.f32.partialorder %v476, 0.0
  %vm690 = vcmp.ge.f32.partialorder %v480, 0.0
  %vm691 = vcmp.ge.f32.partialorder %v482, 0.0
  %vm692 = vcmp.ge.f32.partialorder %v484, 0.0
  %vm693 = vcmp.ge.f32.partialorder %v486, 0.0
  %vm694 = vcmp.ge.f32.partialorder %v490, 0.0
  %vm695 = vcmp.ge.f32.partialorder %v492, 0.0
  %vm696 = vcmp.ge.f32.partialorder %v494, 0.0
  %vm697 = vcmp.ge.f32.partialorder %v496, 0.0
  %vm698 = vcmp.ge.f32.partialorder %v500, 0.0
  %vm699 = vcmp.ge.f32.partialorder %v502, 0.0
  %vm700 = vcmp.ge.f32.partialorder %v504, 0.0
  %vm701 = vcmp.ge.f32.partialorder %v506, 0.0
  %vm702 = vcmp.ge.f32.partialorder %v510, 0.0
  %vm703 = vcmp.ge.f32.partialorder %v512, 0.0
  %vm704 = vcmp.ge.f32.partialorder %v514, 0.0
  %vm705 = vcmp.ge.f32.partialorder %v516, 0.0
  %vm706 = vcmp.ge.f32.partialorder %v520, 0.0
  %vm707 = vcmp.ge.f32.partialorder %v522, 0.0
  %vm708 = vcmp.ge.f32.partialorder %v524, 0.0
  %vm709 = vcmp.ge.f32.partialorder %v526, 0.0
  %vm710 = vcmp.ge.f32.partialorder %v530, 0.0
  %vm711 = vcmp.ge.f32.partialorder %v532, 0.0
  %vm712 = vcmp.ge.f32.partialorder %v534, 0.0
  %vm713 = vcmp.ge.f32.partialorder %v536, 0.0
  %vm714 = vcmp.ge.f32.partialorder %v540, 0.0
  %vm715 = vcmp.ge.f32.partialorder %v542, 0.0
  %vm716 = vcmp.ge.f32.partialorder %v544, 0.0
  %vm717 = vcmp.ge.f32.partialorder %v546, 0.0
  %vm718 = vcmp.ge.f32.partialorder %v550, 0.0
  %vm719 = vcmp.ge.f32.partialorder %v552, 0.0
  %vm720 = vcmp.ge.f32.partialorder %v554, 0.0
  %vm721 = vcmp.ge.f32.partialorder %v556, 0.0
  %vm722 = vcmp.ge.f32.partialorder %v560, 0.0
  %vm723 = vcmp.ge.f32.partialorder %v562, 0.0
  %vm724 = vcmp.ge.f32.partialorder %v564, 0.0
  %vm725 = vcmp.ge.f32.partialorder %v566, 0.0
  %vm726 = vcmp.ge.f32.partialorder %v570, 0.0
  %vm727 = vcmp.ge.f32.partialorder %v572, 0.0
  %vm728 = vcmp.ge.f32.partialorder %v574, 0.0
  %vm729 = vcmp.ge.f32.partialorder %v576, 0.0
  %vm730 = vcmp.ge.f32.partialorder %v580, 0.0
  %vm731 = vcmp.ge.f32.partialorder %v582, 0.0
  %vm732 = vcmp.ge.f32.partialorder %v584, 0.0
  %vm733 = vcmp.ge.f32.partialorder %v586, 0.0
  %vm734 = vcmp.ge.f32.partialorder %v590, 0.0
  %vm735 = vcmp.ge.f32.partialorder %v592, 0.0
  %vm736 = vcmp.ge.f32.partialorder %v594, 0.0
  %vm737 = vcmp.ge.f32.partialorder %v596, 0.0
  %vm738 = vcmp.ge.f32.partialorder %v600, 0.0
  %vm739 = vcmp.ge.f32.partialorder %v602, 0.0
  %vm740 = vcmp.ge.f32.partialorder %v604, 0.0
  %vm741 = vcmp.ge.f32.partialorder %v606, 0.0
  %vm742 = vcmp.ge.f32.partialorder %v610, 0.0
  %vm743 = vcmp.ge.f32.partialorder %v612, 0.0
  %vm744 = vcmp.ge.f32.partialorder %v614, 0.0
  %vm745 = vcmp.ge.f32.partialorder %v616, 0.0
  %v746 = vmul.f32 %v300, 0.1
  %v747 = vmul.f32 %v302, 0.1
  %v748 = vmul.f32 %v304, 0.1
  %v749 = vmul.f32 %v306, 0.1
  %v750 = vmul.f32 %v310, 0.1
  %v751 = vmul.f32 %v312, 0.1
  %v752 = vmul.f32 %v314, 0.1
  %v753 = vmul.f32 %v316, 0.1
  %v754 = vmul.f32 %v320, 0.1
  %v755 = vmul.f32 %v322, 0.1
  %v756 = vmul.f32 %v324, 0.1
  %v757 = vmul.f32 %v326, 0.1
  %v758 = vmul.f32 %v330, 0.1
  %v759 = vmul.f32 %v332, 0.1
  %v760 = vmul.f32 %v334, 0.1
  %v761 = vmul.f32 %v336, 0.1
  %v762 = vmul.f32 %v340, 0.1
  %v763 = vmul.f32 %v342, 0.1
  %v764 = vmul.f32 %v344, 0.1
  %v765 = vmul.f32 %v346, 0.1
  %v766 = vmul.f32 %v350, 0.1
  %v767 = vmul.f32 %v352, 0.1
  %v768 = vmul.f32 %v354, 0.1
  %v769 = vmul.f32 %v356, 0.1
  %v770 = vmul.f32 %v360, 0.1
  %v771 = vmul.f32 %v362, 0.1
  %v772 = vmul.f32 %v364, 0.1
  %v773 = vmul.f32 %v366, 0.1
  %v774 = vmul.f32 %v370, 0.1
  %v775 = vmul.f32 %v372, 0.1
  %v776 = vmul.f32 %v374, 0.1
  %v777 = vmul.f32 %v376, 0.1
  %v778 = vmul.f32 %v380, 0.1
  %v779 = vmul.f32 %v382, 0.1
  %v780 = vmul.f32 %v384, 0.1
  %v781 = vmul.f32 %v386, 0.1
  %v782 = vmul.f32 %v390, 0.1
  %v783 = vmul.f32 %v392, 0.1
  %v784 = vmul.f32 %v394, 0.1
  %v785 = vmul.f32 %v396, 0.1
  %v786 = vmul.f32 %v400, 0.1
  %v787 = vmul.f32 %v402, 0.1
  %v788 = vmul.f32 %v404, 0.1
  %v789 = vmul.f32 %v406, 0.1
  %v790 = vmul.f32 %v410, 0.1
  %v791 = vmul.f32 %v412, 0.1
  %v792 = vmul.f32 %v414, 0.1
  %v793 = vmul.f32 %v416, 0.1
  %v794 = vmul.f32 %v420, 0.1
  %v795 = vmul.f32 %v422, 0.1
  %v796 = vmul.f32 %v424, 0.1
  %v797 = vmul.f32 %v426, 0.1
  %v798 = vmul.f32 %v430, 0.1
  %v799 = vmul.f32 %v432, 0.1
  %v800 = vmul.f32 %v434, 0.1
  %v801 = vmul.f32 %v436, 0.1
  %v802 = vmul.f32 %v440, 0.1
  %v803 = vmul.f32 %v442, 0.1
  %v804 = vmul.f32 %v444, 0.1
  %v805 = vmul.f32 %v446, 0.1
  %v806 = vmul.f32 %v450, 0.1
  %v807 = vmul.f32 %v452, 0.1
  %v808 = vmul.f32 %v454, 0.1
  %v809 = vmul.f32 %v456, 0.1
  %v810 = vmul.f32 %v460, 0.1
  %v811 = vmul.f32 %v462, 0.1
  %v812 = vmul.f32 %v464, 0.1
  %v813 = vmul.f32 %v466, 0.1
  %v814 = vmul.f32 %v470, 0.1
  %v815 = vmul.f32 %v472, 0.1
  %v816 = vmul.f32 %v474, 0.1
  %v817 = vmul.f32 %v476, 0.1
  %v818 = vmul.f32 %v480, 0.1
  %v819 = vmul.f32 %v482, 0.1
  %v820 = vmul.f32 %v484, 0.1
  %v821 = vmul.f32 %v486, 0.1
  %v822 = vmul.f32 %v490, 0.1
  %v823 = vmul.f32 %v492, 0.1
  %v824 = vmul.f32 %v494, 0.1
  %v825 = vmul.f32 %v496, 0.1
  %v826 = vmul.f32 %v500, 0.1
  %v827 = vmul.f32 %v502, 0.1
  %v828 = vmul.f32 %v504, 0.1
  %v829 = vmul.f32 %v506, 0.1
  %v830 = vmul.f32 %v510, 0.1
  %v831 = vmul.f32 %v512, 0.1
  %v832 = vmul.f32 %v514, 0.1
  %v833 = vmul.f32 %v516, 0.1
  %v834 = vmul.f32 %v520, 0.1
  %v835 = vmul.f32 %v522, 0.1
  %v836 = vmul.f32 %v524, 0.1
  %v837 = vmul.f32 %v526, 0.1
  %v838 = vmul.f32 %v530, 0.1
  %v839 = vmul.f32 %v532, 0.1
  %v840 = vmul.f32 %v534, 0.1
  %v841 = vmul.f32 %v536, 0.1
  %v842 = vmul.f32 %v540, 0.1
  %v843 = vmul.f32 %v542, 0.1
  %v844 = vmul.f32 %v544, 0.1
  %v845 = vmul.f32 %v546, 0.1
  %v846 = vmul.f32 %v550, 0.1
  %v847 = vmul.f32 %v552, 0.1
  %v848 = vmul.f32 %v554, 0.1
  %v849 = vmul.f32 %v556, 0.1
  %v850 = vmul.f32 %v560, 0.1
  %v851 = vmul.f32 %v562, 0.1
  %v852 = vmul.f32 %v564, 0.1
  %v853 = vmul.f32 %v566, 0.1
  %v854 = vmul.f32 %v570, 0.1
  %v855 = vmul.f32 %v572, 0.1
  %v856 = vmul.f32 %v574, 0.1
  %v857 = vmul.f32 %v576, 0.1
  %v858 = vmul.f32 %v580, 0.1
  %v859 = vmul.f32 %v582, 0.1
  %v860 = vmul.f32 %v584, 0.1
  %v861 = vmul.f32 %v586, 0.1
  %v862 = vmul.f32 %v590, 0.1
  %v863 = vmul.f32 %v592, 0.1
  %v864 = vmul.f32 %v594, 0.1
  %v865 = vmul.f32 %v596, 0.1
  %v866 = vmul.f32 %v600, 0.1
  %v867 = vmul.f32 %v602, 0.1
  %v868 = vmul.f32 %v604, 0.1
  %v869 = vmul.f32 %v606, 0.1
  %v870 = vmul.f32 %v610, 0.1
  %v871 = vmul.f32 %v612, 0.1
  %v872 = vmul.f32 %v614, 0.1
  %v873 = vmul.f32 %v616, 0.1
  %v874 = vsel %vm618, %v300, %v746
  %v875 = vsel %vm619, %v302, %v747
  %v876 = vsel %vm620, %v304, %v748
  %v877 = vsel %vm621, %v306, %v749
  %v878 = vsel %vm622, %v310, %v750
  %v879 = vsel %vm623, %v312, %v751
  %v880 = vsel %vm624, %v314, %v752
  %v881 = vsel %vm625, %v316, %v753
  %v882 = vsel %vm626, %v320, %v754
  %v883 = vsel %vm627, %v322, %v755
  %v884 = vsel %vm628, %v324, %v756
  %v885 = vsel %vm629, %v326, %v757
  %v886 = vsel %vm630, %v330, %v758
  %v887 = vsel %vm631, %v332, %v759
  %v888 = vsel %vm632, %v334, %v760
  %v889 = vsel %vm633, %v336, %v761
  %v890 = vsel %vm634, %v340, %v762
  %v891 = vsel %vm635, %v342, %v763
  %v892 = vsel %vm636, %v344, %v764
  %v893 = vsel %vm637, %v346, %v765
  %v894 = vsel %vm638, %v350, %v766
  %v895 = vsel %vm639, %v352, %v767
  %v896 = vsel %vm640, %v354, %v768
  %v897 = vsel %vm641, %v356, %v769
  %v898 = vsel %vm642, %v360, %v770
  %v899 = vsel %vm643, %v362, %v771
  %v900 = vsel %vm644, %v364, %v772
  %v901 = vsel %vm645, %v366, %v773
  %v902 = vsel %vm646, %v370, %v774
  %v903 = vsel %vm647, %v372, %v775
  %v904 = vsel %vm648, %v374, %v776
  %v905 = vsel %vm649, %v376, %v777
  %v906 = vsel %vm650, %v380, %v778
  %v907 = vsel %vm651, %v382, %v779
  %v908 = vsel %vm652, %v384, %v780
  %v909 = vsel %vm653, %v386, %v781
  %v910 = vsel %vm654, %v390, %v782
  %v911 = vsel %vm655, %v392, %v783
  %v912 = vsel %vm656, %v394, %v784
  %v913 = vsel %vm657, %v396, %v785
  %v914 = vsel %vm658, %v400, %v786
  %v915 = vsel %vm659, %v402, %v787
  %v916 = vsel %vm660, %v404, %v788
  %v917 = vsel %vm661, %v406, %v789
  %v918 = vsel %vm662, %v410, %v790
  %v919 = vsel %vm663, %v412, %v791
  %v920 = vsel %vm664, %v414, %v792
  %v921 = vsel %vm665, %v416, %v793
  %v922 = vsel %vm666, %v420, %v794
  %v923 = vsel %vm667, %v422, %v795
  %v924 = vsel %vm668, %v424, %v796
  %v925 = vsel %vm669, %v426, %v797
  %v926 = vsel %vm670, %v430, %v798
  %v927 = vsel %vm671, %v432, %v799
  %v928 = vsel %vm672, %v434, %v800
  %v929 = vsel %vm673, %v436, %v801
  %v930 = vsel %vm674, %v440, %v802
  %v931 = vsel %vm675, %v442, %v803
  %v932 = vsel %vm676, %v444, %v804
  %v933 = vsel %vm677, %v446, %v805
  %v934 = vsel %vm678, %v450, %v806
  %v935 = vsel %vm679, %v452, %v807
  %v936 = vsel %vm680, %v454, %v808
  %v937 = vsel %vm681, %v456, %v809
  %v938 = vsel %vm682, %v460, %v810
  %v939 = vsel %vm683, %v462, %v811
  %v940 = vsel %vm684, %v464, %v812
  %v941 = vsel %vm685, %v466, %v813
  %v942 = vsel %vm686, %v470, %v814
  %v943 = vsel %vm687, %v472, %v815
  %v944 = vsel %vm688, %v474, %v816
  %v945 = vsel %vm689, %v476, %v817
  %v946 = vsel %vm690, %v480, %v818
  %v947 = vsel %vm691, %v482, %v819
  %v948 = vsel %vm692, %v484, %v820
  %v949 = vsel %vm693, %v486, %v821
  %v950 = vsel %vm694, %v490, %v822
  %v951 = vsel %vm695, %v492, %v823
  %v952 = vsel %vm696, %v494, %v824
  %v953 = vsel %vm697, %v496, %v825
  %v954 = vsel %vm698, %v500, %v826
  %v955 = vsel %vm699, %v502, %v827
  %v956 = vsel %vm700, %v504, %v828
  %v957 = vsel %vm701, %v506, %v829
  %v958 = vsel %vm702, %v510, %v830
  %v959 = vsel %vm703, %v512, %v831
  %v960 = vsel %vm704, %v514, %v832
  %v961 = vsel %vm705, %v516, %v833
  %v962 = vsel %vm706, %v520, %v834
  %v963 = vsel %vm707, %v522, %v835
  %v964 = vsel %vm708, %v524, %v836
  %v965 = vsel %vm709, %v526, %v837
  %v966 = vsel %vm710, %v530, %v838
  %v967 = vsel %vm711, %v532, %v839
  %v968 = vsel %vm712, %v534, %v840
  %v969 = vsel %vm713, %v536, %v841
  %v970 = vsel %vm714, %v540, %v842
  %v971 = vsel %vm715, %v542, %v843
  %v972 = vsel %vm716, %v544, %v844
  %v973 = vsel %vm717, %v546, %v845
  %v974 = vsel %vm718, %v550, %v846
  %v975 = vsel %vm719, %v552, %v847
  %v976 = vsel %vm720, %v554, %v848
  %v977 = vsel %vm721, %v556, %v849
  %v978 = vsel %vm722, %v560, %v850
  %v979 = vsel %vm723, %v562, %v851
  %v980 = vsel %vm724, %v564, %v852
  %v981 = vsel %vm725, %v566, %v853
  %v982 = vsel %vm726, %v570, %v854
  %v983 = vsel %vm727, %v572, %v855
  %v984 = vsel %vm728, %v574, %v856
  %v985 = vsel %vm729, %v576, %v857
  %v986 = vsel %vm730, %v580, %v858
  %v987 = vsel %vm731, %v582, %v859
  %v988 = vsel %vm732, %v584, %v860
  %v989 = vsel %vm733, %v586, %v861
  %v990 = vsel %vm734, %v590, %v862
  %v991 = vsel %vm735, %v592, %v863
  %v992 = vsel %vm736, %v594, %v864
  %v993 = vsel %vm737, %v596, %v865
  %v994 = vsel %vm738, %v600, %v866
  %v995 = vsel %vm739, %v602, %v867
  %v996 = vsel %vm740, %v604, %v868
  %v997 = vsel %vm741, %v606, %v869
  %v998 = vsel %vm742, %v610, %v870
  %v999 = vsel %vm743, %v612, %v871
  %v1000 = vsel %vm744, %v614, %v872
  %v1001 = vsel %vm745, %v616, %v873
  %v1002 = vpack.c.bf16 %v876, %v874
  %v1003 = vpack.c.bf16 %v877, %v875
  %v1004 = vpack.c.bf16 %v880, %v878
  %v1005 = vpack.c.bf16 %v881, %v879
  %v1006 = vpack.c.bf16 %v884, %v882
  %v1007 = vpack.c.bf16 %v885, %v883
  %v1008 = vpack.c.bf16 %v888, %v886
  %v1009 = vpack.c.bf16 %v889, %v887
  %v1010 = vpack.c.bf16 %v892, %v890
  %v1011 = vpack.c.bf16 %v893, %v891
  %v1012 = vpack.c.bf16 %v896, %v894
  %v1013 = vpack.c.bf16 %v897, %v895
  %v1014 = vpack.c.bf16 %v900, %v898
  %v1015 = vpack.c.bf16 %v901, %v899
  %v1016 = vpack.c.bf16 %v904, %v902
  %v1017 = vpack.c.bf16 %v905, %v903
  %v1018 = vpack.c.bf16 %v908, %v906
  %v1019 = vpack.c.bf16 %v909, %v907
  %v1020 = vpack.c.bf16 %v912, %v910
  %v1021 = vpack.c.bf16 %v913, %v911
  %v1022 = vpack.c.bf16 %v916, %v914
  %v1023 = vpack.c.bf16 %v917, %v915
  %v1024 = vpack.c.bf16 %v920, %v918
  %v1025 = vpack.c.bf16 %v921, %v919
  %v1026 = vpack.c.bf16 %v924, %v922
  %v1027 = vpack.c.bf16 %v925, %v923
  %v1028 = vpack.c.bf16 %v928, %v926
  %v1029 = vpack.c.bf16 %v929, %v927
  %v1030 = vpack.c.bf16 %v932, %v930
  %v1031 = vpack.c.bf16 %v933, %v931
  %v1032 = vpack.c.bf16 %v936, %v934
  %v1033 = vpack.c.bf16 %v937, %v935
  %v1034 = vpack.c.bf16 %v940, %v938
  %v1035 = vpack.c.bf16 %v941, %v939
  %v1036 = vpack.c.bf16 %v944, %v942
  %v1037 = vpack.c.bf16 %v945, %v943
  %v1038 = vpack.c.bf16 %v948, %v946
  %v1039 = vpack.c.bf16 %v949, %v947
  %v1040 = vpack.c.bf16 %v952, %v950
  %v1041 = vpack.c.bf16 %v953, %v951
  %v1042 = vpack.c.bf16 %v956, %v954
  %v1043 = vpack.c.bf16 %v957, %v955
  %v1044 = vpack.c.bf16 %v960, %v958
  %v1045 = vpack.c.bf16 %v961, %v959
  %v1046 = vpack.c.bf16 %v964, %v962
  %v1047 = vpack.c.bf16 %v965, %v963
  %v1048 = vpack.c.bf16 %v968, %v966
  %v1049 = vpack.c.bf16 %v969, %v967
  %v1050 = vpack.c.bf16 %v972, %v970
  %v1051 = vpack.c.bf16 %v973, %v971
  %v1052 = vpack.c.bf16 %v976, %v974
  %v1053 = vpack.c.bf16 %v977, %v975
  %v1054 = vpack.c.bf16 %v980, %v978
  %v1055 = vpack.c.bf16 %v981, %v979
  %v1056 = vpack.c.bf16 %v984, %v982
  %v1057 = vpack.c.bf16 %v985, %v983
  %v1058 = vpack.c.bf16 %v988, %v986
  %v1059 = vpack.c.bf16 %v989, %v987
  %v1060 = vpack.c.bf16 %v992, %v990
  %v1061 = vpack.c.bf16 %v993, %v991
  %v1062 = vpack.c.bf16 %v996, %v994
  %v1063 = vpack.c.bf16 %v997, %v995
  %v1064 = vpack.c.bf16 %v1000, %v998
  %v1065 = vpack.c.bf16 %v1001, %v999
  %v1066 = vld [vmem:[%s3] sm:$0xff]
  %v1067 = vld [vmem:[%s3 + $0x8] sm:$0xff]
  %v1068 = vld [vmem:[%s3 + $0x10] sm:$0xff]
  %v1069 = vld [vmem:[%s3 + $0x18] sm:$0xff]
  %v1070 = vld [vmem:[%s3 + $0x20] sm:$0xff]
  %v1071 = vld [vmem:[%s3 + $0x28] sm:$0xff]
  %v1072 = vld [vmem:[%s3 + $0x30] sm:$0xff]
  %v1073 = vld [vmem:[%s3 + $0x38] sm:$0xff]
  %v1074 = vld [vmem:[%s3 + $0x40] sm:$0xff]
  %v1075 = vld [vmem:[%s3 + $0x48] sm:$0xff]
  %v1076 = vld [vmem:[%s3 + $0x50] sm:$0xff]
  %v1077 = vld [vmem:[%s3 + $0x58] sm:$0xff]
  %v1078 = vld [vmem:[%s3 + $0x60] sm:$0xff]
  %v1079 = vld [vmem:[%s3 + $0x68] sm:$0xff]
  %v1080 = vld [vmem:[%s3 + $0x70] sm:$0xff]
  %v1081 = vld [vmem:[%s3 + $0x78] sm:$0xff]
  %v1082 = vld [vmem:[%s3 + $0x80] sm:$0xff]
  %v1083 = vld [vmem:[%s3 + $0x88] sm:$0xff]
  %v1084 = vld [vmem:[%s3 + $0x90] sm:$0xff]
  %v1085 = vld [vmem:[%s3 + $0x98] sm:$0xff]
  %v1086 = vld [vmem:[%s3 + $0xa0] sm:$0xff]
  %v1087 = vld [vmem:[%s3 + $0xa8] sm:$0xff]
  %v1088 = vld [vmem:[%s3 + $0xb0] sm:$0xff]
  %v1089 = vld [vmem:[%s3 + $0xb8] sm:$0xff]
  %v1090 = vld [vmem:[%s3 + $0xc0] sm:$0xff]
  %v1091 = vld [vmem:[%s3 + $0xc8] sm:$0xff]
  %v1092 = vld [vmem:[%s3 + $0xd0] sm:$0xff]
  %v1093 = vld [vmem:[%s3 + $0xd8] sm:$0xff]
  %v1094 = vld [vmem:[%s3 + $0xe0] sm:$0xff]
  %v1095 = vld [vmem:[%s3 + $0xe8] sm:$0xff]
  %v1096 = vld [vmem:[%s3 + $0xf0] sm:$0xff]
  %v1097 = vld [vmem:[%s3 + $0xf8] sm:$0xff]
  %v1098 = vld [vmem:[%s4] sm:$0x3]
  %v1100 = vlaneseq
  %v1101 = vshrl.u32 %v1100, 7
  %v1102 = vsub.s32 0, %v1101
  %v1103 = vrot.slane %v1098, %v1102
  %v1104 = vlaneseq
  %v1105 = vshrl.u32 %v1104, 7
  %v1106 = vsub.s32 1, %v1105
  %v1107 = vrot.slane %v1098, %v1106
  %v1142 = vunpack.c.l.b16 %v1066
  %v1143 = vunpack.c.h.b16 %v1066
  %v1144 = vunpack.c.l.b16 %v1067
  %v1145 = vunpack.c.h.b16 %v1067
  %v1146 = vunpack.c.l.b16 %v1068
  %v1147 = vunpack.c.h.b16 %v1068
  %v1148 = vunpack.c.l.b16 %v1069
  %v1149 = vunpack.c.h.b16 %v1069
  %v1150 = vunpack.c.l.b16 %v1070
  %v1151 = vunpack.c.h.b16 %v1070
  %v1152 = vunpack.c.l.b16 %v1071
  %v1153 = vunpack.c.h.b16 %v1071
  %v1154 = vunpack.c.l.b16 %v1072
  %v1155 = vunpack.c.h.b16 %v1072
  %v1156 = vunpack.c.l.b16 %v1073
  %v1157 = vunpack.c.h.b16 %v1073
  %v1158 = vunpack.c.l.b16 %v1074
  %v1159 = vunpack.c.h.b16 %v1074
  %v1160 = vunpack.c.l.b16 %v1075
  %v1161 = vunpack.c.h.b16 %v1075
  %v1162 = vunpack.c.l.b16 %v1076
  %v1163 = vunpack.c.h.b16 %v1076
  %v1164 = vunpack.c.l.b16 %v1077
  %v1165 = vunpack.c.h.b16 %v1077
  %v1166 = vunpack.c.l.b16 %v1078
  %v1167 = vunpack.c.h.b16 %v1078
  %v1168 = vunpack.c.l.b16 %v1079
  %v1169 = vunpack.c.h.b16 %v1079
  %v1170 = vunpack.c.l.b16 %v1080
  %v1171 = vunpack.c.h.b16 %v1080
  %v1172 = vunpack.c.l.b16 %v1081
  %v1173 = vunpack.c.h.b16 %v1081
  %v1174 = vunpack.c.l.b16 %v1082
  %v1175 = vunpack.c.h.b16 %v1082
  %v1176 = vunpack.c.l.b16 %v1083
  %v1177 = vunpack.c.h.b16 %v1083
  %v1178 = vunpack.c.l.b16 %v1084
  %v1179 = vunpack.c.h.b16 %v1084
  %v1180 = vunpack.c.l.b16 %v1085
  %v1181 = vunpack.c.h.b16 %v1085
  %v1182 = vunpack.c.l.b16 %v1086
  %v1183 = vunpack.c.h.b16 %v1086
  %v1184 = vunpack.c.l.b16 %v1087
  %v1185 = vunpack.c.h.b16 %v1087
  %v1186 = vunpack.c.l.b16 %v1088
  %v1187 = vunpack.c.h.b16 %v1088
  %v1188 = vunpack.c.l.b16 %v1089
  %v1189 = vunpack.c.h.b16 %v1089
  %v1190 = vunpack.c.l.b16 %v1090
  %v1191 = vunpack.c.h.b16 %v1090
  %v1192 = vunpack.c.l.b16 %v1091
  %v1193 = vunpack.c.h.b16 %v1091
  %v1194 = vunpack.c.l.b16 %v1092
  %v1195 = vunpack.c.h.b16 %v1092
  %v1196 = vunpack.c.l.b16 %v1093
  %v1197 = vunpack.c.h.b16 %v1093
  %v1198 = vunpack.c.l.b16 %v1094
  %v1199 = vunpack.c.h.b16 %v1094
  %v1200 = vunpack.c.l.b16 %v1095
  %v1201 = vunpack.c.h.b16 %v1095
  %v1202 = vunpack.c.l.b16 %v1096
  %v1203 = vunpack.c.h.b16 %v1096
  %v1204 = vunpack.c.l.b16 %v1097
  %v1205 = vunpack.c.h.b16 %v1097
  %v1206 = vpack.c.b16 %v1144, %v1142
  %v1207 = vpack.c.b16 %v1145, %v1143
  %v1208 = vpack.c.b16 %v1148, %v1146
  %v1209 = vpack.c.b16 %v1149, %v1147
  %v1210 = vpack.c.b16 %v1152, %v1150
  %v1211 = vpack.c.b16 %v1153, %v1151
  %v1212 = vpack.c.b16 %v1156, %v1154
  %v1213 = vpack.c.b16 %v1157, %v1155
  %v1214 = vpack.c.b16 %v1160, %v1158
  %v1215 = vpack.c.b16 %v1161, %v1159
  %v1216 = vpack.c.b16 %v1164, %v1162
  %v1217 = vpack.c.b16 %v1165, %v1163
  %v1218 = vpack.c.b16 %v1168, %v1166
  %v1219 = vpack.c.b16 %v1169, %v1167
  %v1220 = vpack.c.b16 %v1172, %v1170
  %v1221 = vpack.c.b16 %v1173, %v1171
  %v1222 = vpack.c.b16 %v1176, %v1174
  %v1223 = vpack.c.b16 %v1177, %v1175
  %v1224 = vpack.c.b16 %v1180, %v1178
  %v1225 = vpack.c.b16 %v1181, %v1179
  %v1226 = vpack.c.b16 %v1184, %v1182
  %v1227 = vpack.c.b16 %v1185, %v1183
  %v1228 = vpack.c.b16 %v1188, %v1186
  %v1229 = vpack.c.b16 %v1189, %v1187
  %v1230 = vpack.c.b16 %v1192, %v1190
  %v1231 = vpack.c.b16 %v1193, %v1191
  %v1232 = vpack.c.b16 %v1196, %v1194
  %v1233 = vpack.c.b16 %v1197, %v1195
  %v1234 = vpack.c.b16 %v1200, %v1198
  %v1235 = vpack.c.b16 %v1201, %v1199
  %v1236 = vpack.c.b16 %v1204, %v1202
  %v1237 = vpack.c.b16 %v1205, %v1203
  %1270 = vmatprep.subr.bf16.mxu0 %v1207
  %1271 = vmatpush1.bf16.msra.mxu0 %v1206
  %1272 = vmatprep.subr.bf16.mxu0 %v1209
  %1273 = vmatpush1.bf16.msra.mxu0 %v1208
  %1274 = vmatprep.subr.bf16.mxu0 %v1211
  %1275 = vmatpush1.bf16.msra.mxu0 %v1210
  %1276 = vmatprep.subr.bf16.mxu0 %v1213
  %1277 = vmatpush1.bf16.msra.mxu0 %v1212
  %1278 = vmatprep.subr.bf16.mxu0 %v1215
  %1279 = vmatpush1.bf16.msra.mxu0 %v1214
  %1280 = vmatprep.subr.bf16.mxu0 %v1217
  %1281 = vmatpush1.bf16.msra.mxu0 %v1216
  %1282 = vmatprep.subr.bf16.mxu0 %v1219
  %1283 = vmatpush1.bf16.msra.mxu0 %v1218
  %1284 = vmatprep.subr.bf16.mxu0 %v1221
  %1285 = vmatpush1.bf16.msra.mxu0 %v1220
  %1286 = vmatprep.subr.bf16.mxu0 %v1223
  %1287 = vmatpush1.bf16.msra.mxu0 %v1222
  %1288 = vmatprep.subr.bf16.mxu0 %v1225
  %1289 = vmatpush1.bf16.msra.mxu0 %v1224
  %1290 = vmatprep.subr.bf16.mxu0 %v1227
  %1291 = vmatpush1.bf16.msra.mxu0 %v1226
  %1292 = vmatprep.subr.bf16.mxu0 %v1229
  %1293 = vmatpush1.bf16.msra.mxu0 %v1228
  %1294 = vmatprep.subr.bf16.mxu0 %v1231
  %1295 = vmatpush1.bf16.msra.mxu0 %v1230
  %1296 = vmatprep.subr.bf16.mxu0 %v1233
  %1297 = vmatpush1.bf16.msra.mxu0 %v1232
  %1298 = vmatprep.subr.bf16.mxu0 %v1235
  %1299 = vmatpush1.bf16.msra.mxu0 %v1234
  %1300 = vmatprep.subr.bf16.mxu0 %v1237
  %1301 = vmatpush1.bf16.msra.mxu0 %v1236
  %1302 = vmatprep.mubr.bf16.mxu0 %v1003
  %1303 = vmatmul.mubr.bf16.gmra.mrb[0].mxu0 %v1002
  %v1304 = vpop.f32.mrb[0].mxu0
  %v1305 = vadd.f32 %v1103, %v1304
  %v1306 = vpop.f32.mrb[0].mxu0
  %v1307 = vadd.f32 %v1107, %v1306
  %v1308 = vpop.f32.mrb[0].mxu0
  %v1309 = vadd.f32 %v1103, %v1308
  %v1310 = vpop.f32.mrb[0].mxu0
  %v1311 = vadd.f32 %v1107, %v1310
  %1312 = vmatprep.mubr.bf16.mxu0 %v1005
  %1313 = vmatmul.mubr.bf16.gmra.mrb[0].mxu0 %v1004
  %v1314 = vpop.f32.mrb[0].mxu0
  %v1315 = vadd.f32 %v1103, %v1314
  %v1316 = vpop.f32.mrb[0].mxu0
  %v1317 = vadd.f32 %v1107, %v1316
  %v1318 = vpop.f32.mrb[0].mxu0
  %v1319 = vadd.f32 %v1103, %v1318
  %v1320 = vpop.f32.mrb[0].mxu0
  %v1321 = vadd.f32 %v1107, %v1320
  %1322 = vmatprep.mubr.bf16.mxu0 %v1007
  %1323 = vmatmul.mubr.bf16.gmra.mrb[0].mxu0 %v1006
  %v1324 = vpop.f32.mrb[0].mxu0
  %v1325 = vadd.f32 %v1103, %v1324
  %v1326 = vpop.f32.mrb[0].mxu0
  %v1327 = vadd.f32 %v1107, %v1326
  %v1328 = vpop.f32.mrb[0].mxu0
  %v1329 = vadd.f32 %v1103, %v1328
  %v1330 = vpop.f32.mrb[0].mxu0
  %v1331 = vadd.f32 %v1107, %v1330
  %1332 = vmatprep.mubr.bf16.mxu0 %v1009
  %1333 = vmatmul.mubr.bf16.gmra.mrb[0].mxu0 %v1008
  %v1334 = vpop.f32.mrb[0].mxu0
  %v1335 = vadd.f32 %v1103, %v1334
  %v1336 = vpop.f32.mrb[0].mxu0
  %v1337 = vadd.f32 %v1107, %v1336
  %v1338 = vpop.f32.mrb[0].mxu0
  %v1339 = vadd.f32 %v1103, %v1338
  %v1340 = vpop.f32.mrb[0].mxu0
  %v1341 = vadd.f32 %v1107, %v1340
  %1342 = vmatprep.mubr.bf16.mxu0 %v1011
  %1343 = vmatmul.mubr.bf16.gmra.mrb[0].mxu0 %v1010
  %v1344 = vpop.f32.mrb[0].mxu0
  %v1345 = vadd.f32 %v1103, %v1344
  %v1346 = vpop.f32.mrb[0].mxu0
  %v1347 = vadd.f32 %v1107, %v1346
  %v1348 = vpop.f32.mrb[0].mxu0
  %v1349 = vadd.f32 %v1103, %v1348
  %v1350 = vpop.f32.mrb[0].mxu0
  %v1351 = vadd.f32 %v1107, %v1350
  %1352 = vmatprep.mubr.bf16.mxu0 %v1013
  %1353 = vmatmul.mubr.bf16.gmra.mrb[0].mxu0 %v1012
  %v1354 = vpop.f32.mrb[0].mxu0
  %v1355 = vadd.f32 %v1103, %v1354
  %v1356 = vpop.f32.mrb[0].mxu0
  %v1357 = vadd.f32 %v1107, %v1356
  %v1358 = vpop.f32.mrb[0].mxu0
  %v1359 = vadd.f32 %v1103, %v1358
  %v1360 = vpop.f32.mrb[0].mxu0
  %v1361 = vadd.f32 %v1107, %v1360
  %1362 = vmatprep.mubr.bf16.mxu0 %v1015
  %1363 = vmatmul.mubr.bf16.gmra.mrb[0].mxu0 %v1014
  %v1364 = vpop.f32.mrb[0].mxu0
  %v1365 = vadd.f32 %v1103, %v1364
  %v1366 = vpop.f32.mrb[0].mxu0
  %v1367 = vadd.f32 %v1107, %v1366
  %v1368 = vpop.f32.mrb[0].mxu0
  %v1369 = vadd.f32 %v1103, %v1368
  %v1370 = vpop.f32.mrb[0].mxu0
  %v1371 = vadd.f32 %v1107, %v1370
  %1372 = vmatprep.mubr.bf16.mxu0 %v1017
  %1373 = vmatmul.mubr.bf16.gmra.mrb[0].mxu0 %v1016
  %v1374 = vpop.f32.mrb[0].mxu0
  %v1375 = vadd.f32 %v1103, %v1374
  %v1376 = vpop.f32.mrb[0].mxu0
  %v1377 = vadd.f32 %v1107, %v1376
  %v1378 = vpop.f32.mrb[0].mxu0
  %v1379 = vadd.f32 %v1103, %v1378
  %v1380 = vpop.f32.mrb[0].mxu0
  %v1381 = vadd.f32 %v1107, %v1380
  %1382 = vmatprep.mubr.bf16.mxu0 %v1019
  %1383 = vmatmul.mubr.bf16.gmra.mrb[0].mxu0 %v1018
  %v1384 = vpop.f32.mrb[0].mxu0
  %v1385 = vadd.f32 %v1103, %v1384
  %v1386 = vpop.f32.mrb[0].mxu0
  %v1387 = vadd.f32 %v1107, %v1386
  %v1388 = vpop.f32.mrb[0].mxu0
  %v1389 = vadd.f32 %v1103, %v1388
  %v1390 = vpop.f32.mrb[0].mxu0
  %v1391 = vadd.f32 %v1107, %v1390
  %1392 = vmatprep.mubr.bf16.mxu0 %v1021
  %1393 = vmatmul.mubr.bf16.gmra.mrb[0].mxu0 %v1020
  %v1394 = vpop.f32.mrb[0].mxu0
  %v1395 = vadd.f32 %v1103, %v1394
  %v1396 = vpop.f32.mrb[0].mxu0
  %v1397 = vadd.f32 %v1107, %v1396
  %v1398 = vpop.f32.mrb[0].mxu0
  %v1399 = vadd.f32 %v1103, %v1398
  %v1400 = vpop.f32.mrb[0].mxu0
  %v1401 = vadd.f32 %v1107, %v1400
  %1402 = vmatprep.mubr.bf16.mxu0 %v1023
  %1403 = vmatmul.mubr.bf16.gmra.mrb[0].mxu0 %v1022
  %v1404 = vpop.f32.mrb[0].mxu0
  %v1405 = vadd.f32 %v1103, %v1404
  %v1406 = vpop.f32.mrb[0].mxu0
  %v1407 = vadd.f32 %v1107, %v1406
  %v1408 = vpop.f32.mrb[0].mxu0
  %v1409 = vadd.f32 %v1103, %v1408
  %v1410 = vpop.f32.mrb[0].mxu0
  %v1411 = vadd.f32 %v1107, %v1410
  %1412 = vmatprep.mubr.bf16.mxu0 %v1025
  %1413 = vmatmul.mubr.bf16.gmra.mrb[0].mxu0 %v1024
  %v1414 = vpop.f32.mrb[0].mxu0
  %v1415 = vadd.f32 %v1103, %v1414
  %v1416 = vpop.f32.mrb[0].mxu0
  %v1417 = vadd.f32 %v1107, %v1416
  %v1418 = vpop.f32.mrb[0].mxu0
  %v1419 = vadd.f32 %v1103, %v1418
  %v1420 = vpop.f32.mrb[0].mxu0
  %v1421 = vadd.f32 %v1107, %v1420
  %1422 = vmatprep.mubr.bf16.mxu0 %v1027
  %1423 = vmatmul.mubr.bf16.gmra.mrb[0].mxu0 %v1026
  %v1424 = vpop.f32.mrb[0].mxu0
  %v1425 = vadd.f32 %v1103, %v1424
  %v1426 = vpop.f32.mrb[0].mxu0
  %v1427 = vadd.f32 %v1107, %v1426
  %v1428 = vpop.f32.mrb[0].mxu0
  %v1429 = vadd.f32 %v1103, %v1428
  %v1430 = vpop.f32.mrb[0].mxu0
  %v1431 = vadd.f32 %v1107, %v1430
  %1432 = vmatprep.mubr.bf16.mxu0 %v1029
  %1433 = vmatmul.mubr.bf16.gmra.mrb[0].mxu0 %v1028
  %v1434 = vpop.f32.mrb[0].mxu0
  %v1435 = vadd.f32 %v1103, %v1434
  %v1436 = vpop.f32.mrb[0].mxu0
  %v1437 = vadd.f32 %v1107, %v1436
  %v1438 = vpop.f32.mrb[0].mxu0
  %v1439 = vadd.f32 %v1103, %v1438
  %v1440 = vpop.f32.mrb[0].mxu0
  %v1441 = vadd.f32 %v1107, %v1440
  %1442 = vmatprep.mubr.bf16.mxu0 %v1031
  %1443 = vmatmul.mubr.bf16.gmra.mrb[0].mxu0 %v1030
  %v1444 = vpop.f32.mrb[0].mxu0
  %v1445 = vadd.f32 %v1103, %v1444
  %v1446 = vpop.f32.mrb[0].mxu0
  %v1447 = vadd.f32 %v1107, %v1446
  %v1448 = vpop.f32.mrb[0].mxu0
  %v1449 = vadd.f32 %v1103, %v1448
  %v1450 = vpop.f32.mrb[0].mxu0
  %v1451 = vadd.f32 %v1107, %v1450
  %1452 = vmatprep.mubr.bf16.mxu0 %v1033
  %1453 = vmatmul.mubr.bf16.gmra.mrb[0].mxu0 %v1032
  %v1454 = vpop.f32.mrb[0].mxu0
  %v1455 = vadd.f32 %v1103, %v1454
  %v1456 = vpop.f32.mrb[0].mxu0
  %v1457 = vadd.f32 %v1107, %v1456
  %v1458 = vpop.f32.mrb[0].mxu0
  %v1459 = vadd.f32 %v1103, %v1458
  %v1460 = vpop.f32.mrb[0].mxu0
  %v1461 = vadd.f32 %v1107, %v1460
  %1462 = vmatprep.mubr.bf16.mxu0 %v1035
  %1463 = vmatmul.mubr.bf16.gmra.mrb[0].mxu0 %v1034
  %v1464 = vpop.f32.mrb[0].mxu0
  %v1465 = vadd.f32 %v1103, %v1464
  %v1466 = vpop.f32.mrb[0].mxu0
  %v1467 = vadd.f32 %v1107, %v1466
  %v1468 = vpop.f32.mrb[0].mxu0
  %v1469 = vadd.f32 %v1103, %v1468
  %v1470 = vpop.f32.mrb[0].mxu0
  %v1471 = vadd.f32 %v1107, %v1470
  %1472 = vmatprep.mubr.bf16.mxu0 %v1037
  %1473 = vmatmul.mubr.bf16.gmra.mrb[0].mxu0 %v1036
  %v1474 = vpop.f32.mrb[0].mxu0
  %v1475 = vadd.f32 %v1103, %v1474
  %v1476 = vpop.f32.mrb[0].mxu0
  %v1477 = vadd.f32 %v1107, %v1476
  %v1478 = vpop.f32.mrb[0].mxu0
  %v1479 = vadd.f32 %v1103, %v1478
  %v1480 = vpop.f32.mrb[0].mxu0
  %v1481 = vadd.f32 %v1107, %v1480
  %1482 = vmatprep.mubr.bf16.mxu0 %v1039
  %1483 = vmatmul.mubr.bf16.gmra.mrb[0].mxu0 %v1038
  %v1484 = vpop.f32.mrb[0].mxu0
  %v1485 = vadd.f32 %v1103, %v1484
  %v1486 = vpop.f32.mrb[0].mxu0
  %v1487 = vadd.f32 %v1107, %v1486
  %v1488 = vpop.f32.mrb[0].mxu0
  %v1489 = vadd.f32 %v1103, %v1488
  %v1490 = vpop.f32.mrb[0].mxu0
  %v1491 = vadd.f32 %v1107, %v1490
  %1492 = vmatprep.mubr.bf16.mxu0 %v1041
  %1493 = vmatmul.mubr.bf16.gmra.mrb[0].mxu0 %v1040
  %v1494 = vpop.f32.mrb[0].mxu0
  %v1495 = vadd.f32 %v1103, %v1494
  %v1496 = vpop.f32.mrb[0].mxu0
  %v1497 = vadd.f32 %v1107, %v1496
  %v1498 = vpop.f32.mrb[0].mxu0
  %v1499 = vadd.f32 %v1103, %v1498
  %v1500 = vpop.f32.mrb[0].mxu0
  %v1501 = vadd.f32 %v1107, %v1500
  %1502 = vmatprep.mubr.bf16.mxu0 %v1043
  %1503 = vmatmul.mubr.bf16.gmra.mrb[0].mxu0 %v1042
  %v1504 = vpop.f32.mrb[0].mxu0
  %v1505 = vadd.f32 %v1103, %v1504
  %v1506 = vpop.f32.mrb[0].mxu0
  %v1507 = vadd.f32 %v1107, %v1506
  %v1508 = vpop.f32.mrb[0].mxu0
  %v1509 = vadd.f32 %v1103, %v1508
  %v1510 = vpop.f32.mrb[0].mxu0
  %v1511 = vadd.f32 %v1107, %v1510
  %1512 = vmatprep.mubr.bf16.mxu0 %v1045
  %1513 = vmatmul.mubr.bf16.gmra.mrb[0].mxu0 %v1044
  %v1514 = vpop.f32.mrb[0].mxu0
  %v1515 = vadd.f32 %v1103, %v1514
  %v1516 = vpop.f32.mrb[0].mxu0
  %v1517 = vadd.f32 %v1107, %v1516
  %v1518 = vpop.f32.mrb[0].mxu0
  %v1519 = vadd.f32 %v1103, %v1518
  %v1520 = vpop.f32.mrb[0].mxu0
  %v1521 = vadd.f32 %v1107, %v1520
  %1522 = vmatprep.mubr.bf16.mxu0 %v1047
  %1523 = vmatmul.mubr.bf16.gmra.mrb[0].mxu0 %v1046
  %v1524 = vpop.f32.mrb[0].mxu0
  %v1525 = vadd.f32 %v1103, %v1524
  %v1526 = vpop.f32.mrb[0].mxu0
  %v1527 = vadd.f32 %v1107, %v1526
  %v1528 = vpop.f32.mrb[0].mxu0
  %v1529 = vadd.f32 %v1103, %v1528
  %v1530 = vpop.f32.mrb[0].mxu0
  %v1531 = vadd.f32 %v1107, %v1530
  %1532 = vmatprep.mubr.bf16.mxu0 %v1049
  %1533 = vmatmul.mubr.bf16.gmra.mrb[0].mxu0 %v1048
  %v1534 = vpop.f32.mrb[0].mxu0
  %v1535 = vadd.f32 %v1103, %v1534
  %v1536 = vpop.f32.mrb[0].mxu0
  %v1537 = vadd.f32 %v1107, %v1536
  %v1538 = vpop.f32.mrb[0].mxu0
  %v1539 = vadd.f32 %v1103, %v1538
  %v1540 = vpop.f32.mrb[0].mxu0
  %v1541 = vadd.f32 %v1107, %v1540
  %1542 = vmatprep.mubr.bf16.mxu0 %v1051
  %1543 = vmatmul.mubr.bf16.gmra.mrb[0].mxu0 %v1050
  %v1544 = vpop.f32.mrb[0].mxu0
  %v1545 = vadd.f32 %v1103, %v1544
  %v1546 = vpop.f32.mrb[0].mxu0
  %v1547 = vadd.f32 %v1107, %v1546
  %v1548 = vpop.f32.mrb[0].mxu0
  %v1549 = vadd.f32 %v1103, %v1548
  %v1550 = vpop.f32.mrb[0].mxu0
  %v1551 = vadd.f32 %v1107, %v1550
  %1552 = vmatprep.mubr.bf16.mxu0 %v1053
  %1553 = vmatmul.mubr.bf16.gmra.mrb[0].mxu0 %v1052
  %v1554 = vpop.f32.mrb[0].mxu0
  %v1555 = vadd.f32 %v1103, %v1554
  %v1556 = vpop.f32.mrb[0].mxu0
  %v1557 = vadd.f32 %v1107, %v1556
  %v1558 = vpop.f32.mrb[0].mxu0
  %v1559 = vadd.f32 %v1103, %v1558
  %v1560 = vpop.f32.mrb[0].mxu0
  %v1561 = vadd.f32 %v1107, %v1560
  %1562 = vmatprep.mubr.bf16.mxu0 %v1055
  %1563 = vmatmul.mubr.bf16.gmra.mrb[0].mxu0 %v1054
  %v1564 = vpop.f32.mrb[0].mxu0
  %v1565 = vadd.f32 %v1103, %v1564
  %v1566 = vpop.f32.mrb[0].mxu0
  %v1567 = vadd.f32 %v1107, %v1566
  %v1568 = vpop.f32.mrb[0].mxu0
  %v1569 = vadd.f32 %v1103, %v1568
  %v1570 = vpop.f32.mrb[0].mxu0
  %v1571 = vadd.f32 %v1107, %v1570
  %1572 = vmatprep.mubr.bf16.mxu0 %v1057
  %1573 = vmatmul.mubr.bf16.gmra.mrb[0].mxu0 %v1056
  %v1574 = vpop.f32.mrb[0].mxu0
  %v1575 = vadd.f32 %v1103, %v1574
  %v1576 = vpop.f32.mrb[0].mxu0
  %v1577 = vadd.f32 %v1107, %v1576
  %v1578 = vpop.f32.mrb[0].mxu0
  %v1579 = vadd.f32 %v1103, %v1578
  %v1580 = vpop.f32.mrb[0].mxu0
  %v1581 = vadd.f32 %v1107, %v1580
  %1582 = vmatprep.mubr.bf16.mxu0 %v1059
  %1583 = vmatmul.mubr.bf16.gmra.mrb[0].mxu0 %v1058
  %v1584 = vpop.f32.mrb[0].mxu0
  %v1585 = vadd.f32 %v1103, %v1584
  %v1586 = vpop.f32.mrb[0].mxu0
  %v1587 = vadd.f32 %v1107, %v1586
  %v1588 = vpop.f32.mrb[0].mxu0
  %v1589 = vadd.f32 %v1103, %v1588
  %v1590 = vpop.f32.mrb[0].mxu0
  %v1591 = vadd.f32 %v1107, %v1590
  %1592 = vmatprep.mubr.bf16.mxu0 %v1061
  %1593 = vmatmul.mubr.bf16.gmra.mrb[0].mxu0 %v1060
  %v1594 = vpop.f32.mrb[0].mxu0
  %v1595 = vadd.f32 %v1103, %v1594
  %v1596 = vpop.f32.mrb[0].mxu0
  %v1597 = vadd.f32 %v1107, %v1596
  %v1598 = vpop.f32.mrb[0].mxu0
  %v1599 = vadd.f32 %v1103, %v1598
  %v1600 = vpop.f32.mrb[0].mxu0
  %v1601 = vadd.f32 %v1107, %v1600
  %1602 = vmatprep.mubr.bf16.mxu0 %v1063
  %1603 = vmatmul.mubr.bf16.gmra.mrb[0].mxu0 %v1062
  %v1604 = vpop.f32.mrb[0].mxu0
  %v1605 = vadd.f32 %v1103, %v1604
  %v1606 = vpop.f32.mrb[0].mxu0
  %v1607 = vadd.f32 %v1107, %v1606
  %v1608 = vpop.f32.mrb[0].mxu0
  %v1609 = vadd.f32 %v1103, %v1608
  %v1610 = vpop.f32.mrb[0].mxu0
  %v1611 = vadd.f32 %v1107, %v1610
  %1612 = vmatprep.mubr.bf16.mxu0 %v1065
  %1613 = vmatmul.mubr.bf16.gmra.mrb[0].mxu0 %v1064
  %v1614 = vpop.f32.mrb[0].mxu0
  %v1615 = vadd.f32 %v1103, %v1614
  %v1616 = vpop.f32.mrb[0].mxu0
  %v1617 = vadd.f32 %v1107, %v1616
  %v1618 = vpop.f32.mrb[0].mxu0
  %v1619 = vadd.f32 %v1103, %v1618
  %v1620 = vpop.f32.mrb[0].mxu0
  %v1621 = vadd.f32 %v1107, %v1620
  %1622 = vdwg.mxu0
  %vm1623 = vcmp.ge.f32.partialorder %v1305, 0.0
  %vm1624 = vcmp.ge.f32.partialorder %v1307, 0.0
  %vm1625 = vcmp.ge.f32.partialorder %v1309, 0.0
  %vm1626 = vcmp.ge.f32.partialorder %v1311, 0.0
  %vm1627 = vcmp.ge.f32.partialorder %v1315, 0.0
  %vm1628 = vcmp.ge.f32.partialorder %v1317, 0.0
  %vm1629 = vcmp.ge.f32.partialorder %v1319, 0.0
  %vm1630 = vcmp.ge.f32.partialorder %v1321, 0.0
  %vm1631 = vcmp.ge.f32.partialorder %v1325, 0.0
  %vm1632 = vcmp.ge.f32.partialorder %v1327, 0.0
  %vm1633 = vcmp.ge.f32.partialorder %v1329, 0.0
  %vm1634 = vcmp.ge.f32.partialorder %v1331, 0.0
  %vm1635 = vcmp.ge.f32.partialorder %v1335, 0.0
  %vm1636 = vcmp.ge.f32.partialorder %v1337, 0.0
  %vm1637 = vcmp.ge.f32.partialorder %v1339, 0.0
  %vm1638 = vcmp.ge.f32.partialorder %v1341, 0.0
  %vm1639 = vcmp.ge.f32.partialorder %v1345, 0.0
  %vm1640 = vcmp.ge.f32.partialorder %v1347, 0.0
  %vm1641 = vcmp.ge.f32.partialorder %v1349, 0.0
  %vm1642 = vcmp.ge.f32.partialorder %v1351, 0.0
  %vm1643 = vcmp.ge.f32.partialorder %v1355, 0.0
  %vm1644 = vcmp.ge.f32.partialorder %v1357, 0.0
  %vm1645 = vcmp.ge.f32.partialorder %v1359, 0.0
  %vm1646 = vcmp.ge.f32.partialorder %v1361, 0.0
  %vm1647 = vcmp.ge.f32.partialorder %v1365, 0.0
  %vm1648 = vcmp.ge.f32.partialorder %v1367, 0.0
  %vm1649 = vcmp.ge.f32.partialorder %v1369, 0.0
  %vm1650 = vcmp.ge.f32.partialorder %v1371, 0.0
  %vm1651 = vcmp.ge.f32.partialorder %v1375, 0.0
  %vm1652 = vcmp.ge.f32.partialorder %v1377, 0.0
  %vm1653 = vcmp.ge.f32.partialorder %v1379, 0.0
  %vm1654 = vcmp.ge.f32.partialorder %v1381, 0.0
  %vm1655 = vcmp.ge.f32.partialorder %v1385, 0.0
  %vm1656 = vcmp.ge.f32.partialorder %v1387, 0.0
  %vm1657 = vcmp.ge.f32.partialorder %v1389, 0.0
  %vm1658 = vcmp.ge.f32.partialorder %v1391, 0.0
  %vm1659 = vcmp.ge.f32.partialorder %v1395, 0.0
  %vm1660 = vcmp.ge.f32.partialorder %v1397, 0.0
  %vm1661 = vcmp.ge.f32.partialorder %v1399, 0.0
  %vm1662 = vcmp.ge.f32.partialorder %v1401, 0.0
  %vm1663 = vcmp.ge.f32.partialorder %v1405, 0.0
  %vm1664 = vcmp.ge.f32.partialorder %v1407, 0.0
  %vm1665 = vcmp.ge.f32.partialorder %v1409, 0.0
  %vm1666 = vcmp.ge.f32.partialorder %v1411, 0.0
  %vm1667 = vcmp.ge.f32.partialorder %v1415, 0.0
  %vm1668 = vcmp.ge.f32.partialorder %v1417, 0.0
  %vm1669 = vcmp.ge.f32.partialorder %v1419, 0.0
  %vm1670 = vcmp.ge.f32.partialorder %v1421, 0.0
  %vm1671 = vcmp.ge.f32.partialorder %v1425, 0.0
  %vm1672 = vcmp.ge.f32.partialorder %v1427, 0.0
  %vm1673 = vcmp.ge.f32.partialorder %v1429, 0.0
  %vm1674 = vcmp.ge.f32.partialorder %v1431, 0.0
  %vm1675 = vcmp.ge.f32.partialorder %v1435, 0.0
  %vm1676 = vcmp.ge.f32.partialorder %v1437, 0.0
  %vm1677 = vcmp.ge.f32.partialorder %v1439, 0.0
  %vm1678 = vcmp.ge.f32.partialorder %v1441, 0.0
  %vm1679 = vcmp.ge.f32.partialorder %v1445, 0.0
  %vm1680 = vcmp.ge.f32.partialorder %v1447, 0.0
  %vm1681 = vcmp.ge.f32.partialorder %v1449, 0.0
  %vm1682 = vcmp.ge.f32.partialorder %v1451, 0.0
  %vm1683 = vcmp.ge.f32.partialorder %v1455, 0.0
  %vm1684 = vcmp.ge.f32.partialorder %v1457, 0.0
  %vm1685 = vcmp.ge.f32.partialorder %v1459, 0.0
  %vm1686 = vcmp.ge.f32.partialorder %v1461, 0.0
  %vm1687 = vcmp.ge.f32.partialorder %v1465, 0.0
  %vm1688 = vcmp.ge.f32.partialorder %v1467, 0.0
  %vm1689 = vcmp.ge.f32.partialorder %v1469, 0.0
  %vm1690 = vcmp.ge.f32.partialorder %v1471, 0.0
  %vm1691 = vcmp.ge.f32.partialorder %v1475, 0.0
  %vm1692 = vcmp.ge.f32.partialorder %v1477, 0.0
  %vm1693 = vcmp.ge.f32.partialorder %v1479, 0.0
  %vm1694 = vcmp.ge.f32.partialorder %v1481, 0.0
  %vm1695 = vcmp.ge.f32.partialorder %v1485, 0.0
  %vm1696 = vcmp.ge.f32.partialorder %v1487, 0.0
  %vm1697 = vcmp.ge.f32.partialorder %v1489, 0.0
  %vm1698 = vcmp.ge.f32.partialorder %v1491, 0.0
  %vm1699 = vcmp.ge.f32.partialorder %v1495, 0.0
  %vm1700 = vcmp.ge.f32.partialorder %v1497, 0.0
  %vm1701 = vcmp.ge.f32.partialorder %v1499, 0.0
  %vm1702 = vcmp.ge.f32.partialorder %v1501, 0.0
  %vm1703 = vcmp.ge.f32.partialorder %v1505, 0.0
  %vm1704 = vcmp.ge.f32.partialorder %v1507, 0.0
  %vm1705 = vcmp.ge.f32.partialorder %v1509, 0.0
  %vm1706 = vcmp.ge.f32.partialorder %v1511, 0.0
  %vm1707 = vcmp.ge.f32.partialorder %v1515, 0.0
  %vm1708 = vcmp.ge.f32.partialorder %v1517, 0.0
  %vm1709 = vcmp.ge.f32.partialorder %v1519, 0.0
  %vm1710 = vcmp.ge.f32.partialorder %v1521, 0.0
  %vm1711 = vcmp.ge.f32.partialorder %v1525, 0.0
  %vm1712 = vcmp.ge.f32.partialorder %v1527, 0.0
  %vm1713 = vcmp.ge.f32.partialorder %v1529, 0.0
  %vm1714 = vcmp.ge.f32.partialorder %v1531, 0.0
  %vm1715 = vcmp.ge.f32.partialorder %v1535, 0.0
  %vm1716 = vcmp.ge.f32.partialorder %v1537, 0.0
  %vm1717 = vcmp.ge.f32.partialorder %v1539, 0.0
  %vm1718 = vcmp.ge.f32.partialorder %v1541, 0.0
  %vm1719 = vcmp.ge.f32.partialorder %v1545, 0.0
  %vm1720 = vcmp.ge.f32.partialorder %v1547, 0.0
  %vm1721 = vcmp.ge.f32.partialorder %v1549, 0.0
  %vm1722 = vcmp.ge.f32.partialorder %v1551, 0.0
  %vm1723 = vcmp.ge.f32.partialorder %v1555, 0.0
  %vm1724 = vcmp.ge.f32.partialorder %v1557, 0.0
  %vm1725 = vcmp.ge.f32.partialorder %v1559, 0.0
  %vm1726 = vcmp.ge.f32.partialorder %v1561, 0.0
  %vm1727 = vcmp.ge.f32.partialorder %v1565, 0.0
  %vm1728 = vcmp.ge.f32.partialorder %v1567, 0.0
  %vm1729 = vcmp.ge.f32.partialorder %v1569, 0.0
  %vm1730 = vcmp.ge.f32.partialorder %v1571, 0.0
  %vm1731 = vcmp.ge.f32.partialorder %v1575, 0.0
  %vm1732 = vcmp.ge.f32.partialorder %v1577, 0.0
  %vm1733 = vcmp.ge.f32.partialorder %v1579, 0.0
  %vm1734 = vcmp.ge.f32.partialorder %v1581, 0.0
  %vm1735 = vcmp.ge.f32.partialorder %v1585, 0.0
  %vm1736 = vcmp.ge.f32.partialorder %v1587, 0.0
  %vm1737 = vcmp.ge.f32.partialorder %v1589, 0.0
  %vm1738 = vcmp.ge.f32.partialorder %v1591, 0.0
  %vm1739 = vcmp.ge.f32.partialorder %v1595, 0.0
  %vm1740 = vcmp.ge.f32.partialorder %v1597, 0.0
  %vm1741 = vcmp.ge.f32.partialorder %v1599, 0.0
  %vm1742 = vcmp.ge.f32.partialorder %v1601, 0.0
  %vm1743 = vcmp.ge.f32.partialorder %v1605, 0.0
  %vm1744 = vcmp.ge.f32.partialorder %v1607, 0.0
  %vm1745 = vcmp.ge.f32.partialorder %v1609, 0.0
  %vm1746 = vcmp.ge.f32.partialorder %v1611, 0.0
  %vm1747 = vcmp.ge.f32.partialorder %v1615, 0.0
  %vm1748 = vcmp.ge.f32.partialorder %v1617, 0.0
  %vm1749 = vcmp.ge.f32.partialorder %v1619, 0.0
  %vm1750 = vcmp.ge.f32.partialorder %v1621, 0.0
  %v1751 = vmul.f32 %v1305, 0.1
  %v1752 = vmul.f32 %v1307, 0.1
  %v1753 = vmul.f32 %v1309, 0.1
  %v1754 = vmul.f32 %v1311, 0.1
  %v1755 = vmul.f32 %v1315, 0.1
  %v1756 = vmul.f32 %v1317, 0.1
  %v1757 = vmul.f32 %v1319, 0.1
  %v1758 = vmul.f32 %v1321, 0.1
  %v1759 = vmul.f32 %v1325, 0.1
  %v1760 = vmul.f32 %v1327, 0.1
  %v1761 = vmul.f32 %v1329, 0.1
  %v1762 = vmul.f32 %v1331, 0.1
  %v1763 = vmul.f32 %v1335, 0.1
  %v1764 = vmul.f32 %v1337, 0.1
  %v1765 = vmul.f32 %v1339, 0.1
  %v1766 = vmul.f32 %v1341, 0.1
  %v1767 = vmul.f32 %v1345, 0.1
  %v1768 = vmul.f32 %v1347, 0.1
  %v1769 = vmul.f32 %v1349, 0.1
  %v1770 = vmul.f32 %v1351, 0.1
  %v1771 = vmul.f32 %v1355, 0.1
  %v1772 = vmul.f32 %v1357, 0.1
  %v1773 = vmul.f32 %v1359, 0.1
  %v1774 = vmul.f32 %v1361, 0.1
  %v1775 = vmul.f32 %v1365, 0.1
  %v1776 = vmul.f32 %v1367, 0.1
  %v1777 = vmul.f32 %v1369, 0.1
  %v1778 = vmul.f32 %v1371, 0.1
  %v1779 = vmul.f32 %v1375, 0.1
  %v1780 = vmul.f32 %v1377, 0.1
  %v1781 = vmul.f32 %v1379, 0.1
  %v1782 = vmul.f32 %v1381, 0.1
  %v1783 = vmul.f32 %v1385, 0.1
  %v1784 = vmul.f32 %v1387, 0.1
  %v1785 = vmul.f32 %v1389, 0.1
  %v1786 = vmul.f32 %v1391, 0.1
  %v1787 = vmul.f32 %v1395, 0.1
  %v1788 = vmul.f32 %v1397, 0.1
  %v1789 = vmul.f32 %v1399, 0.1
  %v1790 = vmul.f32 %v1401, 0.1
  %v1791 = vmul.f32 %v1405, 0.1
  %v1792 = vmul.f32 %v1407, 0.1
  %v1793 = vmul.f32 %v1409, 0.1
  %v1794 = vmul.f32 %v1411, 0.1
  %v1795 = vmul.f32 %v1415, 0.1
  %v1796 = vmul.f32 %v1417, 0.1
  %v1797 = vmul.f32 %v1419, 0.1
  %v1798 = vmul.f32 %v1421, 0.1
  %v1799 = vmul.f32 %v1425, 0.1
  %v1800 = vmul.f32 %v1427, 0.1
  %v1801 = vmul.f32 %v1429, 0.1
  %v1802 = vmul.f32 %v1431, 0.1
  %v1803 = vmul.f32 %v1435, 0.1
  %v1804 = vmul.f32 %v1437, 0.1
  %v1805 = vmul.f32 %v1439, 0.1
  %v1806 = vmul.f32 %v1441, 0.1
  %v1807 = vmul.f32 %v1445, 0.1
  %v1808 = vmul.f32 %v1447, 0.1
  %v1809 = vmul.f32 %v1449, 0.1
  %v1810 = vmul.f32 %v1451, 0.1
  %v1811 = vmul.f32 %v1455, 0.1
  %v1812 = vmul.f32 %v1457, 0.1
  %v1813 = vmul.f32 %v1459, 0.1
  %v1814 = vmul.f32 %v1461, 0.1
  %v1815 = vmul.f32 %v1465, 0.1
  %v1816 = vmul.f32 %v1467, 0.1
  %v1817 = vmul.f32 %v1469, 0.1
  %v1818 = vmul.f32 %v1471, 0.1
  %v1819 = vmul.f32 %v1475, 0.1
  %v1820 = vmul.f32 %v1477, 0.1
  %v1821 = vmul.f32 %v1479, 0.1
  %v1822 = vmul.f32 %v1481, 0.1
  %v1823 = vmul.f32 %v1485, 0.1
  %v1824 = vmul.f32 %v1487, 0.1
  %v1825 = vmul.f32 %v1489, 0.1
  %v1826 = vmul.f32 %v1491, 0.1
  %v1827 = vmul.f32 %v1495, 0.1
  %v1828 = vmul.f32 %v1497, 0.1
  %v1829 = vmul.f32 %v1499, 0.1
  %v1830 = vmul.f32 %v1501, 0.1
  %v1831 = vmul.f32 %v1505, 0.1
  %v1832 = vmul.f32 %v1507, 0.1
  %v1833 = vmul.f32 %v1509, 0.1
  %v1834 = vmul.f32 %v1511, 0.1
  %v1835 = vmul.f32 %v1515, 0.1
  %v1836 = vmul.f32 %v1517, 0.1
  %v1837 = vmul.f32 %v1519, 0.1
  %v1838 = vmul.f32 %v1521, 0.1
  %v1839 = vmul.f32 %v1525, 0.1
  %v1840 = vmul.f32 %v1527, 0.1
  %v1841 = vmul.f32 %v1529, 0.1
  %v1842 = vmul.f32 %v1531, 0.1
  %v1843 = vmul.f32 %v1535, 0.1
  %v1844 = vmul.f32 %v1537, 0.1
  %v1845 = vmul.f32 %v1539, 0.1
  %v1846 = vmul.f32 %v1541, 0.1
  %v1847 = vmul.f32 %v1545, 0.1
  %v1848 = vmul.f32 %v1547, 0.1
  %v1849 = vmul.f32 %v1549, 0.1
  %v1850 = vmul.f32 %v1551, 0.1
  %v1851 = vmul.f32 %v1555, 0.1
  %v1852 = vmul.f32 %v1557, 0.1
  %v1853 = vmul.f32 %v1559, 0.1
  %v1854 = vmul.f32 %v1561, 0.1
  %v1855 = vmul.f32 %v1565, 0.1
  %v1856 = vmul.f32 %v1567, 0.1
  %v1857 = vmul.f32 %v1569, 0.1
  %v1858 = vmul.f32 %v1571, 0.1
  %v1859 = vmul.f32 %v1575, 0.1
  %v1860 = vmul.f32 %v1577, 0.1
  %v1861 = vmul.f32 %v1579, 0.1
  %v1862 = vmul.f32 %v1581, 0.1
  %v1863 = vmul.f32 %v1585, 0.1
  %v1864 = vmul.f32 %v1587, 0.1
  %v1865 = vmul.f32 %v1589, 0.1
  %v1866 = vmul.f32 %v1591, 0.1
  %v1867 = vmul.f32 %v1595, 0.1
  %v1868 = vmul.f32 %v1597, 0.1
  %v1869 = vmul.f32 %v1599, 0.1
  %v1870 = vmul.f32 %v1601, 0.1
  %v1871 = vmul.f32 %v1605, 0.1
  %v1872 = vmul.f32 %v1607, 0.1
  %v1873 = vmul.f32 %v1609, 0.1
  %v1874 = vmul.f32 %v1611, 0.1
  %v1875 = vmul.f32 %v1615, 0.1
  %v1876 = vmul.f32 %v1617, 0.1
  %v1877 = vmul.f32 %v1619, 0.1
  %v1878 = vmul.f32 %v1621, 0.1
  %v1879 = vsel %vm1623, %v1305, %v1751
  %v1880 = vsel %vm1624, %v1307, %v1752
  %v1881 = vsel %vm1625, %v1309, %v1753
  %v1882 = vsel %vm1626, %v1311, %v1754
  %v1883 = vsel %vm1627, %v1315, %v1755
  %v1884 = vsel %vm1628, %v1317, %v1756
  %v1885 = vsel %vm1629, %v1319, %v1757
  %v1886 = vsel %vm1630, %v1321, %v1758
  %v1887 = vsel %vm1631, %v1325, %v1759
  %v1888 = vsel %vm1632, %v1327, %v1760
  %v1889 = vsel %vm1633, %v1329, %v1761
  %v1890 = vsel %vm1634, %v1331, %v1762
  %v1891 = vsel %vm1635, %v1335, %v1763
  %v1892 = vsel %vm1636, %v1337, %v1764
  %v1893 = vsel %vm1637, %v1339, %v1765
  %v1894 = vsel %vm1638, %v1341, %v1766
  %v1895 = vsel %vm1639, %v1345, %v1767
  %v1896 = vsel %vm1640, %v1347, %v1768
  %v1897 = vsel %vm1641, %v1349, %v1769
  %v1898 = vsel %vm1642, %v1351, %v1770
  %v1899 = vsel %vm1643, %v1355, %v1771
  %v1900 = vsel %vm1644, %v1357, %v1772
  %v1901 = vsel %vm1645, %v1359, %v1773
  %v1902 = vsel %vm1646, %v1361, %v1774
  %v1903 = vsel %vm1647, %v1365, %v1775
  %v1904 = vsel %vm1648, %v1367, %v1776
  %v1905 = vsel %vm1649, %v1369, %v1777
  %v1906 = vsel %vm1650, %v1371, %v1778
  %v1907 = vsel %vm1651, %v1375, %v1779
  %v1908 = vsel %vm1652, %v1377, %v1780
  %v1909 = vsel %vm1653, %v1379, %v1781
  %v1910 = vsel %vm1654, %v1381, %v1782
  %v1911 = vsel %vm1655, %v1385, %v1783
  %v1912 = vsel %vm1656, %v1387, %v1784
  %v1913 = vsel %vm1657, %v1389, %v1785
  %v1914 = vsel %vm1658, %v1391, %v1786
  %v1915 = vsel %vm1659, %v1395, %v1787
  %v1916 = vsel %vm1660, %v1397, %v1788
  %v1917 = vsel %vm1661, %v1399, %v1789
  %v1918 = vsel %vm1662, %v1401, %v1790
  %v1919 = vsel %vm1663, %v1405, %v1791
  %v1920 = vsel %vm1664, %v1407, %v1792
  %v1921 = vsel %vm1665, %v1409, %v1793
  %v1922 = vsel %vm1666, %v1411, %v1794
  %v1923 = vsel %vm1667, %v1415, %v1795
  %v1924 = vsel %vm1668, %v1417, %v1796
  %v1925 = vsel %vm1669, %v1419, %v1797
  %v1926 = vsel %vm1670, %v1421, %v1798
  %v1927 = vsel %vm1671, %v1425, %v1799
  %v1928 = vsel %vm1672, %v1427, %v1800
  %v1929 = vsel %vm1673, %v1429, %v1801
  %v1930 = vsel %vm1674, %v1431, %v1802
  %v1931 = vsel %vm1675, %v1435, %v1803
  %v1932 = vsel %vm1676, %v1437, %v1804
  %v1933 = vsel %vm1677, %v1439, %v1805
  %v1934 = vsel %vm1678, %v1441, %v1806
  %v1935 = vsel %vm1679, %v1445, %v1807
  %v1936 = vsel %vm1680, %v1447, %v1808
  %v1937 = vsel %vm1681, %v1449, %v1809
  %v1938 = vsel %vm1682, %v1451, %v1810
  %v1939 = vsel %vm1683, %v1455, %v1811
  %v1940 = vsel %vm1684, %v1457, %v1812
  %v1941 = vsel %vm1685, %v1459, %v1813
  %v1942 = vsel %vm1686, %v1461, %v1814
  %v1943 = vsel %vm1687, %v1465, %v1815
  %v1944 = vsel %vm1688, %v1467, %v1816
  %v1945 = vsel %vm1689, %v1469, %v1817
  %v1946 = vsel %vm1690, %v1471, %v1818
  %v1947 = vsel %vm1691, %v1475, %v1819
  %v1948 = vsel %vm1692, %v1477, %v1820
  %v1949 = vsel %vm1693, %v1479, %v1821
  %v1950 = vsel %vm1694, %v1481, %v1822
  %v1951 = vsel %vm1695, %v1485, %v1823
  %v1952 = vsel %vm1696, %v1487, %v1824
  %v1953 = vsel %vm1697, %v1489, %v1825
  %v1954 = vsel %vm1698, %v1491, %v1826
  %v1955 = vsel %vm1699, %v1495, %v1827
  %v1956 = vsel %vm1700, %v1497, %v1828
  %v1957 = vsel %vm1701, %v1499, %v1829
  %v1958 = vsel %vm1702, %v1501, %v1830
  %v1959 = vsel %vm1703, %v1505, %v1831
  %v1960 = vsel %vm1704, %v1507, %v1832
  %v1961 = vsel %vm1705, %v1509, %v1833
  %v1962 = vsel %vm1706, %v1511, %v1834
  %v1963 = vsel %vm1707, %v1515, %v1835
  %v1964 = vsel %vm1708, %v1517, %v1836
  %v1965 = vsel %vm1709, %v1519, %v1837
  %v1966 = vsel %vm1710, %v1521, %v1838
  %v1967 = vsel %vm1711, %v1525, %v1839
  %v1968 = vsel %vm1712, %v1527, %v1840
  %v1969 = vsel %vm1713, %v1529, %v1841
  %v1970 = vsel %vm1714, %v1531, %v1842
  %v1971 = vsel %vm1715, %v1535, %v1843
  %v1972 = vsel %vm1716, %v1537, %v1844
  %v1973 = vsel %vm1717, %v1539, %v1845
  %v1974 = vsel %vm1718, %v1541, %v1846
  %v1975 = vsel %vm1719, %v1545, %v1847
  %v1976 = vsel %vm1720, %v1547, %v1848
  %v1977 = vsel %vm1721, %v1549, %v1849
  %v1978 = vsel %vm1722, %v1551, %v1850
  %v1979 = vsel %vm1723, %v1555, %v1851
  %v1980 = vsel %vm1724, %v1557, %v1852
  %v1981 = vsel %vm1725, %v1559, %v1853
  %v1982 = vsel %vm1726, %v1561, %v1854
  %v1983 = vsel %vm1727, %v1565, %v1855
  %v1984 = vsel %vm1728, %v1567, %v1856
  %v1985 = vsel %vm1729, %v1569, %v1857
  %v1986 = vsel %vm1730, %v1571, %v1858
  %v1987 = vsel %vm1731, %v1575, %v1859
  %v1988 = vsel %vm1732, %v1577, %v1860
  %v1989 = vsel %vm1733, %v1579, %v1861
  %v1990 = vsel %vm1734, %v1581, %v1862
  %v1991 = vsel %vm1735, %v1585, %v1863
  %v1992 = vsel %vm1736, %v1587, %v1864
  %v1993 = vsel %vm1737, %v1589, %v1865
  %v1994 = vsel %vm1738, %v1591, %v1866
  %v1995 = vsel %vm1739, %v1595, %v1867
  %v1996 = vsel %vm1740, %v1597, %v1868
  %v1997 = vsel %vm1741, %v1599, %v1869
  %v1998 = vsel %vm1742, %v1601, %v1870
  %v1999 = vsel %vm1743, %v1605, %v1871
  %v2000 = vsel %vm1744, %v1607, %v1872
  %v2001 = vsel %vm1745, %v1609, %v1873
  %v2002 = vsel %vm1746, %v1611, %v1874
  %v2003 = vsel %vm1747, %v1615, %v1875
  %v2004 = vsel %vm1748, %v1617, %v1876
  %v2005 = vsel %vm1749, %v1619, %v1877
  %v2006 = vsel %vm1750, %v1621, %v1878
  %v2007 = vpack.c.bf16 %v1881, %v1879
  %v2008 = vpack.c.bf16 %v1882, %v1880
  %v2009 = vpack.c.bf16 %v1885, %v1883
  %v2010 = vpack.c.bf16 %v1886, %v1884
  %v2011 = vpack.c.bf16 %v1889, %v1887
  %v2012 = vpack.c.bf16 %v1890, %v1888
  %v2013 = vpack.c.bf16 %v1893, %v1891
  %v2014 = vpack.c.bf16 %v1894, %v1892
  %v2015 = vpack.c.bf16 %v1897, %v1895
  %v2016 = vpack.c.bf16 %v1898, %v1896
  %v2017 = vpack.c.bf16 %v1901, %v1899
  %v2018 = vpack.c.bf16 %v1902, %v1900
  %v2019 = vpack.c.bf16 %v1905, %v1903
  %v2020 = vpack.c.bf16 %v1906, %v1904
  %v2021 = vpack.c.bf16 %v1909, %v1907
  %v2022 = vpack.c.bf16 %v1910, %v1908
  %v2023 = vpack.c.bf16 %v1913, %v1911
  %v2024 = vpack.c.bf16 %v1914, %v1912
  %v2025 = vpack.c.bf16 %v1917, %v1915
  %v2026 = vpack.c.bf16 %v1918, %v1916
  %v2027 = vpack.c.bf16 %v1921, %v1919
  %v2028 = vpack.c.bf16 %v1922, %v1920
  %v2029 = vpack.c.bf16 %v1925, %v1923
  %v2030 = vpack.c.bf16 %v1926, %v1924
  %v2031 = vpack.c.bf16 %v1929, %v1927
  %v2032 = vpack.c.bf16 %v1930, %v1928
  %v2033 = vpack.c.bf16 %v1933, %v1931
  %v2034 = vpack.c.bf16 %v1934, %v1932
  %v2035 = vpack.c.bf16 %v1937, %v1935
  %v2036 = vpack.c.bf16 %v1938, %v1936
  %v2037 = vpack.c.bf16 %v1941, %v1939
  %v2038 = vpack.c.bf16 %v1942, %v1940
  %v2039 = vpack.c.bf16 %v1945, %v1943
  %v2040 = vpack.c.bf16 %v1946, %v1944
  %v2041 = vpack.c.bf16 %v1949, %v1947
  %v2042 = vpack.c.bf16 %v1950, %v1948
  %v2043 = vpack.c.bf16 %v1953, %v1951
  %v2044 = vpack.c.bf16 %v1954, %v1952
  %v2045 = vpack.c.bf16 %v1957, %v1955
  %v2046 = vpack.c.bf16 %v1958, %v1956
  %v2047 = vpack.c.bf16 %v1961, %v1959
  %v2048 = vpack.c.bf16 %v1962, %v1960
  %v2049 = vpack.c.bf16 %v1965, %v1963
  %v2050 = vpack.c.bf16 %v1966, %v1964
  %v2051 = vpack.c.bf16 %v1969, %v1967
  %v2052 = vpack.c.bf16 %v1970, %v1968
  %v2053 = vpack.c.bf16 %v1973, %v1971
  %v2054 = vpack.c.bf16 %v1974, %v1972
  %v2055 = vpack.c.bf16 %v1977, %v1975
  %v2056 = vpack.c.bf16 %v1978, %v1976
  %v2057 = vpack.c.bf16 %v1981, %v1979
  %v2058 = vpack.c.bf16 %v1982, %v1980
  %v2059 = vpack.c.bf16 %v1985, %v1983
  %v2060 = vpack.c.bf16 %v1986, %v1984
  %v2061 = vpack.c.bf16 %v1989, %v1987
  %v2062 = vpack.c.bf16 %v1990, %v1988
  %v2063 = vpack.c.bf16 %v1993, %v1991
  %v2064 = vpack.c.bf16 %v1994, %v1992
  %v2065 = vpack.c.bf16 %v1997, %v1995
  %v2066 = vpack.c.bf16 %v1998, %v1996
  %v2067 = vpack.c.bf16 %v2001, %v1999
  %v2068 = vpack.c.bf16 %v2002, %v2000
  %v2069 = vpack.c.bf16 %v2005, %v2003
  %v2070 = vpack.c.bf16 %v2006, %v2004
  %v2071 = vld [vmem:[%s5] sm:$0xff]
  %v2072 = vld [vmem:[%s5 + $0x8] sm:$0xff]
  %v2073 = vld [vmem:[%s5 + $0x10] sm:$0xff]
  %v2074 = vld [vmem:[%s5 + $0x18] sm:$0xff]
  %v2075 = vld [vmem:[%s5 + $0x20] sm:$0xff]
  %v2076 = vld [vmem:[%s5 + $0x28] sm:$0xff]
  %v2077 = vld [vmem:[%s5 + $0x30] sm:$0xff]
  %v2078 = vld [vmem:[%s5 + $0x38] sm:$0xff]
  %v2079 = vld [vmem:[%s5 + $0x40] sm:$0xff]
  %v2080 = vld [vmem:[%s5 + $0x48] sm:$0xff]
  %v2081 = vld [vmem:[%s5 + $0x50] sm:$0xff]
  %v2082 = vld [vmem:[%s5 + $0x58] sm:$0xff]
  %v2083 = vld [vmem:[%s5 + $0x60] sm:$0xff]
  %v2084 = vld [vmem:[%s5 + $0x68] sm:$0xff]
  %v2085 = vld [vmem:[%s5 + $0x70] sm:$0xff]
  %v2086 = vld [vmem:[%s5 + $0x78] sm:$0xff]
  %v2087 = vld [vmem:[%s5 + $0x80] sm:$0xff]
  %v2088 = vld [vmem:[%s5 + $0x88] sm:$0xff]
  %v2089 = vld [vmem:[%s5 + $0x90] sm:$0xff]
  %v2090 = vld [vmem:[%s5 + $0x98] sm:$0xff]
  %v2091 = vld [vmem:[%s5 + $0xa0] sm:$0xff]
  %v2092 = vld [vmem:[%s5 + $0xa8] sm:$0xff]
  %v2093 = vld [vmem:[%s5 + $0xb0] sm:$0xff]
  %v2094 = vld [vmem:[%s5 + $0xb8] sm:$0xff]
  %v2095 = vld [vmem:[%s5 + $0xc0] sm:$0xff]
  %v2096 = vld [vmem:[%s5 + $0xc8] sm:$0xff]
  %v2097 = vld [vmem:[%s5 + $0xd0] sm:$0xff]
  %v2098 = vld [vmem:[%s5 + $0xd8] sm:$0xff]
  %v2099 = vld [vmem:[%s5 + $0xe0] sm:$0xff]
  %v2100 = vld [vmem:[%s5 + $0xe8] sm:$0xff]
  %v2101 = vld [vmem:[%s5 + $0xf0] sm:$0xff]
  %v2102 = vld [vmem:[%s5 + $0xf8] sm:$0xff]
  %v2103 = vld [vmem:[%s6] sm:$0x3]
  %v2105 = vlaneseq
  %v2106 = vshrl.u32 %v2105, 7
  %v2107 = vsub.s32 0, %v2106
  %v2108 = vrot.slane %v2103, %v2107
  %v2109 = vlaneseq
  %v2110 = vshrl.u32 %v2109, 7
  %v2111 = vsub.s32 1, %v2110
  %v2112 = vrot.slane %v2103, %v2111
  %v2147 = vunpack.c.l.b16 %v2071
  %v2148 = vunpack.c.h.b16 %v2071
  %v2149 = vunpack.c.l.b16 %v2072
  %v2150 = vunpack.c.h.b16 %v2072
  %v2151 = vunpack.c.l.b16 %v2073
  %v2152 = vunpack.c.h.b16 %v2073
  %v2153 = vunpack.c.l.b16 %v2074
  %v2154 = vunpack.c.h.b16 %v2074
  %v2155 = vunpack.c.l.b16 %v2075
  %v2156 = vunpack.c.h.b16 %v2075
  %v2157 = vunpack.c.l.b16 %v2076
  %v2158 = vunpack.c.h.b16 %v2076
  %v2159 = vunpack.c.l.b16 %v2077
  %v2160 = vunpack.c.h.b16 %v2077
  %v2161 = vunpack.c.l.b16 %v2078
  %v2162 = vunpack.c.h.b16 %v2078
  %v2163 = vunpack.c.l.b16 %v2079
  %v2164 = vunpack.c.h.b16 %v2079
  %v2165 = vunpack.c.l.b16 %v2080
  %v2166 = vunpack.c.h.b16 %v2080
  %v2167 = vunpack.c.l.b16 %v2081
  %v2168 = vunpack.c.h.b16 %v2081
  %v2169 = vunpack.c.l.b16 %v2082
  %v2170 = vunpack.c.h.b16 %v2082
  %v2171 = vunpack.c.l.b16 %v2083
  %v2172 = vunpack.c.h.b16 %v2083
  %v2173 = vunpack.c.l.b16 %v2084
  %v2174 = vunpack.c.h.b16 %v2084
  %v2175 = vunpack.c.l.b16 %v2085
  %v2176 = vunpack.c.h.b16 %v2085
  %v2177 = vunpack.c.l.b16 %v2086
  %v2178 = vunpack.c.h.b16 %v2086
  %v2179 = vunpack.c.l.b16 %v2087
  %v2180 = vunpack.c.h.b16 %v2087
  %v2181 = vunpack.c.l.b16 %v2088
  %v2182 = vunpack.c.h.b16 %v2088
  %v2183 = vunpack.c.l.b16 %v2089
  %v2184 = vunpack.c.h.b16 %v2089
  %v2185 = vunpack.c.l.b16 %v2090
  %v2186 = vunpack.c.h.b16 %v2090
  %v2187 = vunpack.c.l.b16 %v2091
  %v2188 = vunpack.c.h.b16 %v2091
  %v2189 = vunpack.c.l.b16 %v2092
  %v2190 = vunpack.c.h.b16 %v2092
  %v2191 = vunpack.c.l.b16 %v2093
  %v2192 = vunpack.c.h.b16 %v2093
  %v2193 = vunpack.c.l.b16 %v2094
  %v2194 = vunpack.c.h.b16 %v2094
  %v2195 = vunpack.c.l.b16 %v2095
  %v2196 = vunpack.c.h.b16 %v2095
  %v2197 = vunpack.c.l.b16 %v2096
  %v2198 = vunpack.c.h.b16 %v2096
  %v2199 = vunpack.c.l.b16 %v2097
  %v2200 = vunpack.c.h.b16 %v2097
  %v2201 = vunpack.c.l.b16 %v2098
  %v2202 = vunpack.c.h.b16 %v2098
  %v2203 = vunpack.c.l.b16 %v2099
  %v2204 = vunpack.c.h.b16 %v2099
  %v2205 = vunpack.c.l.b16 %v2100
  %v2206 = vunpack.c.h.b16 %v2100
  %v2207 = vunpack.c.l.b16 %v2101
  %v2208 = vunpack.c.h.b16 %v2101
  %v2209 = vunpack.c.l.b16 %v2102
  %v2210 = vunpack.c.h.b16 %v2102
  %v2211 = vpack.c.b16 %v2149, %v2147
  %v2212 = vpack.c.b16 %v2150, %v2148
  %v2213 = vpack.c.b16 %v2153, %v2151
  %v2214 = vpack.c.b16 %v2154, %v2152
  %v2215 = vpack.c.b16 %v2157, %v2155
  %v2216 = vpack.c.b16 %v2158, %v2156
  %v2217 = vpack.c.b16 %v2161, %v2159
  %v2218 = vpack.c.b16 %v2162, %v2160
  %v2219 = vpack.c.b16 %v2165, %v2163
  %v2220 = vpack.c.b16 %v2166, %v2164
  %v2221 = vpack.c.b16 %v2169, %v2167
  %v2222 = vpack.c.b16 %v2170, %v2168
  %v2223 = vpack.c.b16 %v2173, %v2171
  %v2224 = vpack.c.b16 %v2174, %v2172
  %v2225 = vpack.c.b16 %v2177, %v2175
  %v2226 = vpack.c.b16 %v2178, %v2176
  %v2227 = vpack.c.b16 %v2181, %v2179
  %v2228 = vpack.c.b16 %v2182, %v2180
  %v2229 = vpack.c.b16 %v2185, %v2183
  %v2230 = vpack.c.b16 %v2186, %v2184
  %v2231 = vpack.c.b16 %v2189, %v2187
  %v2232 = vpack.c.b16 %v2190, %v2188
  %v2233 = vpack.c.b16 %v2193, %v2191
  %v2234 = vpack.c.b16 %v2194, %v2192
  %v2235 = vpack.c.b16 %v2197, %v2195
  %v2236 = vpack.c.b16 %v2198, %v2196
  %v2237 = vpack.c.b16 %v2201, %v2199
  %v2238 = vpack.c.b16 %v2202, %v2200
  %v2239 = vpack.c.b16 %v2205, %v2203
  %v2240 = vpack.c.b16 %v2206, %v2204
  %v2241 = vpack.c.b16 %v2209, %v2207
  %v2242 = vpack.c.b16 %v2210, %v2208
  %2275 = vmatprep.subr.bf16.mxu0 %v2212
  %2276 = vmatpush1.bf16.msra.mxu0 %v2211
  %2277 = vmatprep.subr.bf16.mxu0 %v2214
  %2278 = vmatpush1.bf16.msra.mxu0 %v2213
  %2279 = vmatprep.subr.bf16.mxu0 %v2216
  %2280 = vmatpush1.bf16.msra.mxu0 %v2215
  %2281 = vmatprep.subr.bf16.mxu0 %v2218
  %2282 = vmatpush1.bf16.msra.mxu0 %v2217
  %2283 = vmatprep.subr.bf16.mxu0 %v2220
  %2284 = vmatpush1.bf16.msra.mxu0 %v2219
  %2285 = vmatprep.subr.bf16.mxu0 %v2222
  %2286 = vmatpush1.bf16.msra.mxu0 %v2221
  %2287 = vmatprep.subr.bf16.mxu0 %v2224
  %2288 = vmatpush1.bf16.msra.mxu0 %v2223
  %2289 = vmatprep.subr.bf16.mxu0 %v2226
  %2290 = vmatpush1.bf16.msra.mxu0 %v2225
  %2291 = vmatprep.subr.bf16.mxu0 %v2228
  %2292 = vmatpush1.bf16.msra.mxu0 %v2227
  %2293 = vmatprep.subr.bf16.mxu0 %v2230
  %2294 = vmatpush1.bf16.msra.mxu0 %v2229
  %2295 = vmatprep.subr.bf16.mxu0 %v2232
  %2296 = vmatpush1.bf16.msra.mxu0 %v2231
  %2297 = vmatprep.subr.bf16.mxu0 %v2234
  %2298 = vmatpush1.bf16.msra.mxu0 %v2233
  %2299 = vmatprep.subr.bf16.mxu0 %v2236
  %2300 = vmatpush1.bf16.msra.mxu0 %v2235
  %2301 = vmatprep.subr.bf16.mxu0 %v2238
  %2302 = vmatpush1.bf16.msra.mxu0 %v2237
  %2303 = vmatprep.subr.bf16.mxu0 %v2240
  %2304 = vmatpush1.bf16.msra.mxu0 %v2239
  %2305 = vmatprep.subr.bf16.mxu0 %v2242
  %2306 = vmatpush1.bf16.msra.mxu0 %v2241
  %2307 = vmatprep.mubr.bf16.mxu0 %v2008
  %2308 = vmatmul.mubr.bf16.gmra.mrb[0].mxu0 %v2007
  %v2309 = vpop.f32.mrb[0].mxu0
  %v2310 = vadd.f32 %v2108, %v2309
  %v2311 = vpop.f32.mrb[0].mxu0
  %v2312 = vadd.f32 %v2112, %v2311
  %v2313 = vpop.f32.mrb[0].mxu0
  %v2314 = vadd.f32 %v2108, %v2313
  %v2315 = vpop.f32.mrb[0].mxu0
  %v2316 = vadd.f32 %v2112, %v2315
  %2317 = vmatprep.mubr.bf16.mxu0 %v2010
  %2318 = vmatmul.mubr.bf16.gmra.mrb[0].mxu0 %v2009
  %v2319 = vpop.f32.mrb[0].mxu0
  %v2320 = vadd.f32 %v2108, %v2319
  %v2321 = vpop.f32.mrb[0].mxu0
  %v2322 = vadd.f32 %v2112, %v2321
  %v2323 = vpop.f32.mrb[0].mxu0
  %v2324 = vadd.f32 %v2108, %v2323
  %v2325 = vpop.f32.mrb[0].mxu0
  %v2326 = vadd.f32 %v2112, %v2325
  %2327 = vmatprep.mubr.bf16.mxu0 %v2012
  %2328 = vmatmul.mubr.bf16.gmra.mrb[0].mxu0 %v2011
  %v2329 = vpop.f32.mrb[0].mxu0
  %v2330 = vadd.f32 %v2108, %v2329
  %v2331 = vpop.f32.mrb[0].mxu0
  %v2332 = vadd.f32 %v2112, %v2331
  %v2333 = vpop.f32.mrb[0].mxu0
  %v2334 = vadd.f32 %v2108, %v2333
  %v2335 = vpop.f32.mrb[0].mxu0
  %v2336 = vadd.f32 %v2112, %v2335
  %2337 = vmatprep.mubr.bf16.mxu0 %v2014
  %2338 = vmatmul.mubr.bf16.gmra.mrb[0].mxu0 %v2013
  %v2339 = vpop.f32.mrb[0].mxu0
  %v2340 = vadd.f32 %v2108, %v2339
  %v2341 = vpop.f32.mrb[0].mxu0
  %v2342 = vadd.f32 %v2112, %v2341
  %v2343 = vpop.f32.mrb[0].mxu0
  %v2344 = vadd.f32 %v2108, %v2343
  %v2345 = vpop.f32.mrb[0].mxu0
  %v2346 = vadd.f32 %v2112, %v2345
  %2347 = vmatprep.mubr.bf16.mxu0 %v2016
  %2348 = vmatmul.mubr.bf16.gmra.mrb[0].mxu0 %v2015
  %v2349 = vpop.f32.mrb[0].mxu0
  %v2350 = vadd.f32 %v2108, %v2349
  %v2351 = vpop.f32.mrb[0].mxu0
  %v2352 = vadd.f32 %v2112, %v2351
  %v2353 = vpop.f32.mrb[0].mxu0
  %v2354 = vadd.f32 %v2108, %v2353
  %v2355 = vpop.f32.mrb[0].mxu0
  %v2356 = vadd.f32 %v2112, %v2355
  %2357 = vmatprep.mubr.bf16.mxu0 %v2018
  %2358 = vmatmul.mubr.bf16.gmra.mrb[0].mxu0 %v2017
  %v2359 = vpop.f32.mrb[0].mxu0
  %v2360 = vadd.f32 %v2108, %v2359
  %v2361 = vpop.f32.mrb[0].mxu0
  %v2362 = vadd.f32 %v2112, %v2361
  %v2363 = vpop.f32.mrb[0].mxu0
  %v2364 = vadd.f32 %v2108, %v2363
  %v2365 = vpop.f32.mrb[0].mxu0
  %v2366 = vadd.f32 %v2112, %v2365
  %2367 = vmatprep.mubr.bf16.mxu0 %v2020
  %2368 = vmatmul.mubr.bf16.gmra.mrb[0].mxu0 %v2019
  %v2369 = vpop.f32.mrb[0].mxu0
  %v2370 = vadd.f32 %v2108, %v2369
  %v2371 = vpop.f32.mrb[0].mxu0
  %v2372 = vadd.f32 %v2112, %v2371
  %v2373 = vpop.f32.mrb[0].mxu0
  %v2374 = vadd.f32 %v2108, %v2373
  %v2375 = vpop.f32.mrb[0].mxu0
  %v2376 = vadd.f32 %v2112, %v2375
  %2377 = vmatprep.mubr.bf16.mxu0 %v2022
  %2378 = vmatmul.mubr.bf16.gmra.mrb[0].mxu0 %v2021
  %v2379 = vpop.f32.mrb[0].mxu0
  %v2380 = vadd.f32 %v2108, %v2379
  %v2381 = vpop.f32.mrb[0].mxu0
  %v2382 = vadd.f32 %v2112, %v2381
  %v2383 = vpop.f32.mrb[0].mxu0
  %v2384 = vadd.f32 %v2108, %v2383
  %v2385 = vpop.f32.mrb[0].mxu0
  %v2386 = vadd.f32 %v2112, %v2385
  %2387 = vmatprep.mubr.bf16.mxu0 %v2024
  %2388 = vmatmul.mubr.bf16.gmra.mrb[0].mxu0 %v2023
  %v2389 = vpop.f32.mrb[0].mxu0
  %v2390 = vadd.f32 %v2108, %v2389
  %v2391 = vpop.f32.mrb[0].mxu0
  %v2392 = vadd.f32 %v2112, %v2391
  %v2393 = vpop.f32.mrb[0].mxu0
  %v2394 = vadd.f32 %v2108, %v2393
  %v2395 = vpop.f32.mrb[0].mxu0
  %v2396 = vadd.f32 %v2112, %v2395
  %2397 = vmatprep.mubr.bf16.mxu0 %v2026
  %2398 = vmatmul.mubr.bf16.gmra.mrb[0].mxu0 %v2025
  %v2399 = vpop.f32.mrb[0].mxu0
  %v2400 = vadd.f32 %v2108, %v2399
  %v2401 = vpop.f32.mrb[0].mxu0
  %v2402 = vadd.f32 %v2112, %v2401
  %v2403 = vpop.f32.mrb[0].mxu0
  %v2404 = vadd.f32 %v2108, %v2403
  %v2405 = vpop.f32.mrb[0].mxu0
  %v2406 = vadd.f32 %v2112, %v2405
  %2407 = vmatprep.mubr.bf16.mxu0 %v2028
  %2408 = vmatmul.mubr.bf16.gmra.mrb[0].mxu0 %v2027
  %v2409 = vpop.f32.mrb[0].mxu0
  %v2410 = vadd.f32 %v2108, %v2409
  %v2411 = vpop.f32.mrb[0].mxu0
  %v2412 = vadd.f32 %v2112, %v2411
  %v2413 = vpop.f32.mrb[0].mxu0
  %v2414 = vadd.f32 %v2108, %v2413
  %v2415 = vpop.f32.mrb[0].mxu0
  %v2416 = vadd.f32 %v2112, %v2415
  %2417 = vmatprep.mubr.bf16.mxu0 %v2030
  %2418 = vmatmul.mubr.bf16.gmra.mrb[0].mxu0 %v2029
  %v2419 = vpop.f32.mrb[0].mxu0
  %v2420 = vadd.f32 %v2108, %v2419
  %v2421 = vpop.f32.mrb[0].mxu0
  %v2422 = vadd.f32 %v2112, %v2421
  %v2423 = vpop.f32.mrb[0].mxu0
  %v2424 = vadd.f32 %v2108, %v2423
  %v2425 = vpop.f32.mrb[0].mxu0
  %v2426 = vadd.f32 %v2112, %v2425
  %2427 = vmatprep.mubr.bf16.mxu0 %v2032
  %2428 = vmatmul.mubr.bf16.gmra.mrb[0].mxu0 %v2031
  %v2429 = vpop.f32.mrb[0].mxu0
  %v2430 = vadd.f32 %v2108, %v2429
  %v2431 = vpop.f32.mrb[0].mxu0
  %v2432 = vadd.f32 %v2112, %v2431
  %v2433 = vpop.f32.mrb[0].mxu0
  %v2434 = vadd.f32 %v2108, %v2433
  %v2435 = vpop.f32.mrb[0].mxu0
  %v2436 = vadd.f32 %v2112, %v2435
  %2437 = vmatprep.mubr.bf16.mxu0 %v2034
  %2438 = vmatmul.mubr.bf16.gmra.mrb[0].mxu0 %v2033
  %v2439 = vpop.f32.mrb[0].mxu0
  %v2440 = vadd.f32 %v2108, %v2439
  %v2441 = vpop.f32.mrb[0].mxu0
  %v2442 = vadd.f32 %v2112, %v2441
  %v2443 = vpop.f32.mrb[0].mxu0
  %v2444 = vadd.f32 %v2108, %v2443
  %v2445 = vpop.f32.mrb[0].mxu0
  %v2446 = vadd.f32 %v2112, %v2445
  %2447 = vmatprep.mubr.bf16.mxu0 %v2036
  %2448 = vmatmul.mubr.bf16.gmra.mrb[0].mxu0 %v2035
  %v2449 = vpop.f32.mrb[0].mxu0
  %v2450 = vadd.f32 %v2108, %v2449
  %v2451 = vpop.f32.mrb[0].mxu0
  %v2452 = vadd.f32 %v2112, %v2451
  %v2453 = vpop.f32.mrb[0].mxu0
  %v2454 = vadd.f32 %v2108, %v2453
  %v2455 = vpop.f32.mrb[0].mxu0
  %v2456 = vadd.f32 %v2112, %v2455
  %2457 = vmatprep.mubr.bf16.mxu0 %v2038
  %2458 = vmatmul.mubr.bf16.gmra.mrb[0].mxu0 %v2037
  %v2459 = vpop.f32.mrb[0].mxu0
  %v2460 = vadd.f32 %v2108, %v2459
  %v2461 = vpop.f32.mrb[0].mxu0
  %v2462 = vadd.f32 %v2112, %v2461
  %v2463 = vpop.f32.mrb[0].mxu0
  %v2464 = vadd.f32 %v2108, %v2463
  %v2465 = vpop.f32.mrb[0].mxu0
  %v2466 = vadd.f32 %v2112, %v2465
  %2467 = vmatprep.mubr.bf16.mxu0 %v2040
  %2468 = vmatmul.mubr.bf16.gmra.mrb[0].mxu0 %v2039
  %v2469 = vpop.f32.mrb[0].mxu0
  %v2470 = vadd.f32 %v2108, %v2469
  %v2471 = vpop.f32.mrb[0].mxu0
  %v2472 = vadd.f32 %v2112, %v2471
  %v2473 = vpop.f32.mrb[0].mxu0
  %v2474 = vadd.f32 %v2108, %v2473
  %v2475 = vpop.f32.mrb[0].mxu0
  %v2476 = vadd.f32 %v2112, %v2475
  %2477 = vmatprep.mubr.bf16.mxu0 %v2042
  %2478 = vmatmul.mubr.bf16.gmra.mrb[0].mxu0 %v2041
  %v2479 = vpop.f32.mrb[0].mxu0
  %v2480 = vadd.f32 %v2108, %v2479
  %v2481 = vpop.f32.mrb[0].mxu0
  %v2482 = vadd.f32 %v2112, %v2481
  %v2483 = vpop.f32.mrb[0].mxu0
  %v2484 = vadd.f32 %v2108, %v2483
  %v2485 = vpop.f32.mrb[0].mxu0
  %v2486 = vadd.f32 %v2112, %v2485
  %2487 = vmatprep.mubr.bf16.mxu0 %v2044
  %2488 = vmatmul.mubr.bf16.gmra.mrb[0].mxu0 %v2043
  %v2489 = vpop.f32.mrb[0].mxu0
  %v2490 = vadd.f32 %v2108, %v2489
  %v2491 = vpop.f32.mrb[0].mxu0
  %v2492 = vadd.f32 %v2112, %v2491
  %v2493 = vpop.f32.mrb[0].mxu0
  %v2494 = vadd.f32 %v2108, %v2493
  %v2495 = vpop.f32.mrb[0].mxu0
  %v2496 = vadd.f32 %v2112, %v2495
  %2497 = vmatprep.mubr.bf16.mxu0 %v2046
  %2498 = vmatmul.mubr.bf16.gmra.mrb[0].mxu0 %v2045
  %v2499 = vpop.f32.mrb[0].mxu0
  %v2500 = vadd.f32 %v2108, %v2499
  %v2501 = vpop.f32.mrb[0].mxu0
  %v2502 = vadd.f32 %v2112, %v2501
  %v2503 = vpop.f32.mrb[0].mxu0
  %v2504 = vadd.f32 %v2108, %v2503
  %v2505 = vpop.f32.mrb[0].mxu0
  %v2506 = vadd.f32 %v2112, %v2505
  %2507 = vmatprep.mubr.bf16.mxu0 %v2048
  %2508 = vmatmul.mubr.bf16.gmra.mrb[0].mxu0 %v2047
  %v2509 = vpop.f32.mrb[0].mxu0
  %v2510 = vadd.f32 %v2108, %v2509
  %v2511 = vpop.f32.mrb[0].mxu0
  %v2512 = vadd.f32 %v2112, %v2511
  %v2513 = vpop.f32.mrb[0].mxu0
  %v2514 = vadd.f32 %v2108, %v2513
  %v2515 = vpop.f32.mrb[0].mxu0
  %v2516 = vadd.f32 %v2112, %v2515
  %2517 = vmatprep.mubr.bf16.mxu0 %v2050
  %2518 = vmatmul.mubr.bf16.gmra.mrb[0].mxu0 %v2049
  %v2519 = vpop.f32.mrb[0].mxu0
  %v2520 = vadd.f32 %v2108, %v2519
  %v2521 = vpop.f32.mrb[0].mxu0
  %v2522 = vadd.f32 %v2112, %v2521
  %v2523 = vpop.f32.mrb[0].mxu0
  %v2524 = vadd.f32 %v2108, %v2523
  %v2525 = vpop.f32.mrb[0].mxu0
  %v2526 = vadd.f32 %v2112, %v2525
  %2527 = vmatprep.mubr.bf16.mxu0 %v2052
  %2528 = vmatmul.mubr.bf16.gmra.mrb[0].mxu0 %v2051
  %v2529 = vpop.f32.mrb[0].mxu0
  %v2530 = vadd.f32 %v2108, %v2529
  %v2531 = vpop.f32.mrb[0].mxu0
  %v2532 = vadd.f32 %v2112, %v2531
  %v2533 = vpop.f32.mrb[0].mxu0
  %v2534 = vadd.f32 %v2108, %v2533
  %v2535 = vpop.f32.mrb[0].mxu0
  %v2536 = vadd.f32 %v2112, %v2535
  %2537 = vmatprep.mubr.bf16.mxu0 %v2054
  %2538 = vmatmul.mubr.bf16.gmra.mrb[0].mxu0 %v2053
  %v2539 = vpop.f32.mrb[0].mxu0
  %v2540 = vadd.f32 %v2108, %v2539
  %v2541 = vpop.f32.mrb[0].mxu0
  %v2542 = vadd.f32 %v2112, %v2541
  %v2543 = vpop.f32.mrb[0].mxu0
  %v2544 = vadd.f32 %v2108, %v2543
  %v2545 = vpop.f32.mrb[0].mxu0
  %v2546 = vadd.f32 %v2112, %v2545
  %2547 = vmatprep.mubr.bf16.mxu0 %v2056
  %2548 = vmatmul.mubr.bf16.gmra.mrb[0].mxu0 %v2055
  %v2549 = vpop.f32.mrb[0].mxu0
  %v2550 = vadd.f32 %v2108, %v2549
  %v2551 = vpop.f32.mrb[0].mxu0
  %v2552 = vadd.f32 %v2112, %v2551
  %v2553 = vpop.f32.mrb[0].mxu0
  %v2554 = vadd.f32 %v2108, %v2553
  %v2555 = vpop.f32.mrb[0].mxu0
  %v2556 = vadd.f32 %v2112, %v2555
  %2557 = vmatprep.mubr.bf16.mxu0 %v2058
  %2558 = vmatmul.mubr.bf16.gmra.mrb[0].mxu0 %v2057
  %v2559 = vpop.f32.mrb[0].mxu0
  %v2560 = vadd.f32 %v2108, %v2559
  %v2561 = vpop.f32.mrb[0].mxu0
  %v2562 = vadd.f32 %v2112, %v2561
  %v2563 = vpop.f32.mrb[0].mxu0
  %v2564 = vadd.f32 %v2108, %v2563
  %v2565 = vpop.f32.mrb[0].mxu0
  %v2566 = vadd.f32 %v2112, %v2565
  %2567 = vmatprep.mubr.bf16.mxu0 %v2060
  %2568 = vmatmul.mubr.bf16.gmra.mrb[0].mxu0 %v2059
  %v2569 = vpop.f32.mrb[0].mxu0
  %v2570 = vadd.f32 %v2108, %v2569
  %v2571 = vpop.f32.mrb[0].mxu0
  %v2572 = vadd.f32 %v2112, %v2571
  %v2573 = vpop.f32.mrb[0].mxu0
  %v2574 = vadd.f32 %v2108, %v2573
  %v2575 = vpop.f32.mrb[0].mxu0
  %v2576 = vadd.f32 %v2112, %v2575
  %2577 = vmatprep.mubr.bf16.mxu0 %v2062
  %2578 = vmatmul.mubr.bf16.gmra.mrb[0].mxu0 %v2061
  %v2579 = vpop.f32.mrb[0].mxu0
  %v2580 = vadd.f32 %v2108, %v2579
  %v2581 = vpop.f32.mrb[0].mxu0
  %v2582 = vadd.f32 %v2112, %v2581
  %v2583 = vpop.f32.mrb[0].mxu0
  %v2584 = vadd.f32 %v2108, %v2583
  %v2585 = vpop.f32.mrb[0].mxu0
  %v2586 = vadd.f32 %v2112, %v2585
  %2587 = vmatprep.mubr.bf16.mxu0 %v2064
  %2588 = vmatmul.mubr.bf16.gmra.mrb[0].mxu0 %v2063
  %v2589 = vpop.f32.mrb[0].mxu0
  %v2590 = vadd.f32 %v2108, %v2589
  %v2591 = vpop.f32.mrb[0].mxu0
  %v2592 = vadd.f32 %v2112, %v2591
  %v2593 = vpop.f32.mrb[0].mxu0
  %v2594 = vadd.f32 %v2108, %v2593
  %v2595 = vpop.f32.mrb[0].mxu0
  %v2596 = vadd.f32 %v2112, %v2595
  %2597 = vmatprep.mubr.bf16.mxu0 %v2066
  %2598 = vmatmul.mubr.bf16.gmra.mrb[0].mxu0 %v2065
  %v2599 = vpop.f32.mrb[0].mxu0
  %v2600 = vadd.f32 %v2108, %v2599
  %v2601 = vpop.f32.mrb[0].mxu0
  %v2602 = vadd.f32 %v2112, %v2601
  %v2603 = vpop.f32.mrb[0].mxu0
  %v2604 = vadd.f32 %v2108, %v2603
  %v2605 = vpop.f32.mrb[0].mxu0
  %v2606 = vadd.f32 %v2112, %v2605
  %2607 = vmatprep.mubr.bf16.mxu0 %v2068
  %2608 = vmatmul.mubr.bf16.gmra.mrb[0].mxu0 %v2067
  %v2609 = vpop.f32.mrb[0].mxu0
  %v2610 = vadd.f32 %v2108, %v2609
  %v2611 = vpop.f32.mrb[0].mxu0
  %v2612 = vadd.f32 %v2112, %v2611
  %v2613 = vpop.f32.mrb[0].mxu0
  %v2614 = vadd.f32 %v2108, %v2613
  %v2615 = vpop.f32.mrb[0].mxu0
  %v2616 = vadd.f32 %v2112, %v2615
  %2617 = vmatprep.mubr.bf16.mxu0 %v2070
  %2618 = vmatmul.mubr.bf16.gmra.mrb[0].mxu0 %v2069
  %v2619 = vpop.f32.mrb[0].mxu0
  %v2620 = vadd.f32 %v2108, %v2619
  %v2621 = vpop.f32.mrb[0].mxu0
  %v2622 = vadd.f32 %v2112, %v2621
  %v2623 = vpop.f32.mrb[0].mxu0
  %v2624 = vadd.f32 %v2108, %v2623
  %v2625 = vpop.f32.mrb[0].mxu0
  %v2626 = vadd.f32 %v2112, %v2625
  %2627 = vdwg.mxu0
  %vm2628 = vcmp.ge.f32.partialorder %v2310, 0.0
  %vm2629 = vcmp.ge.f32.partialorder %v2312, 0.0
  %vm2630 = vcmp.ge.f32.partialorder %v2314, 0.0
  %vm2631 = vcmp.ge.f32.partialorder %v2316, 0.0
  %vm2632 = vcmp.ge.f32.partialorder %v2320, 0.0
  %vm2633 = vcmp.ge.f32.partialorder %v2322, 0.0
  %vm2634 = vcmp.ge.f32.partialorder %v2324, 0.0
  %vm2635 = vcmp.ge.f32.partialorder %v2326, 0.0
  %vm2636 = vcmp.ge.f32.partialorder %v2330, 0.0
  %vm2637 = vcmp.ge.f32.partialorder %v2332, 0.0
  %vm2638 = vcmp.ge.f32.partialorder %v2334, 0.0
  %vm2639 = vcmp.ge.f32.partialorder %v2336, 0.0
  %vm2640 = vcmp.ge.f32.partialorder %v2340, 0.0
  %vm2641 = vcmp.ge.f32.partialorder %v2342, 0.0
  %vm2642 = vcmp.ge.f32.partialorder %v2344, 0.0
  %vm2643 = vcmp.ge.f32.partialorder %v2346, 0.0
  %vm2644 = vcmp.ge.f32.partialorder %v2350, 0.0
  %vm2645 = vcmp.ge.f32.partialorder %v2352, 0.0
  %vm2646 = vcmp.ge.f32.partialorder %v2354, 0.0
  %vm2647 = vcmp.ge.f32.partialorder %v2356, 0.0
  %vm2648 = vcmp.ge.f32.partialorder %v2360, 0.0
  %vm2649 = vcmp.ge.f32.partialorder %v2362, 0.0
  %vm2650 = vcmp.ge.f32.partialorder %v2364, 0.0
  %vm2651 = vcmp.ge.f32.partialorder %v2366, 0.0
  %vm2652 = vcmp.ge.f32.partialorder %v2370, 0.0
  %vm2653 = vcmp.ge.f32.partialorder %v2372, 0.0
  %vm2654 = vcmp.ge.f32.partialorder %v2374, 0.0
  %vm2655 = vcmp.ge.f32.partialorder %v2376, 0.0
  %vm2656 = vcmp.ge.f32.partialorder %v2380, 0.0
  %vm2657 = vcmp.ge.f32.partialorder %v2382, 0.0
  %vm2658 = vcmp.ge.f32.partialorder %v2384, 0.0
  %vm2659 = vcmp.ge.f32.partialorder %v2386, 0.0
  %vm2660 = vcmp.ge.f32.partialorder %v2390, 0.0
  %vm2661 = vcmp.ge.f32.partialorder %v2392, 0.0
  %vm2662 = vcmp.ge.f32.partialorder %v2394, 0.0
  %vm2663 = vcmp.ge.f32.partialorder %v2396, 0.0
  %vm2664 = vcmp.ge.f32.partialorder %v2400, 0.0
  %vm2665 = vcmp.ge.f32.partialorder %v2402, 0.0
  %vm2666 = vcmp.ge.f32.partialorder %v2404, 0.0
  %vm2667 = vcmp.ge.f32.partialorder %v2406, 0.0
  %vm2668 = vcmp.ge.f32.partialorder %v2410, 0.0
  %vm2669 = vcmp.ge.f32.partialorder %v2412, 0.0
  %vm2670 = vcmp.ge.f32.partialorder %v2414, 0.0
  %vm2671 = vcmp.ge.f32.partialorder %v2416, 0.0
  %vm2672 = vcmp.ge.f32.partialorder %v2420, 0.0
  %vm2673 = vcmp.ge.f32.partialorder %v2422, 0.0
  %vm2674 = vcmp.ge.f32.partialorder %v2424, 0.0
  %vm2675 = vcmp.ge.f32.partialorder %v2426, 0.0
  %vm2676 = vcmp.ge.f32.partialorder %v2430, 0.0
  %vm2677 = vcmp.ge.f32.partialorder %v2432, 0.0
  %vm2678 = vcmp.ge.f32.partialorder %v2434, 0.0
  %vm2679 = vcmp.ge.f32.partialorder %v2436, 0.0
  %vm2680 = vcmp.ge.f32.partialorder %v2440, 0.0
  %vm2681 = vcmp.ge.f32.partialorder %v2442, 0.0
  %vm2682 = vcmp.ge.f32.partialorder %v2444, 0.0
  %vm2683 = vcmp.ge.f32.partialorder %v2446, 0.0
  %vm2684 = vcmp.ge.f32.partialorder %v2450, 0.0
  %vm2685 = vcmp.ge.f32.partialorder %v2452, 0.0
  %vm2686 = vcmp.ge.f32.partialorder %v2454, 0.0
  %vm2687 = vcmp.ge.f32.partialorder %v2456, 0.0
  %vm2688 = vcmp.ge.f32.partialorder %v2460, 0.0
  %vm2689 = vcmp.ge.f32.partialorder %v2462, 0.0
  %vm2690 = vcmp.ge.f32.partialorder %v2464, 0.0
  %vm2691 = vcmp.ge.f32.partialorder %v2466, 0.0
  %vm2692 = vcmp.ge.f32.partialorder %v2470, 0.0
  %vm2693 = vcmp.ge.f32.partialorder %v2472, 0.0
  %vm2694 = vcmp.ge.f32.partialorder %v2474, 0.0
  %vm2695 = vcmp.ge.f32.partialorder %v2476, 0.0
  %vm2696 = vcmp.ge.f32.partialorder %v2480, 0.0
  %vm2697 = vcmp.ge.f32.partialorder %v2482, 0.0
  %vm2698 = vcmp.ge.f32.partialorder %v2484, 0.0
  %vm2699 = vcmp.ge.f32.partialorder %v2486, 0.0
  %vm2700 = vcmp.ge.f32.partialorder %v2490, 0.0
  %vm2701 = vcmp.ge.f32.partialorder %v2492, 0.0
  %vm2702 = vcmp.ge.f32.partialorder %v2494, 0.0
  %vm2703 = vcmp.ge.f32.partialorder %v2496, 0.0
  %vm2704 = vcmp.ge.f32.partialorder %v2500, 0.0
  %vm2705 = vcmp.ge.f32.partialorder %v2502, 0.0
  %vm2706 = vcmp.ge.f32.partialorder %v2504, 0.0
  %vm2707 = vcmp.ge.f32.partialorder %v2506, 0.0
  %vm2708 = vcmp.ge.f32.partialorder %v2510, 0.0
  %vm2709 = vcmp.ge.f32.partialorder %v2512, 0.0
  %vm2710 = vcmp.ge.f32.partialorder %v2514, 0.0
  %vm2711 = vcmp.ge.f32.partialorder %v2516, 0.0
  %vm2712 = vcmp.ge.f32.partialorder %v2520, 0.0
  %vm2713 = vcmp.ge.f32.partialorder %v2522, 0.0
  %vm2714 = vcmp.ge.f32.partialorder %v2524, 0.0
  %vm2715 = vcmp.ge.f32.partialorder %v2526, 0.0
  %vm2716 = vcmp.ge.f32.partialorder %v2530, 0.0
  %vm2717 = vcmp.ge.f32.partialorder %v2532, 0.0
  %vm2718 = vcmp.ge.f32.partialorder %v2534, 0.0
  %vm2719 = vcmp.ge.f32.partialorder %v2536, 0.0
  %vm2720 = vcmp.ge.f32.partialorder %v2540, 0.0
  %vm2721 = vcmp.ge.f32.partialorder %v2542, 0.0
  %vm2722 = vcmp.ge.f32.partialorder %v2544, 0.0
  %vm2723 = vcmp.ge.f32.partialorder %v2546, 0.0
  %vm2724 = vcmp.ge.f32.partialorder %v2550, 0.0
  %vm2725 = vcmp.ge.f32.partialorder %v2552, 0.0
  %vm2726 = vcmp.ge.f32.partialorder %v2554, 0.0
  %vm2727 = vcmp.ge.f32.partialorder %v2556, 0.0
  %vm2728 = vcmp.ge.f32.partialorder %v2560, 0.0
  %vm2729 = vcmp.ge.f32.partialorder %v2562, 0.0
  %vm2730 = vcmp.ge.f32.partialorder %v2564, 0.0
  %vm2731 = vcmp.ge.f32.partialorder %v2566, 0.0
  %vm2732 = vcmp.ge.f32.partialorder %v2570, 0.0
  %vm2733 = vcmp.ge.f32.partialorder %v2572, 0.0
  %vm2734 = vcmp.ge.f32.partialorder %v2574, 0.0
  %vm2735 = vcmp.ge.f32.partialorder %v2576, 0.0
  %vm2736 = vcmp.ge.f32.partialorder %v2580, 0.0
  %vm2737 = vcmp.ge.f32.partialorder %v2582, 0.0
  %vm2738 = vcmp.ge.f32.partialorder %v2584, 0.0
  %vm2739 = vcmp.ge.f32.partialorder %v2586, 0.0
  %vm2740 = vcmp.ge.f32.partialorder %v2590, 0.0
  %vm2741 = vcmp.ge.f32.partialorder %v2592, 0.0
  %vm2742 = vcmp.ge.f32.partialorder %v2594, 0.0
  %vm2743 = vcmp.ge.f32.partialorder %v2596, 0.0
  %vm2744 = vcmp.ge.f32.partialorder %v2600, 0.0
  %vm2745 = vcmp.ge.f32.partialorder %v2602, 0.0
  %vm2746 = vcmp.ge.f32.partialorder %v2604, 0.0
  %vm2747 = vcmp.ge.f32.partialorder %v2606, 0.0
  %vm2748 = vcmp.ge.f32.partialorder %v2610, 0.0
  %vm2749 = vcmp.ge.f32.partialorder %v2612, 0.0
  %vm2750 = vcmp.ge.f32.partialorder %v2614, 0.0
  %vm2751 = vcmp.ge.f32.partialorder %v2616, 0.0
  %vm2752 = vcmp.ge.f32.partialorder %v2620, 0.0
  %vm2753 = vcmp.ge.f32.partialorder %v2622, 0.0
  %vm2754 = vcmp.ge.f32.partialorder %v2624, 0.0
  %vm2755 = vcmp.ge.f32.partialorder %v2626, 0.0
  %v2756 = vmul.f32 %v2310, 0.1
  %v2757 = vmul.f32 %v2312, 0.1
  %v2758 = vmul.f32 %v2314, 0.1
  %v2759 = vmul.f32 %v2316, 0.1
  %v2760 = vmul.f32 %v2320, 0.1
  %v2761 = vmul.f32 %v2322, 0.1
  %v2762 = vmul.f32 %v2324, 0.1
  %v2763 = vmul.f32 %v2326, 0.1
  %v2764 = vmul.f32 %v2330, 0.1
  %v2765 = vmul.f32 %v2332, 0.1
  %v2766 = vmul.f32 %v2334, 0.1
  %v2767 = vmul.f32 %v2336, 0.1
  %v2768 = vmul.f32 %v2340, 0.1
  %v2769 = vmul.f32 %v2342, 0.1
  %v2770 = vmul.f32 %v2344, 0.1
  %v2771 = vmul.f32 %v2346, 0.1
  %v2772 = vmul.f32 %v2350, 0.1
  %v2773 = vmul.f32 %v2352, 0.1
  %v2774 = vmul.f32 %v2354, 0.1
  %v2775 = vmul.f32 %v2356, 0.1
  %v2776 = vmul.f32 %v2360, 0.1
  %v2777 = vmul.f32 %v2362, 0.1
  %v2778 = vmul.f32 %v2364, 0.1
  %v2779 = vmul.f32 %v2366, 0.1
  %v2780 = vmul.f32 %v2370, 0.1
  %v2781 = vmul.f32 %v2372, 0.1
  %v2782 = vmul.f32 %v2374, 0.1
  %v2783 = vmul.f32 %v2376, 0.1
  %v2784 = vmul.f32 %v2380, 0.1
  %v2785 = vmul.f32 %v2382, 0.1
  %v2786 = vmul.f32 %v2384, 0.1
  %v2787 = vmul.f32 %v2386, 0.1
  %v2788 = vmul.f32 %v2390, 0.1
  %v2789 = vmul.f32 %v2392, 0.1
  %v2790 = vmul.f32 %v2394, 0.1
  %v2791 = vmul.f32 %v2396, 0.1
  %v2792 = vmul.f32 %v2400, 0.1
  %v2793 = vmul.f32 %v2402, 0.1
  %v2794 = vmul.f32 %v2404, 0.1
  %v2795 = vmul.f32 %v2406, 0.1
  %v2796 = vmul.f32 %v2410, 0.1
  %v2797 = vmul.f32 %v2412, 0.1
  %v2798 = vmul.f32 %v2414, 0.1
  %v2799 = vmul.f32 %v2416, 0.1
  %v2800 = vmul.f32 %v2420, 0.1
  %v2801 = vmul.f32 %v2422, 0.1
  %v2802 = vmul.f32 %v2424, 0.1
  %v2803 = vmul.f32 %v2426, 0.1
  %v2804 = vmul.f32 %v2430, 0.1
  %v2805 = vmul.f32 %v2432, 0.1
  %v2806 = vmul.f32 %v2434, 0.1
  %v2807 = vmul.f32 %v2436, 0.1
  %v2808 = vmul.f32 %v2440, 0.1
  %v2809 = vmul.f32 %v2442, 0.1
  %v2810 = vmul.f32 %v2444, 0.1
  %v2811 = vmul.f32 %v2446, 0.1
  %v2812 = vmul.f32 %v2450, 0.1
  %v2813 = vmul.f32 %v2452, 0.1
  %v2814 = vmul.f32 %v2454, 0.1
  %v2815 = vmul.f32 %v2456, 0.1
  %v2816 = vmul.f32 %v2460, 0.1
  %v2817 = vmul.f32 %v2462, 0.1
  %v2818 = vmul.f32 %v2464, 0.1
  %v2819 = vmul.f32 %v2466, 0.1
  %v2820 = vmul.f32 %v2470, 0.1
  %v2821 = vmul.f32 %v2472, 0.1
  %v2822 = vmul.f32 %v2474, 0.1
  %v2823 = vmul.f32 %v2476, 0.1
  %v2824 = vmul.f32 %v2480, 0.1
  %v2825 = vmul.f32 %v2482, 0.1
  %v2826 = vmul.f32 %v2484, 0.1
  %v2827 = vmul.f32 %v2486, 0.1
  %v2828 = vmul.f32 %v2490, 0.1
  %v2829 = vmul.f32 %v2492, 0.1
  %v2830 = vmul.f32 %v2494, 0.1
  %v2831 = vmul.f32 %v2496, 0.1
  %v2832 = vmul.f32 %v2500, 0.1
  %v2833 = vmul.f32 %v2502, 0.1
  %v2834 = vmul.f32 %v2504, 0.1
  %v2835 = vmul.f32 %v2506, 0.1
  %v2836 = vmul.f32 %v2510, 0.1
  %v2837 = vmul.f32 %v2512, 0.1
  %v2838 = vmul.f32 %v2514, 0.1
  %v2839 = vmul.f32 %v2516, 0.1
  %v2840 = vmul.f32 %v2520, 0.1
  %v2841 = vmul.f32 %v2522, 0.1
  %v2842 = vmul.f32 %v2524, 0.1
  %v2843 = vmul.f32 %v2526, 0.1
  %v2844 = vmul.f32 %v2530, 0.1
  %v2845 = vmul.f32 %v2532, 0.1
  %v2846 = vmul.f32 %v2534, 0.1
  %v2847 = vmul.f32 %v2536, 0.1
  %v2848 = vmul.f32 %v2540, 0.1
  %v2849 = vmul.f32 %v2542, 0.1
  %v2850 = vmul.f32 %v2544, 0.1
  %v2851 = vmul.f32 %v2546, 0.1
  %v2852 = vmul.f32 %v2550, 0.1
  %v2853 = vmul.f32 %v2552, 0.1
  %v2854 = vmul.f32 %v2554, 0.1
  %v2855 = vmul.f32 %v2556, 0.1
  %v2856 = vmul.f32 %v2560, 0.1
  %v2857 = vmul.f32 %v2562, 0.1
  %v2858 = vmul.f32 %v2564, 0.1
  %v2859 = vmul.f32 %v2566, 0.1
  %v2860 = vmul.f32 %v2570, 0.1
  %v2861 = vmul.f32 %v2572, 0.1
  %v2862 = vmul.f32 %v2574, 0.1
  %v2863 = vmul.f32 %v2576, 0.1
  %v2864 = vmul.f32 %v2580, 0.1
  %v2865 = vmul.f32 %v2582, 0.1
  %v2866 = vmul.f32 %v2584, 0.1
  %v2867 = vmul.f32 %v2586, 0.1
  %v2868 = vmul.f32 %v2590, 0.1
  %v2869 = vmul.f32 %v2592, 0.1
  %v2870 = vmul.f32 %v2594, 0.1
  %v2871 = vmul.f32 %v2596, 0.1
  %v2872 = vmul.f32 %v2600, 0.1
  %v2873 = vmul.f32 %v2602, 0.1
  %v2874 = vmul.f32 %v2604, 0.1
  %v2875 = vmul.f32 %v2606, 0.1
  %v2876 = vmul.f32 %v2610, 0.1
  %v2877 = vmul.f32 %v2612, 0.1
  %v2878 = vmul.f32 %v2614, 0.1
  %v2879 = vmul.f32 %v2616, 0.1
  %v2880 = vmul.f32 %v2620, 0.1
  %v2881 = vmul.f32 %v2622, 0.1
  %v2882 = vmul.f32 %v2624, 0.1
  %v2883 = vmul.f32 %v2626, 0.1
  %v2884 = vsel %vm2628, %v2310, %v2756
  %v2885 = vsel %vm2629, %v2312, %v2757
  %v2886 = vsel %vm2630, %v2314, %v2758
  %v2887 = vsel %vm2631, %v2316, %v2759
  %v2888 = vsel %vm2632, %v2320, %v2760
  %v2889 = vsel %vm2633, %v2322, %v2761
  %v2890 = vsel %vm2634, %v2324, %v2762
  %v2891 = vsel %vm2635, %v2326, %v2763
  %v2892 = vsel %vm2636, %v2330, %v2764
  %v2893 = vsel %vm2637, %v2332, %v2765
  %v2894 = vsel %vm2638, %v2334, %v2766
  %v2895 = vsel %vm2639, %v2336, %v2767
  %v2896 = vsel %vm2640, %v2340, %v2768
  %v2897 = vsel %vm2641, %v2342, %v2769
  %v2898 = vsel %vm2642, %v2344, %v2770
  %v2899 = vsel %vm2643, %v2346, %v2771
  %v2900 = vsel %vm2644, %v2350, %v2772
  %v2901 = vsel %vm2645, %v2352, %v2773
  %v2902 = vsel %vm2646, %v2354, %v2774
  %v2903 = vsel %vm2647, %v2356, %v2775
  %v2904 = vsel %vm2648, %v2360, %v2776
  %v2905 = vsel %vm2649, %v2362, %v2777
  %v2906 = vsel %vm2650, %v2364, %v2778
  %v2907 = vsel %vm2651, %v2366, %v2779
  %v2908 = vsel %vm2652, %v2370, %v2780
  %v2909 = vsel %vm2653, %v2372, %v2781
  %v2910 = vsel %vm2654, %v2374, %v2782
  %v2911 = vsel %vm2655, %v2376, %v2783
  %v2912 = vsel %vm2656, %v2380, %v2784
  %v2913 = vsel %vm2657, %v2382, %v2785
  %v2914 = vsel %vm2658, %v2384, %v2786
  %v2915 = vsel %vm2659, %v2386, %v2787
  %v2916 = vsel %vm2660, %v2390, %v2788
  %v2917 = vsel %vm2661, %v2392, %v2789
  %v2918 = vsel %vm2662, %v2394, %v2790
  %v2919 = vsel %vm2663, %v2396, %v2791
  %v2920 = vsel %vm2664, %v2400, %v2792
  %v2921 = vsel %vm2665, %v2402, %v2793
  %v2922 = vsel %vm2666, %v2404, %v2794
  %v2923 = vsel %vm2667, %v2406, %v2795
  %v2924 = vsel %vm2668, %v2410, %v2796
  %v2925 = vsel %vm2669, %v2412, %v2797
  %v2926 = vsel %vm2670, %v2414, %v2798
  %v2927 = vsel %vm2671, %v2416, %v2799
  %v2928 = vsel %vm2672, %v2420, %v2800
  %v2929 = vsel %vm2673, %v2422, %v2801
  %v2930 = vsel %vm2674, %v2424, %v2802
  %v2931 = vsel %vm2675, %v2426, %v2803
  %v2932 = vsel %vm2676, %v2430, %v2804
  %v2933 = vsel %vm2677, %v2432, %v2805
  %v2934 = vsel %vm2678, %v2434, %v2806
  %v2935 = vsel %vm2679, %v2436, %v2807
  %v2936 = vsel %vm2680, %v2440, %v2808
  %v2937 = vsel %vm2681, %v2442, %v2809
  %v2938 = vsel %vm2682, %v2444, %v2810
  %v2939 = vsel %vm2683, %v2446, %v2811
  %v2940 = vsel %vm2684, %v2450, %v2812
  %v2941 = vsel %vm2685, %v2452, %v2813
  %v2942 = vsel %vm2686, %v2454, %v2814
  %v2943 = vsel %vm2687, %v2456, %v2815
  %v2944 = vsel %vm2688, %v2460, %v2816
  %v2945 = vsel %vm2689, %v2462, %v2817
  %v2946 = vsel %vm2690, %v2464, %v2818
  %v2947 = vsel %vm2691, %v2466, %v2819
  %v2948 = vsel %vm2692, %v2470, %v2820
  %v2949 = vsel %vm2693, %v2472, %v2821
  %v2950 = vsel %vm2694, %v2474, %v2822
  %v2951 = vsel %vm2695, %v2476, %v2823
  %v2952 = vsel %vm2696, %v2480, %v2824
  %v2953 = vsel %vm2697, %v2482, %v2825
  %v2954 = vsel %vm2698, %v2484, %v2826
  %v2955 = vsel %vm2699, %v2486, %v2827
  %v2956 = vsel %vm2700, %v2490, %v2828
  %v2957 = vsel %vm2701, %v2492, %v2829
  %v2958 = vsel %vm2702, %v2494, %v2830
  %v2959 = vsel %vm2703, %v2496, %v2831
  %v2960 = vsel %vm2704, %v2500, %v2832
  %v2961 = vsel %vm2705, %v2502, %v2833
  %v2962 = vsel %vm2706, %v2504, %v2834
  %v2963 = vsel %vm2707, %v2506, %v2835
  %v2964 = vsel %vm2708, %v2510, %v2836
  %v2965 = vsel %vm2709, %v2512, %v2837
  %v2966 = vsel %vm2710, %v2514, %v2838
  %v2967 = vsel %vm2711, %v2516, %v2839
  %v2968 = vsel %vm2712, %v2520, %v2840
  %v2969 = vsel %vm2713, %v2522, %v2841
  %v2970 = vsel %vm2714, %v2524, %v2842
  %v2971 = vsel %vm2715, %v2526, %v2843
  %v2972 = vsel %vm2716, %v2530, %v2844
  %v2973 = vsel %vm2717, %v2532, %v2845
  %v2974 = vsel %vm2718, %v2534, %v2846
  %v2975 = vsel %vm2719, %v2536, %v2847
  %v2976 = vsel %vm2720, %v2540, %v2848
  %v2977 = vsel %vm2721, %v2542, %v2849
  %v2978 = vsel %vm2722, %v2544, %v2850
  %v2979 = vsel %vm2723, %v2546, %v2851
  %v2980 = vsel %vm2724, %v2550, %v2852
  %v2981 = vsel %vm2725, %v2552, %v2853
  %v2982 = vsel %vm2726, %v2554, %v2854
  %v2983 = vsel %vm2727, %v2556, %v2855
  %v2984 = vsel %vm2728, %v2560, %v2856
  %v2985 = vsel %vm2729, %v2562, %v2857
  %v2986 = vsel %vm2730, %v2564, %v2858
  %v2987 = vsel %vm2731, %v2566, %v2859
  %v2988 = vsel %vm2732, %v2570, %v2860
  %v2989 = vsel %vm2733, %v2572, %v2861
  %v2990 = vsel %vm2734, %v2574, %v2862
  %v2991 = vsel %vm2735, %v2576, %v2863
  %v2992 = vsel %vm2736, %v2580, %v2864
  %v2993 = vsel %vm2737, %v2582, %v2865
  %v2994 = vsel %vm2738, %v2584, %v2866
  %v2995 = vsel %vm2739, %v2586, %v2867
  %v2996 = vsel %vm2740, %v2590, %v2868
  %v2997 = vsel %vm2741, %v2592, %v2869
  %v2998 = vsel %vm2742, %v2594, %v2870
  %v2999 = vsel %vm2743, %v2596, %v2871
  %v3000 = vsel %vm2744, %v2600, %v2872
  %v3001 = vsel %vm2745, %v2602, %v2873
  %v3002 = vsel %vm2746, %v2604, %v2874
  %v3003 = vsel %vm2747, %v2606, %v2875
  %v3004 = vsel %vm2748, %v2610, %v2876
  %v3005 = vsel %vm2749, %v2612, %v2877
  %v3006 = vsel %vm2750, %v2614, %v2878
  %v3007 = vsel %vm2751, %v2616, %v2879
  %v3008 = vsel %vm2752, %v2620, %v2880
  %v3009 = vsel %vm2753, %v2622, %v2881
  %v3010 = vsel %vm2754, %v2624, %v2882
  %v3011 = vsel %vm2755, %v2626, %v2883
  %v3012 = vld [vmem:[%s7] sm:$0x3]
  %v3014 = vlaneseq
  %v3015 = vshrl.u32 %v3014, 7
  %v3016 = vsub.s32 0, %v3015
  %v3017 = vrot.slane %v3012, %v3016
  %v3018 = vlaneseq
  %v3019 = vshrl.u32 %v3018, 7
  %v3020 = vsub.s32 1, %v3019
  %v3021 = vrot.slane %v3012, %v3020
  %v3024 = vmul.f32 %v2884, %v3017
  %v3025 = vmul.f32 %v2885, %v3021
  %v3026 = vmul.f32 %v2886, %v3017
  %v3027 = vmul.f32 %v2887, %v3021
  %v3028 = vmul.f32 %v2888, %v3017
  %v3029 = vmul.f32 %v2889, %v3021
  %v3030 = vmul.f32 %v2890, %v3017
  %v3031 = vmul.f32 %v2891, %v3021
  %v3032 = vmul.f32 %v2892, %v3017
  %v3033 = vmul.f32 %v2893, %v3021
  %v3034 = vmul.f32 %v2894, %v3017
  %v3035 = vmul.f32 %v2895, %v3021
  %v3036 = vmul.f32 %v2896, %v3017
  %v3037 = vmul.f32 %v2897, %v3021
  %v3038 = vmul.f32 %v2898, %v3017
  %v3039 = vmul.f32 %v2899, %v3021
  %v3040 = vmul.f32 %v2900, %v3017
  %v3041 = vmul.f32 %v2901, %v3021
  %v3042 = vmul.f32 %v2902, %v3017
  %v3043 = vmul.f32 %v2903, %v3021
  %v3044 = vmul.f32 %v2904, %v3017
  %v3045 = vmul.f32 %v2905, %v3021
  %v3046 = vmul.f32 %v2906, %v3017
  %v3047 = vmul.f32 %v2907, %v3021
  %v3048 = vmul.f32 %v2908, %v3017
  %v3049 = vmul.f32 %v2909, %v3021
  %v3050 = vmul.f32 %v2910, %v3017
  %v3051 = vmul.f32 %v2911, %v3021
  %v3052 = vmul.f32 %v2912, %v3017
  %v3053 = vmul.f32 %v2913, %v3021
  %v3054 = vmul.f32 %v2914, %v3017
  %v3055 = vmul.f32 %v2915, %v3021
  %v3056 = vmul.f32 %v2916, %v3017
  %v3057 = vmul.f32 %v2917, %v3021
  %v3058 = vmul.f32 %v2918, %v3017
  %v3059 = vmul.f32 %v2919, %v3021
  %v3060 = vmul.f32 %v2920, %v3017
  %v3061 = vmul.f32 %v2921, %v3021
  %v3062 = vmul.f32 %v2922, %v3017
  %v3063 = vmul.f32 %v2923, %v3021
  %v3064 = vmul.f32 %v2924, %v3017
  %v3065 = vmul.f32 %v2925, %v3021
  %v3066 = vmul.f32 %v2926, %v3017
  %v3067 = vmul.f32 %v2927, %v3021
  %v3068 = vmul.f32 %v2928, %v3017
  %v3069 = vmul.f32 %v2929, %v3021
  %v3070 = vmul.f32 %v2930, %v3017
  %v3071 = vmul.f32 %v2931, %v3021
  %v3072 = vmul.f32 %v2932, %v3017
  %v3073 = vmul.f32 %v2933, %v3021
  %v3074 = vmul.f32 %v2934, %v3017
  %v3075 = vmul.f32 %v2935, %v3021
  %v3076 = vmul.f32 %v2936, %v3017
  %v3077 = vmul.f32 %v2937, %v3021
  %v3078 = vmul.f32 %v2938, %v3017
  %v3079 = vmul.f32 %v2939, %v3021
  %v3080 = vmul.f32 %v2940, %v3017
  %v3081 = vmul.f32 %v2941, %v3021
  %v3082 = vmul.f32 %v2942, %v3017
  %v3083 = vmul.f32 %v2943, %v3021
  %v3084 = vmul.f32 %v2944, %v3017
  %v3085 = vmul.f32 %v2945, %v3021
  %v3086 = vmul.f32 %v2946, %v3017
  %v3087 = vmul.f32 %v2947, %v3021
  %v3088 = vmul.f32 %v2948, %v3017
  %v3089 = vmul.f32 %v2949, %v3021
  %v3090 = vmul.f32 %v2950, %v3017
  %v3091 = vmul.f32 %v2951, %v3021
  %v3092 = vmul.f32 %v2952, %v3017
  %v3093 = vmul.f32 %v2953, %v3021
  %v3094 = vmul.f32 %v2954, %v3017
  %v3095 = vmul.f32 %v2955, %v3021
  %v3096 = vmul.f32 %v2956, %v3017
  %v3097 = vmul.f32 %v2957, %v3021
  %v3098 = vmul.f32 %v2958, %v3017
  %v3099 = vmul.f32 %v2959, %v3021
  %v3100 = vmul.f32 %v2960, %v3017
  %v3101 = vmul.f32 %v2961, %v3021
  %v3102 = vmul.f32 %v2962, %v3017
  %v3103 = vmul.f32 %v2963, %v3021
  %v3104 = vmul.f32 %v2964, %v3017
  %v3105 = vmul.f32 %v2965, %v3021
  %v3106 = vmul.f32 %v2966, %v3017
  %v3107 = vmul.f32 %v2967, %v3021
  %v3108 = vmul.f32 %v2968, %v3017
  %v3109 = vmul.f32 %v2969, %v3021
  %v3110 = vmul.f32 %v2970, %v3017
  %v3111 = vmul.f32 %v2971, %v3021
  %v3112 = vmul.f32 %v2972, %v3017
  %v3113 = vmul.f32 %v2973, %v3021
  %v3114 = vmul.f32 %v2974, %v3017
  %v3115 = vmul.f32 %v2975, %v3021
  %v3116 = vmul.f32 %v2976, %v3017
  %v3117 = vmul.f32 %v2977, %v3021
  %v3118 = vmul.f32 %v2978, %v3017
  %v3119 = vmul.f32 %v2979, %v3021
  %v3120 = vmul.f32 %v2980, %v3017
  %v3121 = vmul.f32 %v2981, %v3021
  %v3122 = vmul.f32 %v2982, %v3017
  %v3123 = vmul.f32 %v2983, %v3021
  %v3124 = vmul.f32 %v2984, %v3017
  %v3125 = vmul.f32 %v2985, %v3021
  %v3126 = vmul.f32 %v2986, %v3017
  %v3127 = vmul.f32 %v2987, %v3021
  %v3128 = vmul.f32 %v2988, %v3017
  %v3129 = vmul.f32 %v2989, %v3021
  %v3130 = vmul.f32 %v2990, %v3017
  %v3131 = vmul.f32 %v2991, %v3021
  %v3132 = vmul.f32 %v2992, %v3017
  %v3133 = vmul.f32 %v2993, %v3021
  %v3134 = vmul.f32 %v2994, %v3017
  %v3135 = vmul.f32 %v2995, %v3021
  %v3136 = vmul.f32 %v2996, %v3017
  %v3137 = vmul.f32 %v2997, %v3021
  %v3138 = vmul.f32 %v2998, %v3017
  %v3139 = vmul.f32 %v2999, %v3021
  %v3140 = vmul.f32 %v3000, %v3017
  %v3141 = vmul.f32 %v3001, %v3021
  %v3142 = vmul.f32 %v3002, %v3017
  %v3143 = vmul.f32 %v3003, %v3021
  %v3144 = vmul.f32 %v3004, %v3017
  %v3145 = vmul.f32 %v3005, %v3021
  %v3146 = vmul.f32 %v3006, %v3017
  %v3147 = vmul.f32 %v3007, %v3021
  %v3148 = vmul.f32 %v3008, %v3017
  %v3149 = vmul.f32 %v3009, %v3021
  %v3150 = vmul.f32 %v3010, %v3017
  %v3151 = vmul.f32 %v3011, %v3021
  %v3152 = vadd.f32 %v3024, %v3025
  %3153 = vadd.xlane.f32.xlu0 %v3152
  %v3154 = vpop.xlane.xlu0 %3153
  %v3155 = vadd.f32 %v3026, %v3027
  %3156 = vadd.xlane.f32.xlu0 %v3155
  %v3157 = vpop.xlane.xlu0 %3156
  %v3158 = vadd.f32 %v3028, %v3029
  %3159 = vadd.xlane.f32.xlu0 %v3158
  %v3160 = vpop.xlane.xlu0 %3159
  %v3161 = vadd.f32 %v3030, %v3031
  %3162 = vadd.xlane.f32.xlu0 %v3161
  %v3163 = vpop.xlane.xlu0 %3162
  %v3164 = vadd.f32 %v3032, %v3033
  %3165 = vadd.xlane.f32.xlu0 %v3164
  %v3166 = vpop.xlane.xlu0 %3165
  %v3167 = vadd.f32 %v3034, %v3035
  %3168 = vadd.xlane.f32.xlu0 %v3167
  %v3169 = vpop.xlane.xlu0 %3168
  %v3170 = vadd.f32 %v3036, %v3037
  %3171 = vadd.xlane.f32.xlu0 %v3170
  %v3172 = vpop.xlane.xlu0 %3171
  %v3173 = vadd.f32 %v3038, %v3039
  %3174 = vadd.xlane.f32.xlu0 %v3173
  %v3175 = vpop.xlane.xlu0 %3174
  %v3176 = vadd.f32 %v3040, %v3041
  %3177 = vadd.xlane.f32.xlu0 %v3176
  %v3178 = vpop.xlane.xlu0 %3177
  %v3179 = vadd.f32 %v3042, %v3043
  %3180 = vadd.xlane.f32.xlu0 %v3179
  %v3181 = vpop.xlane.xlu0 %3180
  %v3182 = vadd.f32 %v3044, %v3045
  %3183 = vadd.xlane.f32.xlu0 %v3182
  %v3184 = vpop.xlane.xlu0 %3183
  %v3185 = vadd.f32 %v3046, %v3047
  %3186 = vadd.xlane.f32.xlu0 %v3185
  %v3187 = vpop.xlane.xlu0 %3186
  %v3188 = vadd.f32 %v3048, %v3049
  %3189 = vadd.xlane.f32.xlu0 %v3188
  %v3190 = vpop.xlane.xlu0 %3189
  %v3191 = vadd.f32 %v3050, %v3051
  %3192 = vadd.xlane.f32.xlu0 %v3191
  %v3193 = vpop.xlane.xlu0 %3192
  %v3194 = vadd.f32 %v3052, %v3053
  %3195 = vadd.xlane.f32.xlu0 %v3194
  %v3196 = vpop.xlane.xlu0 %3195
  %v3197 = vadd.f32 %v3054, %v3055
  %3198 = vadd.xlane.f32.xlu0 %v3197
  %v3199 = vpop.xlane.xlu0 %3198
  %v3200 = vadd.f32 %v3056, %v3057
  %3201 = vadd.xlane.f32.xlu0 %v3200
  %v3202 = vpop.xlane.xlu0 %3201
  %v3203 = vadd.f32 %v3058, %v3059
  %3204 = vadd.xlane.f32.xlu0 %v3203
  %v3205 = vpop.xlane.xlu0 %3204
  %v3206 = vadd.f32 %v3060, %v3061
  %3207 = vadd.xlane.f32.xlu0 %v3206
  %v3208 = vpop.xlane.xlu0 %3207
  %v3209 = vadd.f32 %v3062, %v3063
  %3210 = vadd.xlane.f32.xlu0 %v3209
  %v3211 = vpop.xlane.xlu0 %3210
  %v3212 = vadd.f32 %v3064, %v3065
  %3213 = vadd.xlane.f32.xlu0 %v3212
  %v3214 = vpop.xlane.xlu0 %3213
  %v3215 = vadd.f32 %v3066, %v3067
  %3216 = vadd.xlane.f32.xlu0 %v3215
  %v3217 = vpop.xlane.xlu0 %3216
  %v3218 = vadd.f32 %v3068, %v3069
  %3219 = vadd.xlane.f32.xlu0 %v3218
  %v3220 = vpop.xlane.xlu0 %3219
  %v3221 = vadd.f32 %v3070, %v3071
  %3222 = vadd.xlane.f32.xlu0 %v3221
  %v3223 = vpop.xlane.xlu0 %3222
  %v3224 = vadd.f32 %v3072, %v3073
  %3225 = vadd.xlane.f32.xlu0 %v3224
  %v3226 = vpop.xlane.xlu0 %3225
  %v3227 = vadd.f32 %v3074, %v3075
  %3228 = vadd.xlane.f32.xlu0 %v3227
  %v3229 = vpop.xlane.xlu0 %3228
  %v3230 = vadd.f32 %v3076, %v3077
  %3231 = vadd.xlane.f32.xlu0 %v3230
  %v3232 = vpop.xlane.xlu0 %3231
  %v3233 = vadd.f32 %v3078, %v3079
  %3234 = vadd.xlane.f32.xlu0 %v3233
  %v3235 = vpop.xlane.xlu0 %3234
  %v3236 = vadd.f32 %v3080, %v3081
  %3237 = vadd.xlane.f32.xlu0 %v3236
  %v3238 = vpop.xlane.xlu0 %3237
  %v3239 = vadd.f32 %v3082, %v3083
  %3240 = vadd.xlane.f32.xlu0 %v3239
  %v3241 = vpop.xlane.xlu0 %3240
  %v3242 = vadd.f32 %v3084, %v3085
  %3243 = vadd.xlane.f32.xlu0 %v3242
  %v3244 = vpop.xlane.xlu0 %3243
  %v3245 = vadd.f32 %v3086, %v3087
  %3246 = vadd.xlane.f32.xlu0 %v3245
  %v3247 = vpop.xlane.xlu0 %3246
  %v3248 = vadd.f32 %v3088, %v3089
  %3249 = vadd.xlane.f32.xlu0 %v3248
  %v3250 = vpop.xlane.xlu0 %3249
  %v3251 = vadd.f32 %v3090, %v3091
  %3252 = vadd.xlane.f32.xlu0 %v3251
  %v3253 = vpop.xlane.xlu0 %3252
  %v3254 = vadd.f32 %v3092, %v3093
  %3255 = vadd.xlane.f32.xlu0 %v3254
  %v3256 = vpop.xlane.xlu0 %3255
  %v3257 = vadd.f32 %v3094, %v3095
  %3258 = vadd.xlane.f32.xlu0 %v3257
  %v3259 = vpop.xlane.xlu0 %3258
  %v3260 = vadd.f32 %v3096, %v3097
  %3261 = vadd.xlane.f32.xlu0 %v3260
  %v3262 = vpop.xlane.xlu0 %3261
  %v3263 = vadd.f32 %v3098, %v3099
  %3264 = vadd.xlane.f32.xlu0 %v3263
  %v3265 = vpop.xlane.xlu0 %3264
  %v3266 = vadd.f32 %v3100, %v3101
  %3267 = vadd.xlane.f32.xlu0 %v3266
  %v3268 = vpop.xlane.xlu0 %3267
  %v3269 = vadd.f32 %v3102, %v3103
  %3270 = vadd.xlane.f32.xlu0 %v3269
  %v3271 = vpop.xlane.xlu0 %3270
  %v3272 = vadd.f32 %v3104, %v3105
  %3273 = vadd.xlane.f32.xlu0 %v3272
  %v3274 = vpop.xlane.xlu0 %3273
  %v3275 = vadd.f32 %v3106, %v3107
  %3276 = vadd.xlane.f32.xlu0 %v3275
  %v3277 = vpop.xlane.xlu0 %3276
  %v3278 = vadd.f32 %v3108, %v3109
  %3279 = vadd.xlane.f32.xlu0 %v3278
  %v3280 = vpop.xlane.xlu0 %3279
  %v3281 = vadd.f32 %v3110, %v3111
  %3282 = vadd.xlane.f32.xlu0 %v3281
  %v3283 = vpop.xlane.xlu0 %3282
  %v3284 = vadd.f32 %v3112, %v3113
  %3285 = vadd.xlane.f32.xlu0 %v3284
  %v3286 = vpop.xlane.xlu0 %3285
  %v3287 = vadd.f32 %v3114, %v3115
  %3288 = vadd.xlane.f32.xlu0 %v3287
  %v3289 = vpop.xlane.xlu0 %3288
  %v3290 = vadd.f32 %v3116, %v3117
  %3291 = vadd.xlane.f32.xlu0 %v3290
  %v3292 = vpop.xlane.xlu0 %3291
  %v3293 = vadd.f32 %v3118, %v3119
  %3294 = vadd.xlane.f32.xlu0 %v3293
  %v3295 = vpop.xlane.xlu0 %3294
  %v3296 = vadd.f32 %v3120, %v3121
  %3297 = vadd.xlane.f32.xlu0 %v3296
  %v3298 = vpop.xlane.xlu0 %3297
  %v3299 = vadd.f32 %v3122, %v3123
  %3300 = vadd.xlane.f32.xlu0 %v3299
  %v3301 = vpop.xlane.xlu0 %3300
  %v3302 = vadd.f32 %v3124, %v3125
  %3303 = vadd.xlane.f32.xlu0 %v3302
  %v3304 = vpop.xlane.xlu0 %3303
  %v3305 = vadd.f32 %v3126, %v3127
  %3306 = vadd.xlane.f32.xlu0 %v3305
  %v3307 = vpop.xlane.xlu0 %3306
  %v3308 = vadd.f32 %v3128, %v3129
  %3309 = vadd.xlane.f32.xlu0 %v3308
  %v3310 = vpop.xlane.xlu0 %3309
  %v3311 = vadd.f32 %v3130, %v3131
  %3312 = vadd.xlane.f32.xlu0 %v3311
  %v3313 = vpop.xlane.xlu0 %3312
  %v3314 = vadd.f32 %v3132, %v3133
  %3315 = vadd.xlane.f32.xlu0 %v3314
  %v3316 = vpop.xlane.xlu0 %3315
  %v3317 = vadd.f32 %v3134, %v3135
  %3318 = vadd.xlane.f32.xlu0 %v3317
  %v3319 = vpop.xlane.xlu0 %3318
  %v3320 = vadd.f32 %v3136, %v3137
  %3321 = vadd.xlane.f32.xlu0 %v3320
  %v3322 = vpop.xlane.xlu0 %3321
  %v3323 = vadd.f32 %v3138, %v3139
  %3324 = vadd.xlane.f32.xlu0 %v3323
  %v3325 = vpop.xlane.xlu0 %3324
  %v3326 = vadd.f32 %v3140, %v3141
  %3327 = vadd.xlane.f32.xlu0 %v3326
  %v3328 = vpop.xlane.xlu0 %3327
  %v3329 = vadd.f32 %v3142, %v3143
  %3330 = vadd.xlane.f32.xlu0 %v3329
  %v3331 = vpop.xlane.xlu0 %3330
  %v3332 = vadd.f32 %v3144, %v3145
  %3333 = vadd.xlane.f32.xlu0 %v3332
  %v3334 = vpop.xlane.xlu0 %3333
  %v3335 = vadd.f32 %v3146, %v3147
  %3336 = vadd.xlane.f32.xlu0 %v3335
  %v3337 = vpop.xlane.xlu0 %3336
  %v3338 = vadd.f32 %v3148, %v3149
  %3339 = vadd.xlane.f32.xlu0 %v3338
  %v3340 = vpop.xlane.xlu0 %3339
  %v3341 = vadd.f32 %v3150, %v3151
  %3342 = vadd.xlane.f32.xlu0 %v3341
  %v3343 = vpop.xlane.xlu0 %3342
  %v3344 = vld [vmem:[#allocation2] sm:$0x1]
  %v3346 = vlaneseq
  %v3347 = vshrl.u32 %v3346, 7
  %v3348 = vsub.s32 0, %v3347
  %v3349 = vrot.slane %v3344, %v3348
  %v3351 = vadd.f32 %v3154, %v3349
  %v3352 = vadd.f32 %v3157, %v3349
  %v3353 = vadd.f32 %v3160, %v3349
  %v3354 = vadd.f32 %v3163, %v3349
  %v3355 = vadd.f32 %v3166, %v3349
  %v3356 = vadd.f32 %v3169, %v3349
  %v3357 = vadd.f32 %v3172, %v3349
  %v3358 = vadd.f32 %v3175, %v3349
  %v3359 = vadd.f32 %v3178, %v3349
  %v3360 = vadd.f32 %v3181, %v3349
  %v3361 = vadd.f32 %v3184, %v3349
  %v3362 = vadd.f32 %v3187, %v3349
  %v3363 = vadd.f32 %v3190, %v3349
  %v3364 = vadd.f32 %v3193, %v3349
  %v3365 = vadd.f32 %v3196, %v3349
  %v3366 = vadd.f32 %v3199, %v3349
  %v3367 = vadd.f32 %v3202, %v3349
  %v3368 = vadd.f32 %v3205, %v3349
  %v3369 = vadd.f32 %v3208, %v3349
  %v3370 = vadd.f32 %v3211, %v3349
  %v3371 = vadd.f32 %v3214, %v3349
  %v3372 = vadd.f32 %v3217, %v3349
  %v3373 = vadd.f32 %v3220, %v3349
  %v3374 = vadd.f32 %v3223, %v3349
  %v3375 = vadd.f32 %v3226, %v3349
  %v3376 = vadd.f32 %v3229, %v3349
  %v3377 = vadd.f32 %v3232, %v3349
  %v3378 = vadd.f32 %v3235, %v3349
  %v3379 = vadd.f32 %v3238, %v3349
  %v3380 = vadd.f32 %v3241, %v3349
  %v3381 = vadd.f32 %v3244, %v3349
  %v3382 = vadd.f32 %v3247, %v3349
  %v3383 = vadd.f32 %v3250, %v3349
  %v3384 = vadd.f32 %v3253, %v3349
  %v3385 = vadd.f32 %v3256, %v3349
  %v3386 = vadd.f32 %v3259, %v3349
  %v3387 = vadd.f32 %v3262, %v3349
  %v3388 = vadd.f32 %v3265, %v3349
  %v3389 = vadd.f32 %v3268, %v3349
  %v3390 = vadd.f32 %v3271, %v3349
  %v3391 = vadd.f32 %v3274, %v3349
  %v3392 = vadd.f32 %v3277, %v3349
  %v3393 = vadd.f32 %v3280, %v3349
  %v3394 = vadd.f32 %v3283, %v3349
  %v3395 = vadd.f32 %v3286, %v3349
  %v3396 = vadd.f32 %v3289, %v3349
  %v3397 = vadd.f32 %v3292, %v3349
  %v3398 = vadd.f32 %v3295, %v3349
  %v3399 = vadd.f32 %v3298, %v3349
  %v3400 = vadd.f32 %v3301, %v3349
  %v3401 = vadd.f32 %v3304, %v3349
  %v3402 = vadd.f32 %v3307, %v3349
  %v3403 = vadd.f32 %v3310, %v3349
  %v3404 = vadd.f32 %v3313, %v3349
  %v3405 = vadd.f32 %v3316, %v3349
  %v3406 = vadd.f32 %v3319, %v3349
  %v3407 = vadd.f32 %v3322, %v3349
  %v3408 = vadd.f32 %v3325, %v3349
  %v3409 = vadd.f32 %v3328, %v3349
  %v3410 = vadd.f32 %v3331, %v3349
  %v3411 = vadd.f32 %v3334, %v3349
  %v3412 = vadd.f32 %v3337, %v3349
  %v3413 = vadd.f32 %v3340, %v3349
  %v3414 = vadd.f32 %v3343, %v3349
  %v3415 = vsub.f32 0.0, %v3351
  %v3416 = vsub.f32 0.0, %v3352
  %v3417 = vsub.f32 0.0, %v3353
  %v3418 = vsub.f32 0.0, %v3354
  %v3419 = vsub.f32 0.0, %v3355
  %v3420 = vsub.f32 0.0, %v3356
  %v3421 = vsub.f32 0.0, %v3357
  %v3422 = vsub.f32 0.0, %v3358
  %v3423 = vsub.f32 0.0, %v3359
  %v3424 = vsub.f32 0.0, %v3360
  %v3425 = vsub.f32 0.0, %v3361
  %v3426 = vsub.f32 0.0, %v3362
  %v3427 = vsub.f32 0.0, %v3363
  %v3428 = vsub.f32 0.0, %v3364
  %v3429 = vsub.f32 0.0, %v3365
  %v3430 = vsub.f32 0.0, %v3366
  %v3431 = vsub.f32 0.0, %v3367
  %v3432 = vsub.f32 0.0, %v3368
  %v3433 = vsub.f32 0.0, %v3369
  %v3434 = vsub.f32 0.0, %v3370
  %v3435 = vsub.f32 0.0, %v3371
  %v3436 = vsub.f32 0.0, %v3372
  %v3437 = vsub.f32 0.0, %v3373
  %v3438 = vsub.f32 0.0, %v3374
  %v3439 = vsub.f32 0.0, %v3375
  %v3440 = vsub.f32 0.0, %v3376
  %v3441 = vsub.f32 0.0, %v3377
  %v3442 = vsub.f32 0.0, %v3378
  %v3443 = vsub.f32 0.0, %v3379
  %v3444 = vsub.f32 0.0, %v3380
  %v3445 = vsub.f32 0.0, %v3381
  %v3446 = vsub.f32 0.0, %v3382
  %v3447 = vsub.f32 0.0, %v3383
  %v3448 = vsub.f32 0.0, %v3384
  %v3449 = vsub.f32 0.0, %v3385
  %v3450 = vsub.f32 0.0, %v3386
  %v3451 = vsub.f32 0.0, %v3387
  %v3452 = vsub.f32 0.0, %v3388
  %v3453 = vsub.f32 0.0, %v3389
  %v3454 = vsub.f32 0.0, %v3390
  %v3455 = vsub.f32 0.0, %v3391
  %v3456 = vsub.f32 0.0, %v3392
  %v3457 = vsub.f32 0.0, %v3393
  %v3458 = vsub.f32 0.0, %v3394
  %v3459 = vsub.f32 0.0, %v3395
  %v3460 = vsub.f32 0.0, %v3396
  %v3461 = vsub.f32 0.0, %v3397
  %v3462 = vsub.f32 0.0, %v3398
  %v3463 = vsub.f32 0.0, %v3399
  %v3464 = vsub.f32 0.0, %v3400
  %v3465 = vsub.f32 0.0, %v3401
  %v3466 = vsub.f32 0.0, %v3402
  %v3467 = vsub.f32 0.0, %v3403
  %v3468 = vsub.f32 0.0, %v3404
  %v3469 = vsub.f32 0.0, %v3405
  %v3470 = vsub.f32 0.0, %v3406
  %v3471 = vsub.f32 0.0, %v3407
  %v3472 = vsub.f32 0.0, %v3408
  %v3473 = vsub.f32 0.0, %v3409
  %v3474 = vsub.f32 0.0, %v3410
  %v3475 = vsub.f32 0.0, %v3411
  %v3476 = vsub.f32 0.0, %v3412
  %v3477 = vsub.f32 0.0, %v3413
  %v3478 = vsub.f32 0.0, %v3414
  %v3479 = vmul.f32 %v3415, 1.442695
  %v3480 = vpow.pop %v3479
  %v3481 = vmul.f32 %v3416, 1.442695
  %v3482 = vpow.pop %v3481
  %v3483 = vmul.f32 %v3417, 1.442695
  %v3484 = vpow.pop %v3483
  %v3485 = vmul.f32 %v3418, 1.442695
  %v3486 = vpow.pop %v3485
  %v3487 = vmul.f32 %v3419, 1.442695
  %v3488 = vpow.pop %v3487
  %v3489 = vmul.f32 %v3420, 1.442695
  %v3490 = vpow.pop %v3489
  %v3491 = vmul.f32 %v3421, 1.442695
  %v3492 = vpow.pop %v3491
  %v3493 = vmul.f32 %v3422, 1.442695
  %v3494 = vpow.pop %v3493
  %v3495 = vmul.f32 %v3423, 1.442695
  %v3496 = vpow.pop %v3495
  %v3497 = vmul.f32 %v3424, 1.442695
  %v3498 = vpow.pop %v3497
  %v3499 = vmul.f32 %v3425, 1.442695
  %v3500 = vpow.pop %v3499
  %v3501 = vmul.f32 %v3426, 1.442695
  %v3502 = vpow.pop %v3501
  %v3503 = vmul.f32 %v3427, 1.442695
  %v3504 = vpow.pop %v3503
  %v3505 = vmul.f32 %v3428, 1.442695
  %v3506 = vpow.pop %v3505
  %v3507 = vmul.f32 %v3429, 1.442695
  %v3508 = vpow.pop %v3507
  %v3509 = vmul.f32 %v3430, 1.442695
  %v3510 = vpow.pop %v3509
  %v3511 = vmul.f32 %v3431, 1.442695
  %v3512 = vpow.pop %v3511
  %v3513 = vmul.f32 %v3432, 1.442695
  %v3514 = vpow.pop %v3513
  %v3515 = vmul.f32 %v3433, 1.442695
  %v3516 = vpow.pop %v3515
  %v3517 = vmul.f32 %v3434, 1.442695
  %v3518 = vpow.pop %v3517
  %v3519 = vmul.f32 %v3435, 1.442695
  %v3520 = vpow.pop %v3519
  %v3521 = vmul.f32 %v3436, 1.442695
  %v3522 = vpow.pop %v3521
  %v3523 = vmul.f32 %v3437, 1.442695
  %v3524 = vpow.pop %v3523
  %v3525 = vmul.f32 %v3438, 1.442695
  %v3526 = vpow.pop %v3525
  %v3527 = vmul.f32 %v3439, 1.442695
  %v3528 = vpow.pop %v3527
  %v3529 = vmul.f32 %v3440, 1.442695
  %v3530 = vpow.pop %v3529
  %v3531 = vmul.f32 %v3441, 1.442695
  %v3532 = vpow.pop %v3531
  %v3533 = vmul.f32 %v3442, 1.442695
  %v3534 = vpow.pop %v3533
  %v3535 = vmul.f32 %v3443, 1.442695
  %v3536 = vpow.pop %v3535
  %v3537 = vmul.f32 %v3444, 1.442695
  %v3538 = vpow.pop %v3537
  %v3539 = vmul.f32 %v3445, 1.442695
  %v3540 = vpow.pop %v3539
  %v3541 = vmul.f32 %v3446, 1.442695
  %v3542 = vpow.pop %v3541
  %v3543 = vmul.f32 %v3447, 1.442695
  %v3544 = vpow.pop %v3543
  %v3545 = vmul.f32 %v3448, 1.442695
  %v3546 = vpow.pop %v3545
  %v3547 = vmul.f32 %v3449, 1.442695
  %v3548 = vpow.pop %v3547
  %v3549 = vmul.f32 %v3450, 1.442695
  %v3550 = vpow.pop %v3549
  %v3551 = vmul.f32 %v3451, 1.442695
  %v3552 = vpow.pop %v3551
  %v3553 = vmul.f32 %v3452, 1.442695
  %v3554 = vpow.pop %v3553
  %v3555 = vmul.f32 %v3453, 1.442695
  %v3556 = vpow.pop %v3555
  %v3557 = vmul.f32 %v3454, 1.442695
  %v3558 = vpow.pop %v3557
  %v3559 = vmul.f32 %v3455, 1.442695
  %v3560 = vpow.pop %v3559
  %v3561 = vmul.f32 %v3456, 1.442695
  %v3562 = vpow.pop %v3561
  %v3563 = vmul.f32 %v3457, 1.442695
  %v3564 = vpow.pop %v3563
  %v3565 = vmul.f32 %v3458, 1.442695
  %v3566 = vpow.pop %v3565
  %v3567 = vmul.f32 %v3459, 1.442695
  %v3568 = vpow.pop %v3567
  %v3569 = vmul.f32 %v3460, 1.442695
  %v3570 = vpow.pop %v3569
  %v3571 = vmul.f32 %v3461, 1.442695
  %v3572 = vpow.pop %v3571
  %v3573 = vmul.f32 %v3462, 1.442695
  %v3574 = vpow.pop %v3573
  %v3575 = vmul.f32 %v3463, 1.442695
  %v3576 = vpow.pop %v3575
  %v3577 = vmul.f32 %v3464, 1.442695
  %v3578 = vpow.pop %v3577
  %v3579 = vmul.f32 %v3465, 1.442695
  %v3580 = vpow.pop %v3579
  %v3581 = vmul.f32 %v3466, 1.442695
  %v3582 = vpow.pop %v3581
  %v3583 = vmul.f32 %v3467, 1.442695
  %v3584 = vpow.pop %v3583
  %v3585 = vmul.f32 %v3468, 1.442695
  %v3586 = vpow.pop %v3585
  %v3587 = vmul.f32 %v3469, 1.442695
  %v3588 = vpow.pop %v3587
  %v3589 = vmul.f32 %v3470, 1.442695
  %v3590 = vpow.pop %v3589
  %v3591 = vmul.f32 %v3471, 1.442695
  %v3592 = vpow.pop %v3591
  %v3593 = vmul.f32 %v3472, 1.442695
  %v3594 = vpow.pop %v3593
  %v3595 = vmul.f32 %v3473, 1.442695
  %v3596 = vpow.pop %v3595
  %v3597 = vmul.f32 %v3474, 1.442695
  %v3598 = vpow.pop %v3597
  %v3599 = vmul.f32 %v3475, 1.442695
  %v3600 = vpow.pop %v3599
  %v3601 = vmul.f32 %v3476, 1.442695
  %v3602 = vpow.pop %v3601
  %v3603 = vmul.f32 %v3477, 1.442695
  %v3604 = vpow.pop %v3603
  %v3605 = vmul.f32 %v3478, 1.442695
  %v3606 = vpow.pop %v3605
  %v3607 = vadd.f32 %v3480, 1.0
  %v3608 = vadd.f32 %v3482, 1.0
  %v3609 = vadd.f32 %v3484, 1.0
  %v3610 = vadd.f32 %v3486, 1.0
  %v3611 = vadd.f32 %v3488, 1.0
  %v3612 = vadd.f32 %v3490, 1.0
  %v3613 = vadd.f32 %v3492, 1.0
  %v3614 = vadd.f32 %v3494, 1.0
  %v3615 = vadd.f32 %v3496, 1.0
  %v3616 = vadd.f32 %v3498, 1.0
  %v3617 = vadd.f32 %v3500, 1.0
  %v3618 = vadd.f32 %v3502, 1.0
  %v3619 = vadd.f32 %v3504, 1.0
  %v3620 = vadd.f32 %v3506, 1.0
  %v3621 = vadd.f32 %v3508, 1.0
  %v3622 = vadd.f32 %v3510, 1.0
  %v3623 = vadd.f32 %v3512, 1.0
  %v3624 = vadd.f32 %v3514, 1.0
  %v3625 = vadd.f32 %v3516, 1.0
  %v3626 = vadd.f32 %v3518, 1.0
  %v3627 = vadd.f32 %v3520, 1.0
  %v3628 = vadd.f32 %v3522, 1.0
  %v3629 = vadd.f32 %v3524, 1.0
  %v3630 = vadd.f32 %v3526, 1.0
  %v3631 = vadd.f32 %v3528, 1.0
  %v3632 = vadd.f32 %v3530, 1.0
  %v3633 = vadd.f32 %v3532, 1.0
  %v3634 = vadd.f32 %v3534, 1.0
  %v3635 = vadd.f32 %v3536, 1.0
  %v3636 = vadd.f32 %v3538, 1.0
  %v3637 = vadd.f32 %v3540, 1.0
  %v3638 = vadd.f32 %v3542, 1.0
  %v3639 = vadd.f32 %v3544, 1.0
  %v3640 = vadd.f32 %v3546, 1.0
  %v3641 = vadd.f32 %v3548, 1.0
  %v3642 = vadd.f32 %v3550, 1.0
  %v3643 = vadd.f32 %v3552, 1.0
  %v3644 = vadd.f32 %v3554, 1.0
  %v3645 = vadd.f32 %v3556, 1.0
  %v3646 = vadd.f32 %v3558, 1.0
  %v3647 = vadd.f32 %v3560, 1.0
  %v3648 = vadd.f32 %v3562, 1.0
  %v3649 = vadd.f32 %v3564, 1.0
  %v3650 = vadd.f32 %v3566, 1.0
  %v3651 = vadd.f32 %v3568, 1.0
  %v3652 = vadd.f32 %v3570, 1.0
  %v3653 = vadd.f32 %v3572, 1.0
  %v3654 = vadd.f32 %v3574, 1.0
  %v3655 = vadd.f32 %v3576, 1.0
  %v3656 = vadd.f32 %v3578, 1.0
  %v3657 = vadd.f32 %v3580, 1.0
  %v3658 = vadd.f32 %v3582, 1.0
  %v3659 = vadd.f32 %v3584, 1.0
  %v3660 = vadd.f32 %v3586, 1.0
  %v3661 = vadd.f32 %v3588, 1.0
  %v3662 = vadd.f32 %v3590, 1.0
  %v3663 = vadd.f32 %v3592, 1.0
  %v3664 = vadd.f32 %v3594, 1.0
  %v3665 = vadd.f32 %v3596, 1.0
  %v3666 = vadd.f32 %v3598, 1.0
  %v3667 = vadd.f32 %v3600, 1.0
  %v3668 = vadd.f32 %v3602, 1.0
  %v3669 = vadd.f32 %v3604, 1.0
  %v3670 = vadd.f32 %v3606, 1.0
  %v3671 = vrcp.pop %v3607
  %v3672 = vrcp.pop %v3608
  %v3673 = vrcp.pop %v3609
  %v3674 = vrcp.pop %v3610
  %v3675 = vrcp.pop %v3611
  %v3676 = vrcp.pop %v3612
  %v3677 = vrcp.pop %v3613
  %v3678 = vrcp.pop %v3614
  %v3679 = vrcp.pop %v3615
  %v3680 = vrcp.pop %v3616
  %v3681 = vrcp.pop %v3617
  %v3682 = vrcp.pop %v3618
  %v3683 = vrcp.pop %v3619
  %v3684 = vrcp.pop %v3620
  %v3685 = vrcp.pop %v3621
  %v3686 = vrcp.pop %v3622
  %v3687 = vrcp.pop %v3623
  %v3688 = vrcp.pop %v3624
  %v3689 = vrcp.pop %v3625
  %v3690 = vrcp.pop %v3626
  %v3691 = vrcp.pop %v3627
  %v3692 = vrcp.pop %v3628
  %v3693 = vrcp.pop %v3629
  %v3694 = vrcp.pop %v3630
  %v3695 = vrcp.pop %v3631
  %v3696 = vrcp.pop %v3632
  %v3697 = vrcp.pop %v3633
  %v3698 = vrcp.pop %v3634
  %v3699 = vrcp.pop %v3635
  %v3700 = vrcp.pop %v3636
  %v3701 = vrcp.pop %v3637
  %v3702 = vrcp.pop %v3638
  %v3703 = vrcp.pop %v3639
  %v3704 = vrcp.pop %v3640
  %v3705 = vrcp.pop %v3641
  %v3706 = vrcp.pop %v3642
  %v3707 = vrcp.pop %v3643
  %v3708 = vrcp.pop %v3644
  %v3709 = vrcp.pop %v3645
  %v3710 = vrcp.pop %v3646
  %v3711 = vrcp.pop %v3647
  %v3712 = vrcp.pop %v3648
  %v3713 = vrcp.pop %v3649
  %v3714 = vrcp.pop %v3650
  %v3715 = vrcp.pop %v3651
  %v3716 = vrcp.pop %v3652
  %v3717 = vrcp.pop %v3653
  %v3718 = vrcp.pop %v3654
  %v3719 = vrcp.pop %v3655
  %v3720 = vrcp.pop %v3656
  %v3721 = vrcp.pop %v3657
  %v3722 = vrcp.pop %v3658
  %v3723 = vrcp.pop %v3659
  %v3724 = vrcp.pop %v3660
  %v3725 = vrcp.pop %v3661
  %v3726 = vrcp.pop %v3662
  %v3727 = vrcp.pop %v3663
  %v3728 = vrcp.pop %v3664
  %v3729 = vrcp.pop %v3665
  %v3730 = vrcp.pop %v3666
  %v3731 = vrcp.pop %v3667
  %v3732 = vrcp.pop %v3668
  %v3733 = vrcp.pop %v3669
  %v3734 = vrcp.pop %v3670
  %vm3735 = vcmask 7168
  %3736 = vst.msk [vmem:[%s9] sm:$0xff] %vm3735, %v3671
  %3737 = vst.msk [vmem:[%s9 + $0x8] sm:$0xff] %vm3735, %v3672
  %3738 = vst.msk [vmem:[%s9 + $0x10] sm:$0xff] %vm3735, %v3673
  %3739 = vst.msk [vmem:[%s9 + $0x18] sm:$0xff] %vm3735, %v3674
  %3740 = vst.msk [vmem:[%s9 + $0x20] sm:$0xff] %vm3735, %v3675
  %3741 = vst.msk [vmem:[%s9 + $0x28] sm:$0xff] %vm3735, %v3676
  %3742 = vst.msk [vmem:[%s9 + $0x30] sm:$0xff] %vm3735, %v3677
  %3743 = vst.msk [vmem:[%s9 + $0x38] sm:$0xff] %vm3735, %v3678
  %3744 = vst.msk [vmem:[%s9 + $0x40] sm:$0xff] %vm3735, %v3679
  %3745 = vst.msk [vmem:[%s9 + $0x48] sm:$0xff] %vm3735, %v3680
  %3746 = vst.msk [vmem:[%s9 + $0x50] sm:$0xff] %vm3735, %v3681
  %3747 = vst.msk [vmem:[%s9 + $0x58] sm:$0xff] %vm3735, %v3682
  %3748 = vst.msk [vmem:[%s9 + $0x60] sm:$0xff] %vm3735, %v3683
  %3749 = vst.msk [vmem:[%s9 + $0x68] sm:$0xff] %vm3735, %v3684
  %3750 = vst.msk [vmem:[%s9 + $0x70] sm:$0xff] %vm3735, %v3685
  %3751 = vst.msk [vmem:[%s9 + $0x78] sm:$0xff] %vm3735, %v3686
  %3752 = vst.msk [vmem:[%s9 + $0x80] sm:$0xff] %vm3735, %v3687
  %3753 = vst.msk [vmem:[%s9 + $0x88] sm:$0xff] %vm3735, %v3688
  %3754 = vst.msk [vmem:[%s9 + $0x90] sm:$0xff] %vm3735, %v3689
  %3755 = vst.msk [vmem:[%s9 + $0x98] sm:$0xff] %vm3735, %v3690
  %3756 = vst.msk [vmem:[%s9 + $0xa0] sm:$0xff] %vm3735, %v3691
  %3757 = vst.msk [vmem:[%s9 + $0xa8] sm:$0xff] %vm3735, %v3692
  %3758 = vst.msk [vmem:[%s9 + $0xb0] sm:$0xff] %vm3735, %v3693
  %3759 = vst.msk [vmem:[%s9 + $0xb8] sm:$0xff] %vm3735, %v3694
  %3760 = vst.msk [vmem:[%s9 + $0xc0] sm:$0xff] %vm3735, %v3695
  %3761 = vst.msk [vmem:[%s9 + $0xc8] sm:$0xff] %vm3735, %v3696
  %3762 = vst.msk [vmem:[%s9 + $0xd0] sm:$0xff] %vm3735, %v3697
  %3763 = vst.msk [vmem:[%s9 + $0xd8] sm:$0xff] %vm3735, %v3698
  %3764 = vst.msk [vmem:[%s9 + $0xe0] sm:$0xff] %vm3735, %v3699
  %3765 = vst.msk [vmem:[%s9 + $0xe8] sm:$0xff] %vm3735, %v3700
  %3766 = vst.msk [vmem:[%s9 + $0xf0] sm:$0xff] %vm3735, %v3701
  %3767 = vst.msk [vmem:[%s9 + $0xf8] sm:$0xff] %vm3735, %v3702
  %3768 = vst.msk [vmem:[%s9 + $0x100] sm:$0xff] %vm3735, %v3703
  %3769 = vst.msk [vmem:[%s9 + $0x108] sm:$0xff] %vm3735, %v3704
  %3770 = vst.msk [vmem:[%s9 + $0x110] sm:$0xff] %vm3735, %v3705
  %3771 = vst.msk [vmem:[%s9 + $0x118] sm:$0xff] %vm3735, %v3706
  %3772 = vst.msk [vmem:[%s9 + $0x120] sm:$0xff] %vm3735, %v3707
  %3773 = vst.msk [vmem:[%s9 + $0x128] sm:$0xff] %vm3735, %v3708
  %3774 = vst.msk [vmem:[%s9 + $0x130] sm:$0xff] %vm3735, %v3709
  %3775 = vst.msk [vmem:[%s9 + $0x138] sm:$0xff] %vm3735, %v3710
  %3776 = vst.msk [vmem:[%s9 + $0x140] sm:$0xff] %vm3735, %v3711
  %3777 = vst.msk [vmem:[%s9 + $0x148] sm:$0xff] %vm3735, %v3712
  %3778 = vst.msk [vmem:[%s9 + $0x150] sm:$0xff] %vm3735, %v3713
  %3779 = vst.msk [vmem:[%s9 + $0x158] sm:$0xff] %vm3735, %v3714
  %3780 = vst.msk [vmem:[%s9 + $0x160] sm:$0xff] %vm3735, %v3715
  %3781 = vst.msk [vmem:[%s9 + $0x168] sm:$0xff] %vm3735, %v3716
  %3782 = vst.msk [vmem:[%s9 + $0x170] sm:$0xff] %vm3735, %v3717
  %3783 = vst.msk [vmem:[%s9 + $0x178] sm:$0xff] %vm3735, %v3718
  %3784 = vst.msk [vmem:[%s9 + $0x180] sm:$0xff] %vm3735, %v3719
  %3785 = vst.msk [vmem:[%s9 + $0x188] sm:$0xff] %vm3735, %v3720
  %3786 = vst.msk [vmem:[%s9 + $0x190] sm:$0xff] %vm3735, %v3721
  %3787 = vst.msk [vmem:[%s9 + $0x198] sm:$0xff] %vm3735, %v3722
  %3788 = vst.msk [vmem:[%s9 + $0x1a0] sm:$0xff] %vm3735, %v3723
  %3789 = vst.msk [vmem:[%s9 + $0x1a8] sm:$0xff] %vm3735, %v3724
  %3790 = vst.msk [vmem:[%s9 + $0x1b0] sm:$0xff] %vm3735, %v3725
  %3791 = vst.msk [vmem:[%s9 + $0x1b8] sm:$0xff] %vm3735, %v3726
  %3792 = vst.msk [vmem:[%s9 + $0x1c0] sm:$0xff] %vm3735, %v3727
  %3793 = vst.msk [vmem:[%s9 + $0x1c8] sm:$0xff] %vm3735, %v3728
  %3794 = vst.msk [vmem:[%s9 + $0x1d0] sm:$0xff] %vm3735, %v3729
  %3795 = vst.msk [vmem:[%s9 + $0x1d8] sm:$0xff] %vm3735, %v3730
  %3796 = vst.msk [vmem:[%s9 + $0x1e0] sm:$0xff] %vm3735, %v3731
  %3797 = vst.msk [vmem:[%s9 + $0x1e8] sm:$0xff] %vm3735, %v3732
  %3798 = vst.msk [vmem:[%s9 + $0x1f0] sm:$0xff] %vm3735, %v3733
  %3799 = vst.msk [vmem:[%s9 + $0x1f8] sm:$0xff] %vm3735, %v3734
  // Predicated region
  $region38: #{tpu_custom_call.1} parent=0 // pred_check
    _
  $region39: #{tpu_custom_call.1} parent=0 // pred_check_branch
    %3801 = sbr.rel (0) target = $region41
  $region40: #{tpu_custom_call.1} parent=0 // pred_region
    _
  $region41: #{tpu_custom_call.1} parent=0 // pred_fallthru
    _
  // Predicated region
  $region42: #{tpu_custom_call.1} parent=0 // pred_check
    _
  $region43: #{tpu_custom_call.1} parent=0 // pred_check_branch
    %3803 = sbr.rel (0) target = $region45
  $region44: #{tpu_custom_call.1} parent=0 // pred_region
    _
  $region45: #{tpu_custom_call.1} parent=0 // pred_fallthru
    _

</llo_original>
